<compile_context>
chip_gen: v6e
topology: v6e:2x2x1
jax: 0.10.0
libtpu: 0.0.40
codegen_flags: <defaults>
</compile_context>

<pallas_src>
import jax
import jax.numpy as jnp
from jax.experimental import pallas as pl
from jax.experimental.pallas import tpu as pltpu

X_DIM = 2
LATENT_DIM = 2
HIDDEN_DIM = 10
NUM_HID_LAYER = 3

PAD = 16             # fixed feature width of every activation / weight block
BIAS_ROW = 15        # row of each 16-row block holding the bias; lane holding the constant 1.0
N_ENC = NUM_HID_LAYER + 1
N_LAYERS = 2 * (NUM_HID_LAYER + 1)      # 8 linear layers total
OUT_W = 3 * LATENT_DIM + X_DIM          # [mu | logvar | z | recons] packed on lanes (= 8)
DEFAULT_TILE_B = 256

assert max(HIDDEN_DIM, 2 * LATENT_DIM, X_DIM + LATENT_DIM) < BIAS_ROW

# Per-linear (din, dout) in module order.
# TODO(synk): the reference MLP class is not shown; assumed num_hid_layer x [Linear+ReLU]
# followed by a final Linear with no output activation (act_type='relu').
_LAYER_DIMS = tuple(
    [(X_DIM, HIDDEN_DIM)] + [(HIDDEN_DIM, HIDDEN_DIM)] * (NUM_HID_LAYER - 1)
    + [(HIDDEN_DIM, 2 * LATENT_DIM)]                                          # encoder head
    + [(LATENT_DIM, HIDDEN_DIM)] + [(HIDDEN_DIM, HIDDEN_DIM)] * (NUM_HID_LAYER - 1)
    + [(HIDDEN_DIM, X_DIM)]                                                   # decoder out
)


def _round_up(n, m):
    return -(-n // m) * m


def _vae_kernel(xin_ref, p_ref, out_ref):
    """xin_ref: (TB, 16) = [x | eps | 0.. | 1];  p_ref: (128, 16) packed param slab;
    out_ref: (TB, 8) = [mu | logvar | z | recons]."""

    def hom_linear(h, layer, relu):
        # Homogeneous-coordinate linear: bias lives in the last row of the 16x16 block and
        # the constant 1.0 rides along in lane BIAS_ROW, so no separate bias load/add.
        w = p_ref[layer * PAD:(layer + 1) * PAD, :]              # (16, 16) sublane-aligned
        y = jnp.dot(h, w, preferred_element_type=jnp.float32)
        return jnp.maximum(y, 0.0) if relu else y

    # ---------------- encoder ----------------
    h = xin_ref[...]
    for i in range(NUM_HID_LAYER):
        h = hom_linear(h, i, relu=True)
    head = hom_linear(h, NUM_HID_LAYER, relu=False)              # lanes: mu | logvar | 0 | 1

    mu = head[:, :LATENT_DIM]
    logvar = head[:, LATENT_DIM:2 * LATENT_DIM]
    eps = xin_ref[:, X_DIM:X_DIM + LATENT_DIM]

    # ------------- reparameterize: z = eps * exp(0.5*logvar) + mu -------------
    z = eps * jnp.exp(0.5 * logvar) + mu                          # (TB, LATENT_DIM)

    # ---------------- decoder ----------------
    # Layer 0 consumes the narrow z directly: LATENT_DIM broadcast-MACs on the VPU plus an
    # explicit bias-row add, which re-injects the homogeneous 1.0 into lane BIAS_ROW.
    off = N_ENC * PAD
    w0 = p_ref[off:off + LATENT_DIM, :]                           # (LATENT_DIM, 16)
    b0 = p_ref[off + BIAS_ROW:off + BIAS_ROW + 1, :]              # (1, 16), lane 15 == 1.0
    pre = b0
    for j in range(LATENT_DIM):
        pre = pre + z[:, j:j + 1] * w0[j:j + 1, :]
    h2 = jnp.maximum(pre, 0.0)
    for i in range(1, NUM_HID_LAYER):
        h2 = hom_linear(h2, N_ENC + i, relu=True)
    rec = hom_linear(h2, N_ENC + NUM_HID_LAYER, relu=False)

    # ---- packed lane-contiguous output: direct slice stores, no concatenate ----
    out_ref[:, :2 * LATENT_DIM] = head[:, :2 * LATENT_DIM]
    out_ref[:, 2 * LATENT_DIM:3 * LATENT_DIM] = z
    out_ref[:, 3 * LATENT_DIM:] = rec[:, :X_DIM]


def init_raw_params(key):
    """Per-linear (W, b) in module order."""
    def linear(k, din, dout):
        kw, kb = jax.random.split(k)
        w = jax.random.normal(kw, (din, dout), jnp.float32) * 0.3
        b = jax.random.normal(kb, (dout,), jnp.float32) * 0.1
        return w, b

    keys = jax.random.split(key, N_LAYERS)
    return [linear(k, din, dout) for k, (din, dout) in zip(keys, _LAYER_DIMS)]


def pack_params(raw):
    """Pack the 8 linears into one (128, 16) f32 slab of 16x16 homogeneous blocks."""
    slab = jnp.zeros((N_LAYERS * PAD, PAD), jnp.float32)
    for i, ((din, dout), (w, b)) in enumerate(zip(_LAYER_DIMS, raw)):
        off = i * PAD
        slab = slab.at[off:off + din, :dout].set(w)
        slab = slab.at[off + BIAS_ROW, :dout].set(b)
        slab = slab.at[off + BIAS_ROW, BIAS_ROW].set(1.0)     # homogeneous passthrough
    return slab


def vae_forward(x, eps, slab, *, tile_b=DEFAULT_TILE_B):
    b = x.shape[0]
    tile_b = _round_up(min(max(tile_b, 8), _round_up(b, 8)), 8)
    bp = _round_up(b, tile_b)

    # Pack [x | eps | zeros | 1] into ONE lane-contiguous input (single input DMA per tile);
    # the trailing 1.0 is the homogeneous bias coordinate for the first encoder layer.
    xin = jnp.zeros((bp, PAD), jnp.float32)
    xin = xin.at[:b, :X_DIM].set(x)
    xin = xin.at[:b, X_DIM:X_DIM + LATENT_DIM].set(eps)
    xin = xin.at[:, BIAS_ROW].set(1.0)

    grid = (bp // tile_b,)
    flops = 2 * bp * sum(din * dout for din, dout in _LAYER_DIMS)
    cost = pl.CostEstimate(
        flops=flops,
        transcendentals=bp * LATENT_DIM,
        bytes_accessed=4 * (bp * PAD + N_LAYERS * PAD * PAD + bp * OUT_W),
    )

    out = pl.pallas_call(
        _vae_kernel,
        out_shape=jax.ShapeDtypeStruct((bp, OUT_W), jnp.float32),
        grid_spec=pltpu.PrefetchScalarGridSpec(
            num_scalar_prefetch=0,
            grid=grid,
            in_specs=[
                pl.BlockSpec((tile_b, PAD), lambda i: (i, 0)),           # [x|eps|1] batch tile
                pl.BlockSpec((N_LAYERS * PAD, PAD), lambda i: (0, 0)),   # whole param slab
            ],
            out_specs=pl.BlockSpec((tile_b, OUT_W), lambda i: (i, 0)),
        ),
        compiler_params=pltpu.CompilerParams(
            dimension_semantics=("parallel",)),
        cost_estimate=cost,
    )(xin, slab)

    out = out[:b]
    mu = out[:, :LATENT_DIM]
    logvar = out[:, LATENT_DIM:2 * LATENT_DIM]
    z = out[:, 2 * LATENT_DIM:3 * LATENT_DIM]
    rec = out[:, 3 * LATENT_DIM:]
    return mu, logvar, z, rec


def vae_forward_ref(x, eps, raw):
    """Pure-JAX reference (HIGHEST matmul precision) for correctness checking."""
    hp = jax.lax.Precision.HIGHEST
    enc, dec = raw[:N_ENC], raw[N_ENC:]
    h = x
    for w, b in enc[:-1]:
        h = jnp.maximum(jnp.dot(h, w, precision=hp) + b, 0.0)
    head = jnp.dot(h, enc[-1][0], precision=hp) + enc[-1][1]
    mu, logvar = head[:, :LATENT_DIM], head[:, LATENT_DIM:]
    z = eps * jnp.exp(0.5 * logvar) + mu
    h2 = z
    for w, b in dec[:-1]:
        h2 = jnp.maximum(jnp.dot(h2, w, precision=hp) + b, 0.0)
    rec = jnp.dot(h2, dec[-1][0], precision=hp) + dec[-1][1]
    return mu, logvar, z, rec


if __name__ == "__main__":
    key = jax.random.PRNGKey(0)
    k_param, k_x, k_eps = jax.random.split(key, 3)

    BATCH = 512          # 2 grid steps at tile_b=256 -> keeps both v7x TensorCores busy
    raw = init_raw_params(k_param)
    slab = pack_params(raw)
    x = jax.random.normal(k_x, (BATCH, X_DIM), jnp.float32)
    # Reparameterization noise is an explicit input (the PyTorch module samples it internally
    # with torch RNG); this keeps the kernel deterministic and checkable against the reference.
    eps = jax.random.normal(k_eps, (BATCH, LATENT_DIM), jnp.float32)

    mu, logvar, z, rec = jax.block_until_ready(vae_forward(x, eps, slab, tile_b=256))
    mu_r, lv_r, z_r, rec_r = vae_forward_ref(x, eps, raw)

    assert jnp.allclose(mu, mu_r, rtol=2e-3, atol=2e-3), "mu mismatch"
    assert jnp.allclose(logvar, lv_r, rtol=2e-3, atol=2e-3), "logvar mismatch"
    assert jnp.allclose(z, z_r, rtol=2e-3, atol=2e-3), "z mismatch"
    assert jnp.allclose(rec, rec_r, rtol=2e-3, atol=2e-3), "reconstruction mismatch"

    print("KERNEL_OK")
</pallas_src>

<mosaic_0001>
module attributes {stable_mosaic.version = 11 : i64} {
  func.func @_vae_kernel(%arg0: i32, %arg1: memref<256x16xf32, #tpu.memory_space<vmem>>, %arg2: memref<128x16xf32, #tpu.memory_space<vmem>>, %arg3: memref<256x8xf32, #tpu.memory_space<vmem>>) attributes {dimension_semantics = [#tpu.dimension_semantics<parallel>], iteration_bounds = array<i64: 2>, scalar_prefetch = 0 : i64, scratch_operands = 0 : i64, tpu.core_type = #tpu.core_type<tc>, window_params = [{transform_indices = @transform_0, window_bounds = array<i64: 256, 16>}, {pipeline_mode = #tpu.pipeline_mode<synchronous>, transform_indices = @transform_1, window_bounds = array<i64: 128, 16>}, {transform_indices = @transform_2, window_bounds = array<i64: 256, 8>}]} {
    %c0 = arith.constant 0 : index
    %c0_0 = arith.constant 0 : index
    %0 = vector.load %arg1[%c0, %c0_0] : memref<256x16xf32, #tpu.memory_space<vmem>>, vector<256x16xf32>
    %c0_1 = arith.constant 0 : index
    %c0_2 = arith.constant 0 : index
    %1 = vector.load %arg2[%c0_1, %c0_2] : memref<128x16xf32, #tpu.memory_space<vmem>>, vector<16x16xf32>
    %cst = arith.constant dense<0.000000e+00> : vector<256x16xf32>
    %2 = tpu.matmul %0, %1, %cst {dimension_numbers = #tpu.dot_dimension_numbers<[1], [0], [0], [1], [0, 0, 1, 1], [], []>} : vector<256x16xf32>, vector<16x16xf32>, vector<256x16xf32> -> vector<256x16xf32>
    %cst_3 = arith.constant 0.000000e+00 : f32
    %3 = vector.broadcast %cst_3 : f32 to vector<256x16xf32>
    %4 = arith.maximumf %2, %3 : vector<256x16xf32>
    %c16 = arith.constant 16 : index
    %c0_4 = arith.constant 0 : index
    %5 = vector.load %arg2[%c16, %c0_4] : memref<128x16xf32, #tpu.memory_space<vmem>>, vector<16x16xf32>
    %cst_5 = arith.constant dense<0.000000e+00> : vector<256x16xf32>
    %6 = tpu.matmul %4, %5, %cst_5 {dimension_numbers = #tpu.dot_dimension_numbers<[1], [0], [0], [1], [0, 0, 1, 1], [], []>} : vector<256x16xf32>, vector<16x16xf32>, vector<256x16xf32> -> vector<256x16xf32>
    %cst_6 = arith.constant 0.000000e+00 : f32
    %7 = vector.broadcast %cst_6 : f32 to vector<256x16xf32>
    %8 = arith.maximumf %6, %7 : vector<256x16xf32>
    %c32 = arith.constant 32 : index
    %c0_7 = arith.constant 0 : index
    %9 = vector.load %arg2[%c32, %c0_7] : memref<128x16xf32, #tpu.memory_space<vmem>>, vector<16x16xf32>
    %cst_8 = arith.constant dense<0.000000e+00> : vector<256x16xf32>
    %10 = tpu.matmul %8, %9, %cst_8 {dimension_numbers = #tpu.dot_dimension_numbers<[1], [0], [0], [1], [0, 0, 1, 1], [], []>} : vector<256x16xf32>, vector<16x16xf32>, vector<256x16xf32> -> vector<256x16xf32>
    %cst_9 = arith.constant 0.000000e+00 : f32
    %11 = vector.broadcast %cst_9 : f32 to vector<256x16xf32>
    %12 = arith.maximumf %10, %11 : vector<256x16xf32>
    %c48 = arith.constant 48 : index
    %c0_10 = arith.constant 0 : index
    %13 = vector.load %arg2[%c48, %c0_10] : memref<128x16xf32, #tpu.memory_space<vmem>>, vector<16x16xf32>
    %cst_11 = arith.constant dense<0.000000e+00> : vector<256x16xf32>
    %14 = tpu.matmul %12, %13, %cst_11 {dimension_numbers = #tpu.dot_dimension_numbers<[1], [0], [0], [1], [0, 0, 1, 1], [], []>} : vector<256x16xf32>, vector<16x16xf32>, vector<256x16xf32> -> vector<256x16xf32>
    %15 = vector.extract_strided_slice %14 {offsets = [0, 0], sizes = [256, 2], strides = [1, 1]} : vector<256x16xf32> to vector<256x2xf32>
    %16 = vector.extract_strided_slice %14 {offsets = [0, 2], sizes = [256, 2], strides = [1, 1]} : vector<256x16xf32> to vector<256x2xf32>
    %c0_12 = arith.constant 0 : index
    %c2 = arith.constant 2 : index
    %17 = vector.load %arg1[%c0_12, %c2] : memref<256x16xf32, #tpu.memory_space<vmem>>, vector<256x2xf32>
    %cst_13 = arith.constant 5.000000e-01 : f32
    %18 = vector.broadcast %cst_13 : f32 to vector<256x2xf32>
    %19 = arith.mulf %18, %16 : vector<256x2xf32>
    %20 = math.exp %19 : vector<256x2xf32>
    %21 = arith.mulf %17, %20 : vector<256x2xf32>
    %22 = arith.addf %21, %15 : vector<256x2xf32>
    %c64 = arith.constant 64 : index
    %c0_14 = arith.constant 0 : index
    %23 = vector.load %arg2[%c64, %c0_14] : memref<128x16xf32, #tpu.memory_space<vmem>>, vector<2x16xf32>
    %c79 = arith.constant 79 : index
    %c0_15 = arith.constant 0 : index
    %24 = vector.load %arg2[%c79, %c0_15] : memref<128x16xf32, #tpu.memory_space<vmem>>, vector<1x16xf32>
    %25 = vector.extract_strided_slice %22 {offsets = [0, 0], sizes = [256, 1], strides = [1, 1]} : vector<256x2xf32> to vector<256x1xf32>
    %26 = vector.extract_strided_slice %23 {offsets = [0, 0], sizes = [1, 16], strides = [1, 1]} : vector<2x16xf32> to vector<1x16xf32>
    %27 = vector.broadcast %25 : vector<256x1xf32> to vector<256x16xf32>
    %28 = vector.broadcast %26 : vector<1x16xf32> to vector<256x16xf32>
    %29 = arith.mulf %27, %28 : vector<256x16xf32>
    %30 = vector.broadcast %24 : vector<1x16xf32> to vector<256x16xf32>
    %31 = arith.addf %30, %29 : vector<256x16xf32>
    %32 = vector.extract_strided_slice %22 {offsets = [0, 1], sizes = [256, 1], strides = [1, 1]} : vector<256x2xf32> to vector<256x1xf32>
    %33 = vector.extract_strided_slice %23 {offsets = [1, 0], sizes = [1, 16], strides = [1, 1]} : vector<2x16xf32> to vector<1x16xf32>
    %34 = vector.broadcast %32 : vector<256x1xf32> to vector<256x16xf32>
    %35 = vector.broadcast %33 : vector<1x16xf32> to vector<256x16xf32>
    %36 = arith.mulf %34, %35 : vector<256x16xf32>
    %37 = arith.addf %31, %36 : vector<256x16xf32>
    %cst_16 = arith.constant 0.000000e+00 : f32
    %38 = vector.broadcast %cst_16 : f32 to vector<256x16xf32>
    %39 = arith.maximumf %37, %38 : vector<256x16xf32>
    %c80 = arith.constant 80 : index
    %c0_17 = arith.constant 0 : index
    %40 = vector.load %arg2[%c80, %c0_17] : memref<128x16xf32, #tpu.memory_space<vmem>>, vector<16x16xf32>
    %cst_18 = arith.constant dense<0.000000e+00> : vector<256x16xf32>
    %41 = tpu.matmul %39, %40, %cst_18 {dimension_numbers = #tpu.dot_dimension_numbers<[1], [0], [0], [1], [0, 0, 1, 1], [], []>} : vector<256x16xf32>, vector<16x16xf32>, vector<256x16xf32> -> vector<256x16xf32>
    %cst_19 = arith.constant 0.000000e+00 : f32
    %42 = vector.broadcast %cst_19 : f32 to vector<256x16xf32>
    %43 = arith.maximumf %41, %42 : vector<256x16xf32>
    %c96 = arith.constant 96 : index
    %c0_20 = arith.constant 0 : index
    %44 = vector.load %arg2[%c96, %c0_20] : memref<128x16xf32, #tpu.memory_space<vmem>>, vector<16x16xf32>
    %cst_21 = arith.constant dense<0.000000e+00> : vector<256x16xf32>
    %45 = tpu.matmul %43, %44, %cst_21 {dimension_numbers = #tpu.dot_dimension_numbers<[1], [0], [0], [1], [0, 0, 1, 1], [], []>} : vector<256x16xf32>, vector<16x16xf32>, vector<256x16xf32> -> vector<256x16xf32>
    %cst_22 = arith.constant 0.000000e+00 : f32
    %46 = vector.broadcast %cst_22 : f32 to vector<256x16xf32>
    %47 = arith.maximumf %45, %46 : vector<256x16xf32>
    %c112 = arith.constant 112 : index
    %c0_23 = arith.constant 0 : index
    %48 = vector.load %arg2[%c112, %c0_23] : memref<128x16xf32, #tpu.memory_space<vmem>>, vector<16x16xf32>
    %cst_24 = arith.constant dense<0.000000e+00> : vector<256x16xf32>
    %49 = tpu.matmul %47, %48, %cst_24 {dimension_numbers = #tpu.dot_dimension_numbers<[1], [0], [0], [1], [0, 0, 1, 1], [], []>} : vector<256x16xf32>, vector<16x16xf32>, vector<256x16xf32> -> vector<256x16xf32>
    %50 = vector.extract_strided_slice %14 {offsets = [0, 0], sizes = [256, 4], strides = [1, 1]} : vector<256x16xf32> to vector<256x4xf32>
    %c0_25 = arith.constant 0 : index
    %c0_26 = arith.constant 0 : index
    %51 = vector.load %arg3[%c0_25, %c0_26] : memref<256x8xf32, #tpu.memory_space<vmem>>, vector<256x4xf32>
    tpu.vector_store %arg3[%c0_25, %c0_26], %50 {strides = array<i32>} : memref<256x8xf32, #tpu.memory_space<vmem>>, vector<256x4xf32>,
    %c0_27 = arith.constant 0 : index
    %c4 = arith.constant 4 : index
    %52 = vector.load %arg3[%c0_27, %c4] : memref<256x8xf32, #tpu.memory_space<vmem>>, vector<256x2xf32>
    tpu.vector_store %arg3[%c0_27, %c4], %22 {strides = array<i32>} : memref<256x8xf32, #tpu.memory_space<vmem>>, vector<256x2xf32>,
    %53 = vector.extract_strided_slice %49 {offsets = [0, 0], sizes = [256, 2], strides = [1, 1]} : vector<256x16xf32> to vector<256x2xf32>
    %c0_28 = arith.constant 0 : index
    %c6 = arith.constant 6 : index
    %54 = vector.load %arg3[%c0_28, %c6] : memref<256x8xf32, #tpu.memory_space<vmem>>, vector<256x2xf32>
    tpu.vector_store %arg3[%c0_28, %c6], %53 {strides = array<i32>} : memref<256x8xf32, #tpu.memory_space<vmem>>, vector<256x2xf32>,
    return
  }
  func.func @transform_0(%arg0: i32) -> (i32, i32) {
    %c0_i32 = arith.constant 0 : i32
    %c0_i32_0 = arith.constant 0 : i32
    return %arg0, %c0_i32 : i32, i32
  }
  func.func @transform_1(%arg0: i32) -> (i32, i32) {
    %c0_i32 = arith.constant 0 : i32
    %c0_i32_0 = arith.constant 0 : i32
    %c0_i32_1 = arith.constant 0 : i32
    return %c0_i32, %c0_i32_0 : i32, i32
  }
  func.func @transform_2(%arg0: i32) -> (i32, i32) {
    %c0_i32 = arith.constant 0 : i32
    %c0_i32_0 = arith.constant 0 : i32
    return %arg0, %c0_i32 : i32, i32
  }
}

</mosaic_0001>

<llo_original>
// kernel: tpu_custom_call.1
$region0: #{tpu_custom_call.1}
  #allocation0 [shape = 'u32[]', space=smem, size = 0x4, offset = 0x4, fixed_abs, tag = 'smem constant byte address 0x4 - core index']
  #allocation1 [shape = 'u32[144,128]{1,0:T(1,128)}', space=vmem, size = 0x12000, scoped, tag = 'internal scratch']
  %s0 = inlined_call_operand.vmem [shape: f32[512,16], index: 0, kind: input, shape index: {}]
  %s1 = inlined_call_operand.vmem [shape: f32[128,16], index: 1, kind: input, shape index: {}]
  %s2 = inlined_call_operand.vmem [shape: f32[512,8], index: 2, kind: output, shape index: {}]
  %s3 = sld [smem:[#allocation0]]
  $region41: #{tpu_custom_call.1} parent=0
    _
  %s5 = ssub.s32 1, %s3
  %s6 = scalar_select 0, %s5, %s3
  loop: start=0, step=1, limit=4
  $region2: #{tpu_custom_call.1} parent=0 // loop_pre_header
    _
  $region3: #{tpu_custom_call.1} parent=0 // loop_header
    %s8 = sphi 0, %s12
    %p9 = scmp.ge.s32.totalorder %s8, 4
    %s18 = sphi 0, %s20
    %s21 = sphi 0, %s18
    %s22 = sphi 0, %s21
    %s38 = sphi 0, %s22
    %s42 = sphi 0, %s42
    %s44 = sphi 0, %s42
    %s45 = sphi 0, %s44
    %s59 = sphi 0, %s45
    %s65 = sphi 0, %s67
    %s68 = sphi 0, %s65
    %s69 = sphi 0, %s68
    %s85 = sphi 0, %s69
  $region4: #{tpu_custom_call.1} parent=0 // loop_header_branch
    %11 = sbr.rel (%p9) target = $region8
  $region5: #{tpu_custom_call.1} parent=0 // loop_body
    %s13 = ssub.s32 %s8, 1
    %s14 = ssub.s32 %s8, 2
    %s15 = sadd.s32 %s8, 1
    %s16 = ssub.s32 %s8, %s15
    %p17 = scmp.eq.s32.totalorder %s16, 0
    %s19 = sadd.s32 %s18, 1
    %s20 = scalar_select %p17, %s18, %s19
    %p23 = pneg %p17
    %p24 = scmp.eq.s32.totalorder %s8, 1
    %p25 = por %p23, %p24
    %p26 = scmp.ne.s32.totalorder %s18, %s21
    %p27 = scmp.eq.s32.totalorder %s8, 0
    %p28 = por %p26, %p27
    %p29 = scmp.ne.s32.totalorder %s18, %s21
    %p30 = scmp.eq.s32.totalorder %s13, 1
    %p31 = por %p29, %p30
    %p32 = scmp.ne.s32.totalorder %s21, %s22
    %p33 = scmp.eq.s32.totalorder %s13, 0
    %p34 = por %p32, %p33
    %p35 = scmp.ne.s32.totalorder %s21, %s22
    %p36 = scmp.eq.s32.totalorder %s14, 1
    %p37 = por %p35, %p36
    %p39 = scmp.ne.s32.totalorder %s22, %s38
    %p40 = scmp.eq.s32.totalorder %s14, 0
    %p41 = por %p39, %p40
    %s43 = sadd.s32 %s42, 1
    %p46 = scmp.eq.s32.totalorder %s8, 1
    %p47 = scmp.ne.s32.totalorder %s42, %s44
    %p48 = scmp.eq.s32.totalorder %s8, 0
    %p49 = por %p47, %p48
    %p50 = scmp.ne.s32.totalorder %s42, %s44
    %p51 = scmp.eq.s32.totalorder %s13, 1
    %p52 = por %p50, %p51
    %p53 = scmp.ne.s32.totalorder %s44, %s45
    %p54 = scmp.eq.s32.totalorder %s13, 0
    %p55 = por %p53, %p54
    %p56 = scmp.ne.s32.totalorder %s44, %s45
    %p57 = scmp.eq.s32.totalorder %s14, 1
    %p58 = por %p56, %p57
    %p60 = scmp.ne.s32.totalorder %s45, %s59
    %p61 = scmp.eq.s32.totalorder %s14, 0
    %p62 = por %p60, %p61
    %s63 = ssub.s32 %s8, %s15
    %p64 = scmp.eq.s32.totalorder %s63, 0
    %s66 = sadd.s32 %s65, 1
    %s67 = scalar_select %p64, %s65, %s66
    %p70 = pneg %p64
    %p71 = scmp.eq.s32.totalorder %s8, 1
    %p72 = por %p70, %p71
    %p73 = scmp.ne.s32.totalorder %s65, %s68
    %p74 = scmp.eq.s32.totalorder %s8, 0
    %p75 = por %p73, %p74
    %p76 = scmp.ne.s32.totalorder %s65, %s68
    %p77 = scmp.eq.s32.totalorder %s13, 1
    %p78 = por %p76, %p77
    %p79 = scmp.ne.s32.totalorder %s68, %s69
    %p80 = scmp.eq.s32.totalorder %s13, 0
    %p81 = por %p79, %p80
    %p82 = scmp.ne.s32.totalorder %s68, %s69
    %p83 = scmp.eq.s32.totalorder %s14, 1
    %p84 = por %p82, %p83
    %p86 = scmp.ne.s32.totalorder %s69, %s85
    %p87 = scmp.eq.s32.totalorder %s14, 0
    %p88 = por %p86, %p87
    %p89 = scmp.le.s32.totalorder 1, %s8
    %p90 = scmp.lt.s32.totalorder %s8, 3
    %p91 = pnand %p89, %p90
    %p92 = pneg %p91
    // Predicated region
    $region9: #{tpu_custom_call.1} parent=5 // pred_check
      _
    $region10: #{tpu_custom_call.1} parent=5 // pred_check_branch
      %94 = sbr.rel (%p91) target = $region12
    $region11: #{tpu_custom_call.1} parent=5 // pred_region
      %s95 = ssub.s32 %s8, 1
      // Predicated region
      $region13: #{tpu_custom_call.1} parent=11 // pred_check
        %p96 = pneg %p55
      $region14: #{tpu_custom_call.1} parent=11 // pred_check_branch
        %98 = sbr.rel (%p96) target = $region16
      $region15: #{tpu_custom_call.1} parent=11 // pred_region
        _
      $region16: #{tpu_custom_call.1} parent=11 // pred_fallthru
        _
    $region12: #{tpu_custom_call.1} parent=5 // pred_fallthru
      _
    %p99 = scmp.lt.s32.totalorder %s8, 2
    // Predicated region
    $region17: #{tpu_custom_call.1} parent=5 // pred_check
      %p100 = pneg %p99
    $region18: #{tpu_custom_call.1} parent=5 // pred_check_branch
      %102 = sbr.rel (%p100) target = $region20
    $region19: #{tpu_custom_call.1} parent=5 // pred_region
      // Predicated region
      $region21: #{tpu_custom_call.1} parent=19 // pred_check
        %p103 = pneg %p28
      $region22: #{tpu_custom_call.1} parent=19 // pred_check_branch
        %105 = sbr.rel (%p103) target = $region24
      $region23: #{tpu_custom_call.1} parent=19 // pred_region
        %s106 = smul.u32 32, %s8
        %p107 = scmp.lt.s32.totalorder %s106, 63
        %s108 = scalar_select %p107, %s106, 63
        %s109 = smul.addr %s108, 8
        %s110 = scalar_lea.vmem %s0, %s109
        %s111 = smul.u32 32, %s8
      $region24: #{tpu_custom_call.1} parent=19 // pred_fallthru
        _
    $region20: #{tpu_custom_call.1} parent=5 // pred_fallthru
      _
    %p112 = scmp.le.s32.totalorder 1, %s8
    %p113 = scmp.lt.s32.totalorder %s8, 3
    %p114 = pnand %p112, %p113
    %p115 = pneg %p114
    // Predicated region
    $region25: #{tpu_custom_call.1} parent=5 // pred_check
      _
    $region26: #{tpu_custom_call.1} parent=5 // pred_check_branch
      %117 = sbr.rel (%p114) target = $region28
    $region27: #{tpu_custom_call.1} parent=5 // pred_region
      %s118 = ssub.s32 %s8, 1
      %s119 = smul.u32 32, %s13
      %p120 = scmp.lt.s32.totalorder %s119, 63
      %s121 = scalar_select %p120, %s119, 63
      %s122 = smul.addr %s121, 8
      %s123 = scalar_lea.vmem %s0, %s122
      %p124 = pneg %p34
      %p125 = pneg %p31
      %p126 = pneg %p55
      %p127 = pneg %p52
      %p128 = pneg %p81
      %p129 = pneg %p78
      %s130 = smul.u32 32, %s13
      %p131 = scmp.lt.s32.totalorder %s130, 63
      %s132 = scalar_select %p131, %s130, 63
      %s133 = smul.addr %s132, 8
      %s134 = scalar_lea.vmem %s2, %s133
      %s135 = smul.u32 32, %s13
      %p136 = scmp.lt.s32.totalorder %s135, 63
      %s137 = scalar_select %p136, %s135, 63
      %s138 = smul.addr %s137, 8
      %s139 = scalar_lea.vmem %s0, %s138
      %s140 = smul.u32 32, %s13
      %s141 = smul.u32 32, %s13
      %p142 = scmp.lt.s32.totalorder %s141, 63
      %s143 = scalar_select %p142, %s141, 63
      %s144 = smul.addr %s143, 8
      %s145 = scalar_lea.vmem %s2, %s144
      %s146 = smul.u32 32, %s13
      %v147 = vld [vmem:[%s139] sm:$0xff]
      %v148 = vld [vmem:[%s139 + $0x8] sm:$0xff]
      %v149 = vld [vmem:[%s139 + $0x10] sm:$0xff]
      %v150 = vld [vmem:[%s139 + $0x18] sm:$0xff]
      %v151 = vld [vmem:[%s139 + $0x20] sm:$0xff]
      %v152 = vld [vmem:[%s139 + $0x28] sm:$0xff]
      %v153 = vld [vmem:[%s139 + $0x30] sm:$0xff]
      %v154 = vld [vmem:[%s139 + $0x38] sm:$0xff]
      %v155 = vld [vmem:[%s139 + $0x40] sm:$0xff]
      %v156 = vld [vmem:[%s139 + $0x48] sm:$0xff]
      %v157 = vld [vmem:[%s139 + $0x50] sm:$0xff]
      %v158 = vld [vmem:[%s139 + $0x58] sm:$0xff]
      %v159 = vld [vmem:[%s139 + $0x60] sm:$0xff]
      %v160 = vld [vmem:[%s139 + $0x68] sm:$0xff]
      %v161 = vld [vmem:[%s139 + $0x70] sm:$0xff]
      %v162 = vld [vmem:[%s139 + $0x78] sm:$0xff]
      %v163 = vld [vmem:[%s139 + $0x80] sm:$0xff]
      %v164 = vld [vmem:[%s139 + $0x88] sm:$0xff]
      %v165 = vld [vmem:[%s139 + $0x90] sm:$0xff]
      %v166 = vld [vmem:[%s139 + $0x98] sm:$0xff]
      %v167 = vld [vmem:[%s139 + $0xa0] sm:$0xff]
      %v168 = vld [vmem:[%s139 + $0xa8] sm:$0xff]
      %v169 = vld [vmem:[%s139 + $0xb0] sm:$0xff]
      %v170 = vld [vmem:[%s139 + $0xb8] sm:$0xff]
      %v171 = vld [vmem:[%s139 + $0xc0] sm:$0xff]
      %v172 = vld [vmem:[%s139 + $0xc8] sm:$0xff]
      %v173 = vld [vmem:[%s139 + $0xd0] sm:$0xff]
      %v174 = vld [vmem:[%s139 + $0xd8] sm:$0xff]
      %v175 = vld [vmem:[%s139 + $0xe0] sm:$0xff]
      %v176 = vld [vmem:[%s139 + $0xe8] sm:$0xff]
      %v177 = vld [vmem:[%s139 + $0xf0] sm:$0xff]
      %v178 = vld [vmem:[%s139 + $0xf8] sm:$0xff]
      %v179 = vld [vmem:[%s1] sm:$0xff]
      %v180 = vld [vmem:[%s1 + $0x8] sm:$0xff]
      %vm181 = vcmask 130048
      %v183 = vsel %vm181, %v147, 0
      %v186 = vsel %vm181, %v148, 0
      %v189 = vsel %vm181, %v149, 0
      %v192 = vsel %vm181, %v150, 0
      %v195 = vsel %vm181, %v151, 0
      %v198 = vsel %vm181, %v152, 0
      %v201 = vsel %vm181, %v153, 0
      %v204 = vsel %vm181, %v154, 0
      %v207 = vsel %vm181, %v155, 0
      %v210 = vsel %vm181, %v156, 0
      %v213 = vsel %vm181, %v157, 0
      %v216 = vsel %vm181, %v158, 0
      %v219 = vsel %vm181, %v159, 0
      %v222 = vsel %vm181, %v160, 0
      %v225 = vsel %vm181, %v161, 0
      %v228 = vsel %vm181, %v162, 0
      %v231 = vsel %vm181, %v163, 0
      %v234 = vsel %vm181, %v164, 0
      %v237 = vsel %vm181, %v165, 0
      %v240 = vsel %vm181, %v166, 0
      %v243 = vsel %vm181, %v167, 0
      %v246 = vsel %vm181, %v168, 0
      %v249 = vsel %vm181, %v169, 0
      %v252 = vsel %vm181, %v170, 0
      %v255 = vsel %vm181, %v171, 0
      %v258 = vsel %vm181, %v172, 0
      %v261 = vsel %vm181, %v173, 0
      %v264 = vsel %vm181, %v174, 0
      %v267 = vsel %vm181, %v175, 0
      %v270 = vsel %vm181, %v176, 0
      %v273 = vsel %vm181, %v177, 0
      %v276 = vsel %vm181, %v178, 0
      %278 = vmatprep.subr.mxu0 0.0
      %279 = vmatpush1.msra.mxu0 0.0
      %280 = vmatprep.subr.mxu0 0.0
      %281 = vmatpush1.msra.mxu0 0.0
      %282 = vmatprep.subr.mxu0 0.0
      %283 = vmatpush1.msra.mxu0 0.0
      %284 = vmatprep.subr.mxu0 0.0
      %285 = vmatpush1.msra.mxu0 0.0
      %286 = vmatprep.subr.mxu0 0.0
      %287 = vmatpush1.msra.mxu0 0.0
      %288 = vmatprep.subr.mxu0 0.0
      %289 = vmatpush1.msra.mxu0 0.0
      %290 = vmatprep.subr.mxu0 0.0
      %291 = vmatpush1.msra.mxu0 0.0
      %292 = vmatprep.subr.mxu0 0.0
      %293 = vmatpush1.msra.mxu0 0.0
      %294 = vmatprep.subr.mxu0 0.0
      %295 = vmatpush1.msra.mxu0 0.0
      %296 = vmatprep.subr.mxu0 0.0
      %297 = vmatpush1.msra.mxu0 0.0
      %298 = vmatprep.subr.mxu0 0.0
      %299 = vmatpush1.msra.mxu0 0.0
      %300 = vmatprep.subr.mxu0 0.0
      %301 = vmatpush1.msra.mxu0 0.0
      %302 = vmatprep.subr.mxu0 0.0
      %303 = vmatpush1.msra.mxu0 0.0
      %304 = vmatprep.subr.mxu0 0.0
      %305 = vmatpush1.msra.mxu0 0.0
      %306 = vmatprep.subr.mxu0 0.0
      %307 = vmatpush1.msra.mxu0 %v180
      %308 = vmatprep.subr.mxu0 0.0
      %309 = vmatpush1.msra.mxu0 %v179
      %310 = vmatprep.subr.mxu0 0.0
      %311 = vmatpush2.msra.mxu0 0.0
      %312 = vmatprep.subr.mxu0 0.0
      %313 = vmatpush2.msra.mxu0 0.0
      %314 = vmatprep.subr.mxu0 0.0
      %315 = vmatpush2.msra.mxu0 0.0
      %316 = vmatprep.subr.mxu0 0.0
      %317 = vmatpush2.msra.mxu0 0.0
      %318 = vmatprep.subr.mxu0 0.0
      %319 = vmatpush2.msra.mxu0 0.0
      %320 = vmatprep.subr.mxu0 0.0
      %321 = vmatpush2.msra.mxu0 0.0
      %322 = vmatprep.subr.mxu0 0.0
      %323 = vmatpush2.msra.mxu0 0.0
      %324 = vmatprep.subr.mxu0 0.0
      %325 = vmatpush2.msra.mxu0 0.0
      %326 = vmatprep.subr.mxu0 0.0
      %327 = vmatpush2.msra.mxu0 0.0
      %328 = vmatprep.subr.mxu0 0.0
      %329 = vmatpush2.msra.mxu0 0.0
      %330 = vmatprep.subr.mxu0 0.0
      %331 = vmatpush2.msra.mxu0 0.0
      %332 = vmatprep.subr.mxu0 0.0
      %333 = vmatpush2.msra.mxu0 0.0
      %334 = vmatprep.subr.mxu0 0.0
      %335 = vmatpush2.msra.mxu0 0.0
      %336 = vmatprep.subr.mxu0 0.0
      %337 = vmatpush2.msra.mxu0 0.0
      %338 = vmatprep.subr.mxu0 0.0
      %339 = vmatpush2.msra.mxu0 0.0
      %340 = vmatprep.subr.mxu0 0.0
      %341 = vmatpush2.msra.mxu0 0.0
      %342 = vmatprep.mubr.f32.mxu0 0.0
      %343 = vmatmul.mubr.f32.gmra.mxu0 %v183
      %v344 = vpop.f32.mrf.mxu0
      %v345 = vadd.f32 0.0, %v344
      %v346 = vpop.f32.mrf.mxu0
      %347 = vmatprep.mubr.f32.mxu0 0.0
      %348 = vmatmul.mubr.f32.gmra.mxu0 %v186
      %v349 = vpop.f32.mrf.mxu0
      %v350 = vadd.f32 0.0, %v349
      %v351 = vpop.f32.mrf.mxu0
      %352 = vmatprep.mubr.f32.mxu0 0.0
      %353 = vmatmul.mubr.f32.gmra.mxu0 %v189
      %v354 = vpop.f32.mrf.mxu0
      %v355 = vadd.f32 0.0, %v354
      %v356 = vpop.f32.mrf.mxu0
      %357 = vmatprep.mubr.f32.mxu0 0.0
      %358 = vmatmul.mubr.f32.gmra.mxu0 %v192
      %v359 = vpop.f32.mrf.mxu0
      %v360 = vadd.f32 0.0, %v359
      %v361 = vpop.f32.mrf.mxu0
      %362 = vmatprep.mubr.f32.mxu0 0.0
      %363 = vmatmul.mubr.f32.gmra.mxu0 %v195
      %v364 = vpop.f32.mrf.mxu0
      %v365 = vadd.f32 0.0, %v364
      %v366 = vpop.f32.mrf.mxu0
      %367 = vmatprep.mubr.f32.mxu0 0.0
      %368 = vmatmul.mubr.f32.gmra.mxu0 %v198
      %v369 = vpop.f32.mrf.mxu0
      %v370 = vadd.f32 0.0, %v369
      %v371 = vpop.f32.mrf.mxu0
      %372 = vmatprep.mubr.f32.mxu0 0.0
      %373 = vmatmul.mubr.f32.gmra.mxu0 %v201
      %v374 = vpop.f32.mrf.mxu0
      %v375 = vadd.f32 0.0, %v374
      %v376 = vpop.f32.mrf.mxu0
      %377 = vmatprep.mubr.f32.mxu0 0.0
      %378 = vmatmul.mubr.f32.gmra.mxu0 %v204
      %v379 = vpop.f32.mrf.mxu0
      %v380 = vadd.f32 0.0, %v379
      %v381 = vpop.f32.mrf.mxu0
      %382 = vmatprep.mubr.f32.mxu0 0.0
      %383 = vmatmul.mubr.f32.gmra.mxu0 %v207
      %v384 = vpop.f32.mrf.mxu0
      %v385 = vadd.f32 0.0, %v384
      %v386 = vpop.f32.mrf.mxu0
      %387 = vmatprep.mubr.f32.mxu0 0.0
      %388 = vmatmul.mubr.f32.gmra.mxu0 %v210
      %v389 = vpop.f32.mrf.mxu0
      %v390 = vadd.f32 0.0, %v389
      %v391 = vpop.f32.mrf.mxu0
      %392 = vmatprep.mubr.f32.mxu0 0.0
      %393 = vmatmul.mubr.f32.gmra.mxu0 %v213
      %v394 = vpop.f32.mrf.mxu0
      %v395 = vadd.f32 0.0, %v394
      %v396 = vpop.f32.mrf.mxu0
      %397 = vmatprep.mubr.f32.mxu0 0.0
      %398 = vmatmul.mubr.f32.gmra.mxu0 %v216
      %v399 = vpop.f32.mrf.mxu0
      %v400 = vadd.f32 0.0, %v399
      %v401 = vpop.f32.mrf.mxu0
      %402 = vmatprep.mubr.f32.mxu0 0.0
      %403 = vmatmul.mubr.f32.gmra.mxu0 %v219
      %v404 = vpop.f32.mrf.mxu0
      %v405 = vadd.f32 0.0, %v404
      %v406 = vpop.f32.mrf.mxu0
      %407 = vmatprep.mubr.f32.mxu0 0.0
      %408 = vmatmul.mubr.f32.gmra.mxu0 %v222
      %v409 = vpop.f32.mrf.mxu0
      %v410 = vadd.f32 0.0, %v409
      %v411 = vpop.f32.mrf.mxu0
      %412 = vmatprep.mubr.f32.mxu0 0.0
      %413 = vmatmul.mubr.f32.gmra.mxu0 %v225
      %v414 = vpop.f32.mrf.mxu0
      %v415 = vadd.f32 0.0, %v414
      %v416 = vpop.f32.mrf.mxu0
      %417 = vmatprep.mubr.f32.mxu0 0.0
      %418 = vmatmul.mubr.f32.gmra.mxu0 %v228
      %v419 = vpop.f32.mrf.mxu0
      %v420 = vadd.f32 0.0, %v419
      %v421 = vpop.f32.mrf.mxu0
      %422 = vmatprep.mubr.f32.mxu0 0.0
      %423 = vmatmul.mubr.f32.gmra.mxu0 %v231
      %v424 = vpop.f32.mrf.mxu0
      %v425 = vadd.f32 0.0, %v424
      %v426 = vpop.f32.mrf.mxu0
      %427 = vmatprep.mubr.f32.mxu0 0.0
      %428 = vmatmul.mubr.f32.gmra.mxu0 %v234
      %v429 = vpop.f32.mrf.mxu0
      %v430 = vadd.f32 0.0, %v429
      %v431 = vpop.f32.mrf.mxu0
      %432 = vmatprep.mubr.f32.mxu0 0.0
      %433 = vmatmul.mubr.f32.gmra.mxu0 %v237
      %v434 = vpop.f32.mrf.mxu0
      %v435 = vadd.f32 0.0, %v434
      %v436 = vpop.f32.mrf.mxu0
      %437 = vmatprep.mubr.f32.mxu0 0.0
      %438 = vmatmul.mubr.f32.gmra.mxu0 %v240
      %v439 = vpop.f32.mrf.mxu0
      %v440 = vadd.f32 0.0, %v439
      %v441 = vpop.f32.mrf.mxu0
      %442 = vmatprep.mubr.f32.mxu0 0.0
      %443 = vmatmul.mubr.f32.gmra.mxu0 %v243
      %v444 = vpop.f32.mrf.mxu0
      %v445 = vadd.f32 0.0, %v444
      %v446 = vpop.f32.mrf.mxu0
      %447 = vmatprep.mubr.f32.mxu0 0.0
      %448 = vmatmul.mubr.f32.gmra.mxu0 %v246
      %v449 = vpop.f32.mrf.mxu0
      %v450 = vadd.f32 0.0, %v449
      %v451 = vpop.f32.mrf.mxu0
      %452 = vmatprep.mubr.f32.mxu0 0.0
      %453 = vmatmul.mubr.f32.gmra.mxu0 %v249
      %v454 = vpop.f32.mrf.mxu0
      %v455 = vadd.f32 0.0, %v454
      %v456 = vpop.f32.mrf.mxu0
      %457 = vmatprep.mubr.f32.mxu0 0.0
      %458 = vmatmul.mubr.f32.gmra.mxu0 %v252
      %v459 = vpop.f32.mrf.mxu0
      %v460 = vadd.f32 0.0, %v459
      %v461 = vpop.f32.mrf.mxu0
      %462 = vmatprep.mubr.f32.mxu0 0.0
      %463 = vmatmul.mubr.f32.gmra.mxu0 %v255
      %v464 = vpop.f32.mrf.mxu0
      %v465 = vadd.f32 0.0, %v464
      %v466 = vpop.f32.mrf.mxu0
      %467 = vmatprep.mubr.f32.mxu0 0.0
      %468 = vmatmul.mubr.f32.gmra.mxu0 %v258
      %v469 = vpop.f32.mrf.mxu0
      %v470 = vadd.f32 0.0, %v469
      %v471 = vpop.f32.mrf.mxu0
      %472 = vmatprep.mubr.f32.mxu0 0.0
      %473 = vmatmul.mubr.f32.gmra.mxu0 %v261
      %v474 = vpop.f32.mrf.mxu0
      %v475 = vadd.f32 0.0, %v474
      %v476 = vpop.f32.mrf.mxu0
      %477 = vmatprep.mubr.f32.mxu0 0.0
      %478 = vmatmul.mubr.f32.gmra.mxu0 %v264
      %v479 = vpop.f32.mrf.mxu0
      %v480 = vadd.f32 0.0, %v479
      %v481 = vpop.f32.mrf.mxu0
      %482 = vmatprep.mubr.f32.mxu0 0.0
      %483 = vmatmul.mubr.f32.gmra.mxu0 %v267
      %v484 = vpop.f32.mrf.mxu0
      %v485 = vadd.f32 0.0, %v484
      %v486 = vpop.f32.mrf.mxu0
      %487 = vmatprep.mubr.f32.mxu0 0.0
      %488 = vmatmul.mubr.f32.gmra.mxu0 %v270
      %v489 = vpop.f32.mrf.mxu0
      %v490 = vadd.f32 0.0, %v489
      %v491 = vpop.f32.mrf.mxu0
      %492 = vmatprep.mubr.f32.mxu0 0.0
      %493 = vmatmul.mubr.f32.gmra.mxu0 %v273
      %v494 = vpop.f32.mrf.mxu0
      %v495 = vadd.f32 0.0, %v494
      %v496 = vpop.f32.mrf.mxu0
      %497 = vmatprep.mubr.f32.mxu0 0.0
      %498 = vmatmul.mubr.f32.gmra.mxu0 %v276
      %v499 = vpop.f32.mrf.mxu0
      %v500 = vadd.f32 0.0, %v499
      %v501 = vpop.f32.mrf.mxu0
      %502 = vdwg.mxu0
      %v503 = vmax.f32 %v345, 0.0
      %v504 = vmax.f32 %v350, 0.0
      %v505 = vmax.f32 %v355, 0.0
      %v506 = vmax.f32 %v360, 0.0
      %v507 = vmax.f32 %v365, 0.0
      %v508 = vmax.f32 %v370, 0.0
      %v509 = vmax.f32 %v375, 0.0
      %v510 = vmax.f32 %v380, 0.0
      %v511 = vmax.f32 %v385, 0.0
      %v512 = vmax.f32 %v390, 0.0
      %v513 = vmax.f32 %v395, 0.0
      %v514 = vmax.f32 %v400, 0.0
      %v515 = vmax.f32 %v405, 0.0
      %v516 = vmax.f32 %v410, 0.0
      %v517 = vmax.f32 %v415, 0.0
      %v518 = vmax.f32 %v420, 0.0
      %v519 = vmax.f32 %v425, 0.0
      %v520 = vmax.f32 %v430, 0.0
      %v521 = vmax.f32 %v435, 0.0
      %v522 = vmax.f32 %v440, 0.0
      %v523 = vmax.f32 %v445, 0.0
      %v524 = vmax.f32 %v450, 0.0
      %v525 = vmax.f32 %v455, 0.0
      %v526 = vmax.f32 %v460, 0.0
      %v527 = vmax.f32 %v465, 0.0
      %v528 = vmax.f32 %v470, 0.0
      %v529 = vmax.f32 %v475, 0.0
      %v530 = vmax.f32 %v480, 0.0
      %v531 = vmax.f32 %v485, 0.0
      %v532 = vmax.f32 %v490, 0.0
      %v533 = vmax.f32 %v495, 0.0
      %v534 = vmax.f32 %v500, 0.0
      %v535 = vld [vmem:[%s1 + $0x10] sm:$0xff]
      %v536 = vld [vmem:[%s1 + $0x18] sm:$0xff]
      %v538 = vsel %vm181, %v503, 0
      %v541 = vsel %vm181, %v504, 0
      %v544 = vsel %vm181, %v505, 0
      %v547 = vsel %vm181, %v506, 0
      %v550 = vsel %vm181, %v507, 0
      %v553 = vsel %vm181, %v508, 0
      %v556 = vsel %vm181, %v509, 0
      %v559 = vsel %vm181, %v510, 0
      %v562 = vsel %vm181, %v511, 0
      %v565 = vsel %vm181, %v512, 0
      %v568 = vsel %vm181, %v513, 0
      %v571 = vsel %vm181, %v514, 0
      %v574 = vsel %vm181, %v515, 0
      %v577 = vsel %vm181, %v516, 0
      %v580 = vsel %vm181, %v517, 0
      %v583 = vsel %vm181, %v518, 0
      %v586 = vsel %vm181, %v519, 0
      %v589 = vsel %vm181, %v520, 0
      %v592 = vsel %vm181, %v521, 0
      %v595 = vsel %vm181, %v522, 0
      %v598 = vsel %vm181, %v523, 0
      %v601 = vsel %vm181, %v524, 0
      %v604 = vsel %vm181, %v525, 0
      %v607 = vsel %vm181, %v526, 0
      %v610 = vsel %vm181, %v527, 0
      %v613 = vsel %vm181, %v528, 0
      %v616 = vsel %vm181, %v529, 0
      %v619 = vsel %vm181, %v530, 0
      %v622 = vsel %vm181, %v531, 0
      %v625 = vsel %vm181, %v532, 0
      %v628 = vsel %vm181, %v533, 0
      %v631 = vsel %vm181, %v534, 0
      %633 = vmatprep.subr.mxu0 0.0
      %634 = vmatpush1.msra.mxu0 0.0
      %635 = vmatprep.subr.mxu0 0.0
      %636 = vmatpush1.msra.mxu0 0.0
      %637 = vmatprep.subr.mxu0 0.0
      %638 = vmatpush1.msra.mxu0 0.0
      %639 = vmatprep.subr.mxu0 0.0
      %640 = vmatpush1.msra.mxu0 0.0
      %641 = vmatprep.subr.mxu0 0.0
      %642 = vmatpush1.msra.mxu0 0.0
      %643 = vmatprep.subr.mxu0 0.0
      %644 = vmatpush1.msra.mxu0 0.0
      %645 = vmatprep.subr.mxu0 0.0
      %646 = vmatpush1.msra.mxu0 0.0
      %647 = vmatprep.subr.mxu0 0.0
      %648 = vmatpush1.msra.mxu0 0.0
      %649 = vmatprep.subr.mxu0 0.0
      %650 = vmatpush1.msra.mxu0 0.0
      %651 = vmatprep.subr.mxu0 0.0
      %652 = vmatpush1.msra.mxu0 0.0
      %653 = vmatprep.subr.mxu0 0.0
      %654 = vmatpush1.msra.mxu0 0.0
      %655 = vmatprep.subr.mxu0 0.0
      %656 = vmatpush1.msra.mxu0 0.0
      %657 = vmatprep.subr.mxu0 0.0
      %658 = vmatpush1.msra.mxu0 0.0
      %659 = vmatprep.subr.mxu0 0.0
      %660 = vmatpush1.msra.mxu0 0.0
      %661 = vmatprep.subr.mxu0 0.0
      %662 = vmatpush1.msra.mxu0 %v536
      %663 = vmatprep.subr.mxu0 0.0
      %664 = vmatpush1.msra.mxu0 %v535
      %665 = vmatprep.subr.mxu0 0.0
      %666 = vmatpush2.msra.mxu0 0.0
      %667 = vmatprep.subr.mxu0 0.0
      %668 = vmatpush2.msra.mxu0 0.0
      %669 = vmatprep.subr.mxu0 0.0
      %670 = vmatpush2.msra.mxu0 0.0
      %671 = vmatprep.subr.mxu0 0.0
      %672 = vmatpush2.msra.mxu0 0.0
      %673 = vmatprep.subr.mxu0 0.0
      %674 = vmatpush2.msra.mxu0 0.0
      %675 = vmatprep.subr.mxu0 0.0
      %676 = vmatpush2.msra.mxu0 0.0
      %677 = vmatprep.subr.mxu0 0.0
      %678 = vmatpush2.msra.mxu0 0.0
      %679 = vmatprep.subr.mxu0 0.0
      %680 = vmatpush2.msra.mxu0 0.0
      %681 = vmatprep.subr.mxu0 0.0
      %682 = vmatpush2.msra.mxu0 0.0
      %683 = vmatprep.subr.mxu0 0.0
      %684 = vmatpush2.msra.mxu0 0.0
      %685 = vmatprep.subr.mxu0 0.0
      %686 = vmatpush2.msra.mxu0 0.0
      %687 = vmatprep.subr.mxu0 0.0
      %688 = vmatpush2.msra.mxu0 0.0
      %689 = vmatprep.subr.mxu0 0.0
      %690 = vmatpush2.msra.mxu0 0.0
      %691 = vmatprep.subr.mxu0 0.0
      %692 = vmatpush2.msra.mxu0 0.0
      %693 = vmatprep.subr.mxu0 0.0
      %694 = vmatpush2.msra.mxu0 0.0
      %695 = vmatprep.subr.mxu0 0.0
      %696 = vmatpush2.msra.mxu0 0.0
      %697 = vmatprep.mubr.f32.mxu0 0.0
      %698 = vmatmul.mubr.f32.gmra.mxu0 %v538
      %v699 = vpop.f32.mrf.mxu0
      %v700 = vadd.f32 0.0, %v699
      %v701 = vpop.f32.mrf.mxu0
      %702 = vmatprep.mubr.f32.mxu0 0.0
      %703 = vmatmul.mubr.f32.gmra.mxu0 %v541
      %v704 = vpop.f32.mrf.mxu0
      %v705 = vadd.f32 0.0, %v704
      %v706 = vpop.f32.mrf.mxu0
      %707 = vmatprep.mubr.f32.mxu0 0.0
      %708 = vmatmul.mubr.f32.gmra.mxu0 %v544
      %v709 = vpop.f32.mrf.mxu0
      %v710 = vadd.f32 0.0, %v709
      %v711 = vpop.f32.mrf.mxu0
      %712 = vmatprep.mubr.f32.mxu0 0.0
      %713 = vmatmul.mubr.f32.gmra.mxu0 %v547
      %v714 = vpop.f32.mrf.mxu0
      %v715 = vadd.f32 0.0, %v714
      %v716 = vpop.f32.mrf.mxu0
      %717 = vmatprep.mubr.f32.mxu0 0.0
      %718 = vmatmul.mubr.f32.gmra.mxu0 %v550
      %v719 = vpop.f32.mrf.mxu0
      %v720 = vadd.f32 0.0, %v719
      %v721 = vpop.f32.mrf.mxu0
      %722 = vmatprep.mubr.f32.mxu0 0.0
      %723 = vmatmul.mubr.f32.gmra.mxu0 %v553
      %v724 = vpop.f32.mrf.mxu0
      %v725 = vadd.f32 0.0, %v724
      %v726 = vpop.f32.mrf.mxu0
      %727 = vmatprep.mubr.f32.mxu0 0.0
      %728 = vmatmul.mubr.f32.gmra.mxu0 %v556
      %v729 = vpop.f32.mrf.mxu0
      %v730 = vadd.f32 0.0, %v729
      %v731 = vpop.f32.mrf.mxu0
      %732 = vmatprep.mubr.f32.mxu0 0.0
      %733 = vmatmul.mubr.f32.gmra.mxu0 %v559
      %v734 = vpop.f32.mrf.mxu0
      %v735 = vadd.f32 0.0, %v734
      %v736 = vpop.f32.mrf.mxu0
      %737 = vmatprep.mubr.f32.mxu0 0.0
      %738 = vmatmul.mubr.f32.gmra.mxu0 %v562
      %v739 = vpop.f32.mrf.mxu0
      %v740 = vadd.f32 0.0, %v739
      %v741 = vpop.f32.mrf.mxu0
      %742 = vmatprep.mubr.f32.mxu0 0.0
      %743 = vmatmul.mubr.f32.gmra.mxu0 %v565
      %v744 = vpop.f32.mrf.mxu0
      %v745 = vadd.f32 0.0, %v744
      %v746 = vpop.f32.mrf.mxu0
      %747 = vmatprep.mubr.f32.mxu0 0.0
      %748 = vmatmul.mubr.f32.gmra.mxu0 %v568
      %v749 = vpop.f32.mrf.mxu0
      %v750 = vadd.f32 0.0, %v749
      %v751 = vpop.f32.mrf.mxu0
      %752 = vmatprep.mubr.f32.mxu0 0.0
      %753 = vmatmul.mubr.f32.gmra.mxu0 %v571
      %v754 = vpop.f32.mrf.mxu0
      %v755 = vadd.f32 0.0, %v754
      %v756 = vpop.f32.mrf.mxu0
      %757 = vmatprep.mubr.f32.mxu0 0.0
      %758 = vmatmul.mubr.f32.gmra.mxu0 %v574
      %v759 = vpop.f32.mrf.mxu0
      %v760 = vadd.f32 0.0, %v759
      %v761 = vpop.f32.mrf.mxu0
      %762 = vmatprep.mubr.f32.mxu0 0.0
      %763 = vmatmul.mubr.f32.gmra.mxu0 %v577
      %v764 = vpop.f32.mrf.mxu0
      %v765 = vadd.f32 0.0, %v764
      %v766 = vpop.f32.mrf.mxu0
      %767 = vmatprep.mubr.f32.mxu0 0.0
      %768 = vmatmul.mubr.f32.gmra.mxu0 %v580
      %v769 = vpop.f32.mrf.mxu0
      %v770 = vadd.f32 0.0, %v769
      %v771 = vpop.f32.mrf.mxu0
      %772 = vmatprep.mubr.f32.mxu0 0.0
      %773 = vmatmul.mubr.f32.gmra.mxu0 %v583
      %v774 = vpop.f32.mrf.mxu0
      %v775 = vadd.f32 0.0, %v774
      %v776 = vpop.f32.mrf.mxu0
      %777 = vmatprep.mubr.f32.mxu0 0.0
      %778 = vmatmul.mubr.f32.gmra.mxu0 %v586
      %v779 = vpop.f32.mrf.mxu0
      %v780 = vadd.f32 0.0, %v779
      %v781 = vpop.f32.mrf.mxu0
      %782 = vmatprep.mubr.f32.mxu0 0.0
      %783 = vmatmul.mubr.f32.gmra.mxu0 %v589
      %v784 = vpop.f32.mrf.mxu0
      %v785 = vadd.f32 0.0, %v784
      %v786 = vpop.f32.mrf.mxu0
      %787 = vmatprep.mubr.f32.mxu0 0.0
      %788 = vmatmul.mubr.f32.gmra.mxu0 %v592
      %v789 = vpop.f32.mrf.mxu0
      %v790 = vadd.f32 0.0, %v789
      %v791 = vpop.f32.mrf.mxu0
      %792 = vmatprep.mubr.f32.mxu0 0.0
      %793 = vmatmul.mubr.f32.gmra.mxu0 %v595
      %v794 = vpop.f32.mrf.mxu0
      %v795 = vadd.f32 0.0, %v794
      %v796 = vpop.f32.mrf.mxu0
      %797 = vmatprep.mubr.f32.mxu0 0.0
      %798 = vmatmul.mubr.f32.gmra.mxu0 %v598
      %v799 = vpop.f32.mrf.mxu0
      %v800 = vadd.f32 0.0, %v799
      %v801 = vpop.f32.mrf.mxu0
      %802 = vmatprep.mubr.f32.mxu0 0.0
      %803 = vmatmul.mubr.f32.gmra.mxu0 %v601
      %v804 = vpop.f32.mrf.mxu0
      %v805 = vadd.f32 0.0, %v804
      %v806 = vpop.f32.mrf.mxu0
      %807 = vmatprep.mubr.f32.mxu0 0.0
      %808 = vmatmul.mubr.f32.gmra.mxu0 %v604
      %v809 = vpop.f32.mrf.mxu0
      %v810 = vadd.f32 0.0, %v809
      %v811 = vpop.f32.mrf.mxu0
      %812 = vmatprep.mubr.f32.mxu0 0.0
      %813 = vmatmul.mubr.f32.gmra.mxu0 %v607
      %v814 = vpop.f32.mrf.mxu0
      %v815 = vadd.f32 0.0, %v814
      %v816 = vpop.f32.mrf.mxu0
      %817 = vmatprep.mubr.f32.mxu0 0.0
      %818 = vmatmul.mubr.f32.gmra.mxu0 %v610
      %v819 = vpop.f32.mrf.mxu0
      %v820 = vadd.f32 0.0, %v819
      %v821 = vpop.f32.mrf.mxu0
      %822 = vmatprep.mubr.f32.mxu0 0.0
      %823 = vmatmul.mubr.f32.gmra.mxu0 %v613
      %v824 = vpop.f32.mrf.mxu0
      %v825 = vadd.f32 0.0, %v824
      %v826 = vpop.f32.mrf.mxu0
      %827 = vmatprep.mubr.f32.mxu0 0.0
      %828 = vmatmul.mubr.f32.gmra.mxu0 %v616
      %v829 = vpop.f32.mrf.mxu0
      %v830 = vadd.f32 0.0, %v829
      %v831 = vpop.f32.mrf.mxu0
      %832 = vmatprep.mubr.f32.mxu0 0.0
      %833 = vmatmul.mubr.f32.gmra.mxu0 %v619
      %v834 = vpop.f32.mrf.mxu0
      %v835 = vadd.f32 0.0, %v834
      %v836 = vpop.f32.mrf.mxu0
      %837 = vmatprep.mubr.f32.mxu0 0.0
      %838 = vmatmul.mubr.f32.gmra.mxu0 %v622
      %v839 = vpop.f32.mrf.mxu0
      %v840 = vadd.f32 0.0, %v839
      %v841 = vpop.f32.mrf.mxu0
      %842 = vmatprep.mubr.f32.mxu0 0.0
      %843 = vmatmul.mubr.f32.gmra.mxu0 %v625
      %v844 = vpop.f32.mrf.mxu0
      %v845 = vadd.f32 0.0, %v844
      %v846 = vpop.f32.mrf.mxu0
      %847 = vmatprep.mubr.f32.mxu0 0.0
      %848 = vmatmul.mubr.f32.gmra.mxu0 %v628
      %v849 = vpop.f32.mrf.mxu0
      %v850 = vadd.f32 0.0, %v849
      %v851 = vpop.f32.mrf.mxu0
      %852 = vmatprep.mubr.f32.mxu0 0.0
      %853 = vmatmul.mubr.f32.gmra.mxu0 %v631
      %v854 = vpop.f32.mrf.mxu0
      %v855 = vadd.f32 0.0, %v854
      %v856 = vpop.f32.mrf.mxu0
      %857 = vdwg.mxu0
      %v858 = vmax.f32 %v700, 0.0
      %v859 = vmax.f32 %v705, 0.0
      %v860 = vmax.f32 %v710, 0.0
      %v861 = vmax.f32 %v715, 0.0
      %v862 = vmax.f32 %v720, 0.0
      %v863 = vmax.f32 %v725, 0.0
      %v864 = vmax.f32 %v730, 0.0
      %v865 = vmax.f32 %v735, 0.0
      %v866 = vmax.f32 %v740, 0.0
      %v867 = vmax.f32 %v745, 0.0
      %v868 = vmax.f32 %v750, 0.0
      %v869 = vmax.f32 %v755, 0.0
      %v870 = vmax.f32 %v760, 0.0
      %v871 = vmax.f32 %v765, 0.0
      %v872 = vmax.f32 %v770, 0.0
      %v873 = vmax.f32 %v775, 0.0
      %v874 = vmax.f32 %v780, 0.0
      %v875 = vmax.f32 %v785, 0.0
      %v876 = vmax.f32 %v790, 0.0
      %v877 = vmax.f32 %v795, 0.0
      %v878 = vmax.f32 %v800, 0.0
      %v879 = vmax.f32 %v805, 0.0
      %v880 = vmax.f32 %v810, 0.0
      %v881 = vmax.f32 %v815, 0.0
      %v882 = vmax.f32 %v820, 0.0
      %v883 = vmax.f32 %v825, 0.0
      %v884 = vmax.f32 %v830, 0.0
      %v885 = vmax.f32 %v835, 0.0
      %v886 = vmax.f32 %v840, 0.0
      %v887 = vmax.f32 %v845, 0.0
      %v888 = vmax.f32 %v850, 0.0
      %v889 = vmax.f32 %v855, 0.0
      %v890 = vld [vmem:[%s1 + $0x20] sm:$0xff]
      %v891 = vld [vmem:[%s1 + $0x28] sm:$0xff]
      %v893 = vsel %vm181, %v858, 0
      %v896 = vsel %vm181, %v859, 0
      %v899 = vsel %vm181, %v860, 0
      %v902 = vsel %vm181, %v861, 0
      %v905 = vsel %vm181, %v862, 0
      %v908 = vsel %vm181, %v863, 0
      %v911 = vsel %vm181, %v864, 0
      %v914 = vsel %vm181, %v865, 0
      %v917 = vsel %vm181, %v866, 0
      %v920 = vsel %vm181, %v867, 0
      %v923 = vsel %vm181, %v868, 0
      %v926 = vsel %vm181, %v869, 0
      %v929 = vsel %vm181, %v870, 0
      %v932 = vsel %vm181, %v871, 0
      %v935 = vsel %vm181, %v872, 0
      %v938 = vsel %vm181, %v873, 0
      %v941 = vsel %vm181, %v874, 0
      %v944 = vsel %vm181, %v875, 0
      %v947 = vsel %vm181, %v876, 0
      %v950 = vsel %vm181, %v877, 0
      %v953 = vsel %vm181, %v878, 0
      %v956 = vsel %vm181, %v879, 0
      %v959 = vsel %vm181, %v880, 0
      %v962 = vsel %vm181, %v881, 0
      %v965 = vsel %vm181, %v882, 0
      %v968 = vsel %vm181, %v883, 0
      %v971 = vsel %vm181, %v884, 0
      %v974 = vsel %vm181, %v885, 0
      %v977 = vsel %vm181, %v886, 0
      %v980 = vsel %vm181, %v887, 0
      %v983 = vsel %vm181, %v888, 0
      %v986 = vsel %vm181, %v889, 0
      %988 = vmatprep.subr.mxu0 0.0
      %989 = vmatpush1.msra.mxu0 0.0
      %990 = vmatprep.subr.mxu0 0.0
      %991 = vmatpush1.msra.mxu0 0.0
      %992 = vmatprep.subr.mxu0 0.0
      %993 = vmatpush1.msra.mxu0 0.0
      %994 = vmatprep.subr.mxu0 0.0
      %995 = vmatpush1.msra.mxu0 0.0
      %996 = vmatprep.subr.mxu0 0.0
      %997 = vmatpush1.msra.mxu0 0.0
      %998 = vmatprep.subr.mxu0 0.0
      %999 = vmatpush1.msra.mxu0 0.0
      %1000 = vmatprep.subr.mxu0 0.0
      %1001 = vmatpush1.msra.mxu0 0.0
      %1002 = vmatprep.subr.mxu0 0.0
      %1003 = vmatpush1.msra.mxu0 0.0
      %1004 = vmatprep.subr.mxu0 0.0
      %1005 = vmatpush1.msra.mxu0 0.0
      %1006 = vmatprep.subr.mxu0 0.0
      %1007 = vmatpush1.msra.mxu0 0.0
      %1008 = vmatprep.subr.mxu0 0.0
      %1009 = vmatpush1.msra.mxu0 0.0
      %1010 = vmatprep.subr.mxu0 0.0
      %1011 = vmatpush1.msra.mxu0 0.0
      %1012 = vmatprep.subr.mxu0 0.0
      %1013 = vmatpush1.msra.mxu0 0.0
      %1014 = vmatprep.subr.mxu0 0.0
      %1015 = vmatpush1.msra.mxu0 0.0
      %1016 = vmatprep.subr.mxu0 0.0
      %1017 = vmatpush1.msra.mxu0 %v891
      %1018 = vmatprep.subr.mxu0 0.0
      %1019 = vmatpush1.msra.mxu0 %v890
      %1020 = vmatprep.subr.mxu0 0.0
      %1021 = vmatpush2.msra.mxu0 0.0
      %1022 = vmatprep.subr.mxu0 0.0
      %1023 = vmatpush2.msra.mxu0 0.0
      %1024 = vmatprep.subr.mxu0 0.0
      %1025 = vmatpush2.msra.mxu0 0.0
      %1026 = vmatprep.subr.mxu0 0.0
      %1027 = vmatpush2.msra.mxu0 0.0
      %1028 = vmatprep.subr.mxu0 0.0
      %1029 = vmatpush2.msra.mxu0 0.0
      %1030 = vmatprep.subr.mxu0 0.0
      %1031 = vmatpush2.msra.mxu0 0.0
      %1032 = vmatprep.subr.mxu0 0.0
      %1033 = vmatpush2.msra.mxu0 0.0
      %1034 = vmatprep.subr.mxu0 0.0
      %1035 = vmatpush2.msra.mxu0 0.0
      %1036 = vmatprep.subr.mxu0 0.0
      %1037 = vmatpush2.msra.mxu0 0.0
      %1038 = vmatprep.subr.mxu0 0.0
      %1039 = vmatpush2.msra.mxu0 0.0
      %1040 = vmatprep.subr.mxu0 0.0
      %1041 = vmatpush2.msra.mxu0 0.0
      %1042 = vmatprep.subr.mxu0 0.0
      %1043 = vmatpush2.msra.mxu0 0.0
      %1044 = vmatprep.subr.mxu0 0.0
      %1045 = vmatpush2.msra.mxu0 0.0
      %1046 = vmatprep.subr.mxu0 0.0
      %1047 = vmatpush2.msra.mxu0 0.0
      %1048 = vmatprep.subr.mxu0 0.0
      %1049 = vmatpush2.msra.mxu0 0.0
      %1050 = vmatprep.subr.mxu0 0.0
      %1051 = vmatpush2.msra.mxu0 0.0
      %1052 = vmatprep.mubr.f32.mxu0 0.0
      %1053 = vmatmul.mubr.f32.gmra.mxu0 %v893
      %v1054 = vpop.f32.mrf.mxu0
      %v1055 = vadd.f32 0.0, %v1054
      %v1056 = vpop.f32.mrf.mxu0
      %1057 = vmatprep.mubr.f32.mxu0 0.0
      %1058 = vmatmul.mubr.f32.gmra.mxu0 %v896
      %v1059 = vpop.f32.mrf.mxu0
      %v1060 = vadd.f32 0.0, %v1059
      %v1061 = vpop.f32.mrf.mxu0
      %1062 = vmatprep.mubr.f32.mxu0 0.0
      %1063 = vmatmul.mubr.f32.gmra.mxu0 %v899
      %v1064 = vpop.f32.mrf.mxu0
      %v1065 = vadd.f32 0.0, %v1064
      %v1066 = vpop.f32.mrf.mxu0
      %1067 = vmatprep.mubr.f32.mxu0 0.0
      %1068 = vmatmul.mubr.f32.gmra.mxu0 %v902
      %v1069 = vpop.f32.mrf.mxu0
      %v1070 = vadd.f32 0.0, %v1069
      %v1071 = vpop.f32.mrf.mxu0
      %1072 = vmatprep.mubr.f32.mxu0 0.0
      %1073 = vmatmul.mubr.f32.gmra.mxu0 %v905
      %v1074 = vpop.f32.mrf.mxu0
      %v1075 = vadd.f32 0.0, %v1074
      %v1076 = vpop.f32.mrf.mxu0
      %1077 = vmatprep.mubr.f32.mxu0 0.0
      %1078 = vmatmul.mubr.f32.gmra.mxu0 %v908
      %v1079 = vpop.f32.mrf.mxu0
      %v1080 = vadd.f32 0.0, %v1079
      %v1081 = vpop.f32.mrf.mxu0
      %1082 = vmatprep.mubr.f32.mxu0 0.0
      %1083 = vmatmul.mubr.f32.gmra.mxu0 %v911
      %v1084 = vpop.f32.mrf.mxu0
      %v1085 = vadd.f32 0.0, %v1084
      %v1086 = vpop.f32.mrf.mxu0
      %1087 = vmatprep.mubr.f32.mxu0 0.0
      %1088 = vmatmul.mubr.f32.gmra.mxu0 %v914
      %v1089 = vpop.f32.mrf.mxu0
      %v1090 = vadd.f32 0.0, %v1089
      %v1091 = vpop.f32.mrf.mxu0
      %1092 = vmatprep.mubr.f32.mxu0 0.0
      %1093 = vmatmul.mubr.f32.gmra.mxu0 %v917
      %v1094 = vpop.f32.mrf.mxu0
      %v1095 = vadd.f32 0.0, %v1094
      %v1096 = vpop.f32.mrf.mxu0
      %1097 = vmatprep.mubr.f32.mxu0 0.0
      %1098 = vmatmul.mubr.f32.gmra.mxu0 %v920
      %v1099 = vpop.f32.mrf.mxu0
      %v1100 = vadd.f32 0.0, %v1099
      %v1101 = vpop.f32.mrf.mxu0
      %1102 = vmatprep.mubr.f32.mxu0 0.0
      %1103 = vmatmul.mubr.f32.gmra.mxu0 %v923
      %v1104 = vpop.f32.mrf.mxu0
      %v1105 = vadd.f32 0.0, %v1104
      %v1106 = vpop.f32.mrf.mxu0
      %1107 = vmatprep.mubr.f32.mxu0 0.0
      %1108 = vmatmul.mubr.f32.gmra.mxu0 %v926
      %v1109 = vpop.f32.mrf.mxu0
      %v1110 = vadd.f32 0.0, %v1109
      %v1111 = vpop.f32.mrf.mxu0
      %1112 = vmatprep.mubr.f32.mxu0 0.0
      %1113 = vmatmul.mubr.f32.gmra.mxu0 %v929
      %v1114 = vpop.f32.mrf.mxu0
      %v1115 = vadd.f32 0.0, %v1114
      %v1116 = vpop.f32.mrf.mxu0
      %1117 = vmatprep.mubr.f32.mxu0 0.0
      %1118 = vmatmul.mubr.f32.gmra.mxu0 %v932
      %v1119 = vpop.f32.mrf.mxu0
      %v1120 = vadd.f32 0.0, %v1119
      %v1121 = vpop.f32.mrf.mxu0
      %1122 = vmatprep.mubr.f32.mxu0 0.0
      %1123 = vmatmul.mubr.f32.gmra.mxu0 %v935
      %v1124 = vpop.f32.mrf.mxu0
      %v1125 = vadd.f32 0.0, %v1124
      %v1126 = vpop.f32.mrf.mxu0
      %1127 = vmatprep.mubr.f32.mxu0 0.0
      %1128 = vmatmul.mubr.f32.gmra.mxu0 %v938
      %v1129 = vpop.f32.mrf.mxu0
      %v1130 = vadd.f32 0.0, %v1129
      %v1131 = vpop.f32.mrf.mxu0
      %1132 = vmatprep.mubr.f32.mxu0 0.0
      %1133 = vmatmul.mubr.f32.gmra.mxu0 %v941
      %v1134 = vpop.f32.mrf.mxu0
      %v1135 = vadd.f32 0.0, %v1134
      %v1136 = vpop.f32.mrf.mxu0
      %1137 = vmatprep.mubr.f32.mxu0 0.0
      %1138 = vmatmul.mubr.f32.gmra.mxu0 %v944
      %v1139 = vpop.f32.mrf.mxu0
      %v1140 = vadd.f32 0.0, %v1139
      %v1141 = vpop.f32.mrf.mxu0
      %1142 = vmatprep.mubr.f32.mxu0 0.0
      %1143 = vmatmul.mubr.f32.gmra.mxu0 %v947
      %v1144 = vpop.f32.mrf.mxu0
      %v1145 = vadd.f32 0.0, %v1144
      %v1146 = vpop.f32.mrf.mxu0
      %1147 = vmatprep.mubr.f32.mxu0 0.0
      %1148 = vmatmul.mubr.f32.gmra.mxu0 %v950
      %v1149 = vpop.f32.mrf.mxu0
      %v1150 = vadd.f32 0.0, %v1149
      %v1151 = vpop.f32.mrf.mxu0
      %1152 = vmatprep.mubr.f32.mxu0 0.0
      %1153 = vmatmul.mubr.f32.gmra.mxu0 %v953
      %v1154 = vpop.f32.mrf.mxu0
      %v1155 = vadd.f32 0.0, %v1154
      %v1156 = vpop.f32.mrf.mxu0
      %1157 = vmatprep.mubr.f32.mxu0 0.0
      %1158 = vmatmul.mubr.f32.gmra.mxu0 %v956
      %v1159 = vpop.f32.mrf.mxu0
      %v1160 = vadd.f32 0.0, %v1159
      %v1161 = vpop.f32.mrf.mxu0
      %1162 = vmatprep.mubr.f32.mxu0 0.0
      %1163 = vmatmul.mubr.f32.gmra.mxu0 %v959
      %v1164 = vpop.f32.mrf.mxu0
      %v1165 = vadd.f32 0.0, %v1164
      %v1166 = vpop.f32.mrf.mxu0
      %1167 = vmatprep.mubr.f32.mxu0 0.0
      %1168 = vmatmul.mubr.f32.gmra.mxu0 %v962
      %v1169 = vpop.f32.mrf.mxu0
      %v1170 = vadd.f32 0.0, %v1169
      %v1171 = vpop.f32.mrf.mxu0
      %1172 = vmatprep.mubr.f32.mxu0 0.0
      %1173 = vmatmul.mubr.f32.gmra.mxu0 %v965
      %v1174 = vpop.f32.mrf.mxu0
      %v1175 = vadd.f32 0.0, %v1174
      %v1176 = vpop.f32.mrf.mxu0
      %1177 = vmatprep.mubr.f32.mxu0 0.0
      %1178 = vmatmul.mubr.f32.gmra.mxu0 %v968
      %v1179 = vpop.f32.mrf.mxu0
      %v1180 = vadd.f32 0.0, %v1179
      %v1181 = vpop.f32.mrf.mxu0
      %1182 = vmatprep.mubr.f32.mxu0 0.0
      %1183 = vmatmul.mubr.f32.gmra.mxu0 %v971
      %v1184 = vpop.f32.mrf.mxu0
      %v1185 = vadd.f32 0.0, %v1184
      %v1186 = vpop.f32.mrf.mxu0
      %1187 = vmatprep.mubr.f32.mxu0 0.0
      %1188 = vmatmul.mubr.f32.gmra.mxu0 %v974
      %v1189 = vpop.f32.mrf.mxu0
      %v1190 = vadd.f32 0.0, %v1189
      %v1191 = vpop.f32.mrf.mxu0
      %1192 = vmatprep.mubr.f32.mxu0 0.0
      %1193 = vmatmul.mubr.f32.gmra.mxu0 %v977
      %v1194 = vpop.f32.mrf.mxu0
      %v1195 = vadd.f32 0.0, %v1194
      %v1196 = vpop.f32.mrf.mxu0
      %1197 = vmatprep.mubr.f32.mxu0 0.0
      %1198 = vmatmul.mubr.f32.gmra.mxu0 %v980
      %v1199 = vpop.f32.mrf.mxu0
      %v1200 = vadd.f32 0.0, %v1199
      %v1201 = vpop.f32.mrf.mxu0
      %1202 = vmatprep.mubr.f32.mxu0 0.0
      %1203 = vmatmul.mubr.f32.gmra.mxu0 %v983
      %v1204 = vpop.f32.mrf.mxu0
      %v1205 = vadd.f32 0.0, %v1204
      %v1206 = vpop.f32.mrf.mxu0
      %1207 = vmatprep.mubr.f32.mxu0 0.0
      %1208 = vmatmul.mubr.f32.gmra.mxu0 %v986
      %v1209 = vpop.f32.mrf.mxu0
      %v1210 = vadd.f32 0.0, %v1209
      %v1211 = vpop.f32.mrf.mxu0
      %1212 = vdwg.mxu0
      %v1213 = vmax.f32 %v1055, 0.0
      %v1214 = vmax.f32 %v1060, 0.0
      %v1215 = vmax.f32 %v1065, 0.0
      %v1216 = vmax.f32 %v1070, 0.0
      %v1217 = vmax.f32 %v1075, 0.0
      %v1218 = vmax.f32 %v1080, 0.0
      %v1219 = vmax.f32 %v1085, 0.0
      %v1220 = vmax.f32 %v1090, 0.0
      %v1221 = vmax.f32 %v1095, 0.0
      %v1222 = vmax.f32 %v1100, 0.0
      %v1223 = vmax.f32 %v1105, 0.0
      %v1224 = vmax.f32 %v1110, 0.0
      %v1225 = vmax.f32 %v1115, 0.0
      %v1226 = vmax.f32 %v1120, 0.0
      %v1227 = vmax.f32 %v1125, 0.0
      %v1228 = vmax.f32 %v1130, 0.0
      %v1229 = vmax.f32 %v1135, 0.0
      %v1230 = vmax.f32 %v1140, 0.0
      %v1231 = vmax.f32 %v1145, 0.0
      %v1232 = vmax.f32 %v1150, 0.0
      %v1233 = vmax.f32 %v1155, 0.0
      %v1234 = vmax.f32 %v1160, 0.0
      %v1235 = vmax.f32 %v1165, 0.0
      %v1236 = vmax.f32 %v1170, 0.0
      %v1237 = vmax.f32 %v1175, 0.0
      %v1238 = vmax.f32 %v1180, 0.0
      %v1239 = vmax.f32 %v1185, 0.0
      %v1240 = vmax.f32 %v1190, 0.0
      %v1241 = vmax.f32 %v1195, 0.0
      %v1242 = vmax.f32 %v1200, 0.0
      %v1243 = vmax.f32 %v1205, 0.0
      %v1244 = vmax.f32 %v1210, 0.0
      %v1245 = vld [vmem:[%s1 + $0x30] sm:$0xff]
      %v1246 = vld [vmem:[%s1 + $0x38] sm:$0xff]
      %v1248 = vsel %vm181, %v1213, 0
      %v1251 = vsel %vm181, %v1214, 0
      %v1254 = vsel %vm181, %v1215, 0
      %v1257 = vsel %vm181, %v1216, 0
      %v1260 = vsel %vm181, %v1217, 0
      %v1263 = vsel %vm181, %v1218, 0
      %v1266 = vsel %vm181, %v1219, 0
      %v1269 = vsel %vm181, %v1220, 0
      %v1272 = vsel %vm181, %v1221, 0
      %v1275 = vsel %vm181, %v1222, 0
      %v1278 = vsel %vm181, %v1223, 0
      %v1281 = vsel %vm181, %v1224, 0
      %v1284 = vsel %vm181, %v1225, 0
      %v1287 = vsel %vm181, %v1226, 0
      %v1290 = vsel %vm181, %v1227, 0
      %v1293 = vsel %vm181, %v1228, 0
      %v1296 = vsel %vm181, %v1229, 0
      %v1299 = vsel %vm181, %v1230, 0
      %v1302 = vsel %vm181, %v1231, 0
      %v1305 = vsel %vm181, %v1232, 0
      %v1308 = vsel %vm181, %v1233, 0
      %v1311 = vsel %vm181, %v1234, 0
      %v1314 = vsel %vm181, %v1235, 0
      %v1317 = vsel %vm181, %v1236, 0
      %v1320 = vsel %vm181, %v1237, 0
      %v1323 = vsel %vm181, %v1238, 0
      %v1326 = vsel %vm181, %v1239, 0
      %v1329 = vsel %vm181, %v1240, 0
      %v1332 = vsel %vm181, %v1241, 0
      %v1335 = vsel %vm181, %v1242, 0
      %v1338 = vsel %vm181, %v1243, 0
      %v1341 = vsel %vm181, %v1244, 0
      %1343 = vmatprep.subr.mxu0 0.0
      %1344 = vmatpush1.msra.mxu0 0.0
      %1345 = vmatprep.subr.mxu0 0.0
      %1346 = vmatpush1.msra.mxu0 0.0
      %1347 = vmatprep.subr.mxu0 0.0
      %1348 = vmatpush1.msra.mxu0 0.0
      %1349 = vmatprep.subr.mxu0 0.0
      %1350 = vmatpush1.msra.mxu0 0.0
      %1351 = vmatprep.subr.mxu0 0.0
      %1352 = vmatpush1.msra.mxu0 0.0
      %1353 = vmatprep.subr.mxu0 0.0
      %1354 = vmatpush1.msra.mxu0 0.0
      %1355 = vmatprep.subr.mxu0 0.0
      %1356 = vmatpush1.msra.mxu0 0.0
      %1357 = vmatprep.subr.mxu0 0.0
      %1358 = vmatpush1.msra.mxu0 0.0
      %1359 = vmatprep.subr.mxu0 0.0
      %1360 = vmatpush1.msra.mxu0 0.0
      %1361 = vmatprep.subr.mxu0 0.0
      %1362 = vmatpush1.msra.mxu0 0.0
      %1363 = vmatprep.subr.mxu0 0.0
      %1364 = vmatpush1.msra.mxu0 0.0
      %1365 = vmatprep.subr.mxu0 0.0
      %1366 = vmatpush1.msra.mxu0 0.0
      %1367 = vmatprep.subr.mxu0 0.0
      %1368 = vmatpush1.msra.mxu0 0.0
      %1369 = vmatprep.subr.mxu0 0.0
      %1370 = vmatpush1.msra.mxu0 0.0
      %1371 = vmatprep.subr.mxu0 0.0
      %1372 = vmatpush1.msra.mxu0 %v1246
      %1373 = vmatprep.subr.mxu0 0.0
      %1374 = vmatpush1.msra.mxu0 %v1245
      %1375 = vmatprep.subr.mxu0 0.0
      %1376 = vmatpush2.msra.mxu0 0.0
      %1377 = vmatprep.subr.mxu0 0.0
      %1378 = vmatpush2.msra.mxu0 0.0
      %1379 = vmatprep.subr.mxu0 0.0
      %1380 = vmatpush2.msra.mxu0 0.0
      %1381 = vmatprep.subr.mxu0 0.0
      %1382 = vmatpush2.msra.mxu0 0.0
      %1383 = vmatprep.subr.mxu0 0.0
      %1384 = vmatpush2.msra.mxu0 0.0
      %1385 = vmatprep.subr.mxu0 0.0
      %1386 = vmatpush2.msra.mxu0 0.0
      %1387 = vmatprep.subr.mxu0 0.0
      %1388 = vmatpush2.msra.mxu0 0.0
      %1389 = vmatprep.subr.mxu0 0.0
      %1390 = vmatpush2.msra.mxu0 0.0
      %1391 = vmatprep.subr.mxu0 0.0
      %1392 = vmatpush2.msra.mxu0 0.0
      %1393 = vmatprep.subr.mxu0 0.0
      %1394 = vmatpush2.msra.mxu0 0.0
      %1395 = vmatprep.subr.mxu0 0.0
      %1396 = vmatpush2.msra.mxu0 0.0
      %1397 = vmatprep.subr.mxu0 0.0
      %1398 = vmatpush2.msra.mxu0 0.0
      %1399 = vmatprep.subr.mxu0 0.0
      %1400 = vmatpush2.msra.mxu0 0.0
      %1401 = vmatprep.subr.mxu0 0.0
      %1402 = vmatpush2.msra.mxu0 0.0
      %1403 = vmatprep.subr.mxu0 0.0
      %1404 = vmatpush2.msra.mxu0 0.0
      %1405 = vmatprep.subr.mxu0 0.0
      %1406 = vmatpush2.msra.mxu0 0.0
      %1407 = vmatprep.mubr.f32.mxu0 0.0
      %1408 = vmatmul.mubr.f32.gmra.mxu0 %v1248
      %v1409 = vpop.f32.mrf.mxu0
      %v1410 = vadd.f32 0.0, %v1409
      %v1411 = vpop.f32.mrf.mxu0
      %1412 = vmatprep.mubr.f32.mxu0 0.0
      %1413 = vmatmul.mubr.f32.gmra.mxu0 %v1251
      %v1414 = vpop.f32.mrf.mxu0
      %v1415 = vadd.f32 0.0, %v1414
      %v1416 = vpop.f32.mrf.mxu0
      %1417 = vmatprep.mubr.f32.mxu0 0.0
      %1418 = vmatmul.mubr.f32.gmra.mxu0 %v1254
      %v1419 = vpop.f32.mrf.mxu0
      %v1420 = vadd.f32 0.0, %v1419
      %v1421 = vpop.f32.mrf.mxu0
      %1422 = vmatprep.mubr.f32.mxu0 0.0
      %1423 = vmatmul.mubr.f32.gmra.mxu0 %v1257
      %v1424 = vpop.f32.mrf.mxu0
      %v1425 = vadd.f32 0.0, %v1424
      %v1426 = vpop.f32.mrf.mxu0
      %1427 = vmatprep.mubr.f32.mxu0 0.0
      %1428 = vmatmul.mubr.f32.gmra.mxu0 %v1260
      %v1429 = vpop.f32.mrf.mxu0
      %v1430 = vadd.f32 0.0, %v1429
      %v1431 = vpop.f32.mrf.mxu0
      %1432 = vmatprep.mubr.f32.mxu0 0.0
      %1433 = vmatmul.mubr.f32.gmra.mxu0 %v1263
      %v1434 = vpop.f32.mrf.mxu0
      %v1435 = vadd.f32 0.0, %v1434
      %v1436 = vpop.f32.mrf.mxu0
      %1437 = vmatprep.mubr.f32.mxu0 0.0
      %1438 = vmatmul.mubr.f32.gmra.mxu0 %v1266
      %v1439 = vpop.f32.mrf.mxu0
      %v1440 = vadd.f32 0.0, %v1439
      %v1441 = vpop.f32.mrf.mxu0
      %1442 = vmatprep.mubr.f32.mxu0 0.0
      %1443 = vmatmul.mubr.f32.gmra.mxu0 %v1269
      %v1444 = vpop.f32.mrf.mxu0
      %v1445 = vadd.f32 0.0, %v1444
      %v1446 = vpop.f32.mrf.mxu0
      %1447 = vmatprep.mubr.f32.mxu0 0.0
      %1448 = vmatmul.mubr.f32.gmra.mxu0 %v1272
      %v1449 = vpop.f32.mrf.mxu0
      %v1450 = vadd.f32 0.0, %v1449
      %v1451 = vpop.f32.mrf.mxu0
      %1452 = vmatprep.mubr.f32.mxu0 0.0
      %1453 = vmatmul.mubr.f32.gmra.mxu0 %v1275
      %v1454 = vpop.f32.mrf.mxu0
      %v1455 = vadd.f32 0.0, %v1454
      %v1456 = vpop.f32.mrf.mxu0
      %1457 = vmatprep.mubr.f32.mxu0 0.0
      %1458 = vmatmul.mubr.f32.gmra.mxu0 %v1278
      %v1459 = vpop.f32.mrf.mxu0
      %v1460 = vadd.f32 0.0, %v1459
      %v1461 = vpop.f32.mrf.mxu0
      %1462 = vmatprep.mubr.f32.mxu0 0.0
      %1463 = vmatmul.mubr.f32.gmra.mxu0 %v1281
      %v1464 = vpop.f32.mrf.mxu0
      %v1465 = vadd.f32 0.0, %v1464
      %v1466 = vpop.f32.mrf.mxu0
      %1467 = vmatprep.mubr.f32.mxu0 0.0
      %1468 = vmatmul.mubr.f32.gmra.mxu0 %v1284
      %v1469 = vpop.f32.mrf.mxu0
      %v1470 = vadd.f32 0.0, %v1469
      %v1471 = vpop.f32.mrf.mxu0
      %1472 = vmatprep.mubr.f32.mxu0 0.0
      %1473 = vmatmul.mubr.f32.gmra.mxu0 %v1287
      %v1474 = vpop.f32.mrf.mxu0
      %v1475 = vadd.f32 0.0, %v1474
      %v1476 = vpop.f32.mrf.mxu0
      %1477 = vmatprep.mubr.f32.mxu0 0.0
      %1478 = vmatmul.mubr.f32.gmra.mxu0 %v1290
      %v1479 = vpop.f32.mrf.mxu0
      %v1480 = vadd.f32 0.0, %v1479
      %v1481 = vpop.f32.mrf.mxu0
      %1482 = vmatprep.mubr.f32.mxu0 0.0
      %1483 = vmatmul.mubr.f32.gmra.mxu0 %v1293
      %v1484 = vpop.f32.mrf.mxu0
      %v1485 = vadd.f32 0.0, %v1484
      %v1486 = vpop.f32.mrf.mxu0
      %1487 = vmatprep.mubr.f32.mxu0 0.0
      %1488 = vmatmul.mubr.f32.gmra.mxu0 %v1296
      %v1489 = vpop.f32.mrf.mxu0
      %v1490 = vadd.f32 0.0, %v1489
      %v1491 = vpop.f32.mrf.mxu0
      %1492 = vmatprep.mubr.f32.mxu0 0.0
      %1493 = vmatmul.mubr.f32.gmra.mxu0 %v1299
      %v1494 = vpop.f32.mrf.mxu0
      %v1495 = vadd.f32 0.0, %v1494
      %v1496 = vpop.f32.mrf.mxu0
      %1497 = vmatprep.mubr.f32.mxu0 0.0
      %1498 = vmatmul.mubr.f32.gmra.mxu0 %v1302
      %v1499 = vpop.f32.mrf.mxu0
      %v1500 = vadd.f32 0.0, %v1499
      %v1501 = vpop.f32.mrf.mxu0
      %1502 = vmatprep.mubr.f32.mxu0 0.0
      %1503 = vmatmul.mubr.f32.gmra.mxu0 %v1305
      %v1504 = vpop.f32.mrf.mxu0
      %v1505 = vadd.f32 0.0, %v1504
      %v1506 = vpop.f32.mrf.mxu0
      %1507 = vmatprep.mubr.f32.mxu0 0.0
      %1508 = vmatmul.mubr.f32.gmra.mxu0 %v1308
      %v1509 = vpop.f32.mrf.mxu0
      %v1510 = vadd.f32 0.0, %v1509
      %v1511 = vpop.f32.mrf.mxu0
      %1512 = vmatprep.mubr.f32.mxu0 0.0
      %1513 = vmatmul.mubr.f32.gmra.mxu0 %v1311
      %v1514 = vpop.f32.mrf.mxu0
      %v1515 = vadd.f32 0.0, %v1514
      %v1516 = vpop.f32.mrf.mxu0
      %1517 = vmatprep.mubr.f32.mxu0 0.0
      %1518 = vmatmul.mubr.f32.gmra.mxu0 %v1314
      %v1519 = vpop.f32.mrf.mxu0
      %v1520 = vadd.f32 0.0, %v1519
      %v1521 = vpop.f32.mrf.mxu0
      %1522 = vmatprep.mubr.f32.mxu0 0.0
      %1523 = vmatmul.mubr.f32.gmra.mxu0 %v1317
      %v1524 = vpop.f32.mrf.mxu0
      %v1525 = vadd.f32 0.0, %v1524
      %v1526 = vpop.f32.mrf.mxu0
      %1527 = vmatprep.mubr.f32.mxu0 0.0
      %1528 = vmatmul.mubr.f32.gmra.mxu0 %v1320
      %v1529 = vpop.f32.mrf.mxu0
      %v1530 = vadd.f32 0.0, %v1529
      %v1531 = vpop.f32.mrf.mxu0
      %1532 = vmatprep.mubr.f32.mxu0 0.0
      %1533 = vmatmul.mubr.f32.gmra.mxu0 %v1323
      %v1534 = vpop.f32.mrf.mxu0
      %v1535 = vadd.f32 0.0, %v1534
      %v1536 = vpop.f32.mrf.mxu0
      %1537 = vmatprep.mubr.f32.mxu0 0.0
      %1538 = vmatmul.mubr.f32.gmra.mxu0 %v1326
      %v1539 = vpop.f32.mrf.mxu0
      %v1540 = vadd.f32 0.0, %v1539
      %v1541 = vpop.f32.mrf.mxu0
      %1542 = vmatprep.mubr.f32.mxu0 0.0
      %1543 = vmatmul.mubr.f32.gmra.mxu0 %v1329
      %v1544 = vpop.f32.mrf.mxu0
      %v1545 = vadd.f32 0.0, %v1544
      %v1546 = vpop.f32.mrf.mxu0
      %1547 = vmatprep.mubr.f32.mxu0 0.0
      %1548 = vmatmul.mubr.f32.gmra.mxu0 %v1332
      %v1549 = vpop.f32.mrf.mxu0
      %v1550 = vadd.f32 0.0, %v1549
      %v1551 = vpop.f32.mrf.mxu0
      %1552 = vmatprep.mubr.f32.mxu0 0.0
      %1553 = vmatmul.mubr.f32.gmra.mxu0 %v1335
      %v1554 = vpop.f32.mrf.mxu0
      %v1555 = vadd.f32 0.0, %v1554
      %v1556 = vpop.f32.mrf.mxu0
      %1557 = vmatprep.mubr.f32.mxu0 0.0
      %1558 = vmatmul.mubr.f32.gmra.mxu0 %v1338
      %v1559 = vpop.f32.mrf.mxu0
      %v1560 = vadd.f32 0.0, %v1559
      %v1561 = vpop.f32.mrf.mxu0
      %1562 = vmatprep.mubr.f32.mxu0 0.0
      %1563 = vmatmul.mubr.f32.gmra.mxu0 %v1341
      %v1564 = vpop.f32.mrf.mxu0
      %v1565 = vadd.f32 0.0, %v1564
      %v1566 = vpop.f32.mrf.mxu0
      %1567 = vdwg.mxu0
      %v1568 = vmul.f32 %v1410, 0.5
      %v1569 = vmul.f32 %v1415, 0.5
      %v1570 = vmul.f32 %v1420, 0.5
      %v1571 = vmul.f32 %v1425, 0.5
      %v1572 = vmul.f32 %v1430, 0.5
      %v1573 = vmul.f32 %v1435, 0.5
      %v1574 = vmul.f32 %v1440, 0.5
      %v1575 = vmul.f32 %v1445, 0.5
      %v1576 = vmul.f32 %v1450, 0.5
      %v1577 = vmul.f32 %v1455, 0.5
      %v1578 = vmul.f32 %v1460, 0.5
      %v1579 = vmul.f32 %v1465, 0.5
      %v1580 = vmul.f32 %v1470, 0.5
      %v1581 = vmul.f32 %v1475, 0.5
      %v1582 = vmul.f32 %v1480, 0.5
      %v1583 = vmul.f32 %v1485, 0.5
      %v1584 = vmul.f32 %v1490, 0.5
      %v1585 = vmul.f32 %v1495, 0.5
      %v1586 = vmul.f32 %v1500, 0.5
      %v1587 = vmul.f32 %v1505, 0.5
      %v1588 = vmul.f32 %v1510, 0.5
      %v1589 = vmul.f32 %v1515, 0.5
      %v1590 = vmul.f32 %v1520, 0.5
      %v1591 = vmul.f32 %v1525, 0.5
      %v1592 = vmul.f32 %v1530, 0.5
      %v1593 = vmul.f32 %v1535, 0.5
      %v1594 = vmul.f32 %v1540, 0.5
      %v1595 = vmul.f32 %v1545, 0.5
      %v1596 = vmul.f32 %v1550, 0.5
      %v1597 = vmul.f32 %v1555, 0.5
      %v1598 = vmul.f32 %v1560, 0.5
      %v1599 = vmul.f32 %v1565, 0.5
      %v1600 = vmul.f32 %v1568, 1.442695
      %v1601 = vpow.pop %v1600
      %v1602 = vmul.f32 %v1569, 1.442695
      %v1603 = vpow.pop %v1602
      %v1604 = vmul.f32 %v1570, 1.442695
      %v1605 = vpow.pop %v1604
      %v1606 = vmul.f32 %v1571, 1.442695
      %v1607 = vpow.pop %v1606
      %v1608 = vmul.f32 %v1572, 1.442695
      %v1609 = vpow.pop %v1608
      %v1610 = vmul.f32 %v1573, 1.442695
      %v1611 = vpow.pop %v1610
      %v1612 = vmul.f32 %v1574, 1.442695
      %v1613 = vpow.pop %v1612
      %v1614 = vmul.f32 %v1575, 1.442695
      %v1615 = vpow.pop %v1614
      %v1616 = vmul.f32 %v1576, 1.442695
      %v1617 = vpow.pop %v1616
      %v1618 = vmul.f32 %v1577, 1.442695
      %v1619 = vpow.pop %v1618
      %v1620 = vmul.f32 %v1578, 1.442695
      %v1621 = vpow.pop %v1620
      %v1622 = vmul.f32 %v1579, 1.442695
      %v1623 = vpow.pop %v1622
      %v1624 = vmul.f32 %v1580, 1.442695
      %v1625 = vpow.pop %v1624
      %v1626 = vmul.f32 %v1581, 1.442695
      %v1627 = vpow.pop %v1626
      %v1628 = vmul.f32 %v1582, 1.442695
      %v1629 = vpow.pop %v1628
      %v1630 = vmul.f32 %v1583, 1.442695
      %v1631 = vpow.pop %v1630
      %v1632 = vmul.f32 %v1584, 1.442695
      %v1633 = vpow.pop %v1632
      %v1634 = vmul.f32 %v1585, 1.442695
      %v1635 = vpow.pop %v1634
      %v1636 = vmul.f32 %v1586, 1.442695
      %v1637 = vpow.pop %v1636
      %v1638 = vmul.f32 %v1587, 1.442695
      %v1639 = vpow.pop %v1638
      %v1640 = vmul.f32 %v1588, 1.442695
      %v1641 = vpow.pop %v1640
      %v1642 = vmul.f32 %v1589, 1.442695
      %v1643 = vpow.pop %v1642
      %v1644 = vmul.f32 %v1590, 1.442695
      %v1645 = vpow.pop %v1644
      %v1646 = vmul.f32 %v1591, 1.442695
      %v1647 = vpow.pop %v1646
      %v1648 = vmul.f32 %v1592, 1.442695
      %v1649 = vpow.pop %v1648
      %v1650 = vmul.f32 %v1593, 1.442695
      %v1651 = vpow.pop %v1650
      %v1652 = vmul.f32 %v1594, 1.442695
      %v1653 = vpow.pop %v1652
      %v1654 = vmul.f32 %v1595, 1.442695
      %v1655 = vpow.pop %v1654
      %v1656 = vmul.f32 %v1596, 1.442695
      %v1657 = vpow.pop %v1656
      %v1658 = vmul.f32 %v1597, 1.442695
      %v1659 = vpow.pop %v1658
      %v1660 = vmul.f32 %v1598, 1.442695
      %v1661 = vpow.pop %v1660
      %v1662 = vmul.f32 %v1599, 1.442695
      %v1663 = vpow.pop %v1662
      %v1664 = vmul.f32 %v147, %v1601
      %v1665 = vmul.f32 %v148, %v1603
      %v1666 = vmul.f32 %v149, %v1605
      %v1667 = vmul.f32 %v150, %v1607
      %v1668 = vmul.f32 %v151, %v1609
      %v1669 = vmul.f32 %v152, %v1611
      %v1670 = vmul.f32 %v153, %v1613
      %v1671 = vmul.f32 %v154, %v1615
      %v1672 = vmul.f32 %v155, %v1617
      %v1673 = vmul.f32 %v156, %v1619
      %v1674 = vmul.f32 %v157, %v1621
      %v1675 = vmul.f32 %v158, %v1623
      %v1676 = vmul.f32 %v159, %v1625
      %v1677 = vmul.f32 %v160, %v1627
      %v1678 = vmul.f32 %v161, %v1629
      %v1679 = vmul.f32 %v162, %v1631
      %v1680 = vmul.f32 %v163, %v1633
      %v1681 = vmul.f32 %v164, %v1635
      %v1682 = vmul.f32 %v165, %v1637
      %v1683 = vmul.f32 %v166, %v1639
      %v1684 = vmul.f32 %v167, %v1641
      %v1685 = vmul.f32 %v168, %v1643
      %v1686 = vmul.f32 %v169, %v1645
      %v1687 = vmul.f32 %v170, %v1647
      %v1688 = vmul.f32 %v171, %v1649
      %v1689 = vmul.f32 %v172, %v1651
      %v1690 = vmul.f32 %v173, %v1653
      %v1691 = vmul.f32 %v174, %v1655
      %v1692 = vmul.f32 %v175, %v1657
      %v1693 = vmul.f32 %v176, %v1659
      %v1694 = vmul.f32 %v177, %v1661
      %v1695 = vmul.f32 %v178, %v1663
      %1728 = vrot.lane.b32.xlu0 %v1410, 2
      %v1729 = vpop.permute.xlu0 %1728
      %1730 = vrot.lane.b32.xlu0 %v1415, 2
      %v1731 = vpop.permute.xlu0 %1730
      %1732 = vrot.lane.b32.xlu0 %v1420, 2
      %v1733 = vpop.permute.xlu0 %1732
      %1734 = vrot.lane.b32.xlu0 %v1425, 2
      %v1735 = vpop.permute.xlu0 %1734
      %1736 = vrot.lane.b32.xlu0 %v1430, 2
      %v1737 = vpop.permute.xlu0 %1736
      %1738 = vrot.lane.b32.xlu0 %v1435, 2
      %v1739 = vpop.permute.xlu0 %1738
      %1740 = vrot.lane.b32.xlu0 %v1440, 2
      %v1741 = vpop.permute.xlu0 %1740
      %1742 = vrot.lane.b32.xlu0 %v1445, 2
      %v1743 = vpop.permute.xlu0 %1742
      %1744 = vrot.lane.b32.xlu0 %v1450, 2
      %v1745 = vpop.permute.xlu0 %1744
      %1746 = vrot.lane.b32.xlu0 %v1455, 2
      %v1747 = vpop.permute.xlu0 %1746
      %1748 = vrot.lane.b32.xlu0 %v1460, 2
      %v1749 = vpop.permute.xlu0 %1748
      %1750 = vrot.lane.b32.xlu0 %v1465, 2
      %v1751 = vpop.permute.xlu0 %1750
      %1752 = vrot.lane.b32.xlu0 %v1470, 2
      %v1753 = vpop.permute.xlu0 %1752
      %1754 = vrot.lane.b32.xlu0 %v1475, 2
      %v1755 = vpop.permute.xlu0 %1754
      %1756 = vrot.lane.b32.xlu0 %v1480, 2
      %v1757 = vpop.permute.xlu0 %1756
      %1758 = vrot.lane.b32.xlu0 %v1485, 2
      %v1759 = vpop.permute.xlu0 %1758
      %1760 = vrot.lane.b32.xlu0 %v1490, 2
      %v1761 = vpop.permute.xlu0 %1760
      %1762 = vrot.lane.b32.xlu0 %v1495, 2
      %v1763 = vpop.permute.xlu0 %1762
      %1764 = vrot.lane.b32.xlu0 %v1500, 2
      %v1765 = vpop.permute.xlu0 %1764
      %1766 = vrot.lane.b32.xlu0 %v1505, 2
      %v1767 = vpop.permute.xlu0 %1766
      %1768 = vrot.lane.b32.xlu0 %v1510, 2
      %v1769 = vpop.permute.xlu0 %1768
      %1770 = vrot.lane.b32.xlu0 %v1515, 2
      %v1771 = vpop.permute.xlu0 %1770
      %1772 = vrot.lane.b32.xlu0 %v1520, 2
      %v1773 = vpop.permute.xlu0 %1772
      %1774 = vrot.lane.b32.xlu0 %v1525, 2
      %v1775 = vpop.permute.xlu0 %1774
      %1776 = vrot.lane.b32.xlu0 %v1530, 2
      %v1777 = vpop.permute.xlu0 %1776
      %1778 = vrot.lane.b32.xlu0 %v1535, 2
      %v1779 = vpop.permute.xlu0 %1778
      %1780 = vrot.lane.b32.xlu0 %v1540, 2
      %v1781 = vpop.permute.xlu0 %1780
      %1782 = vrot.lane.b32.xlu0 %v1545, 2
      %v1783 = vpop.permute.xlu0 %1782
      %1784 = vrot.lane.b32.xlu0 %v1550, 2
      %v1785 = vpop.permute.xlu0 %1784
      %1786 = vrot.lane.b32.xlu0 %v1555, 2
      %v1787 = vpop.permute.xlu0 %1786
      %1788 = vrot.lane.b32.xlu0 %v1560, 2
      %v1789 = vpop.permute.xlu0 %1788
      %1790 = vrot.lane.b32.xlu0 %v1565, 2
      %v1791 = vpop.permute.xlu0 %1790
      %v1824 = vadd.f32 %v1664, %v1729
      %v1825 = vadd.f32 %v1665, %v1731
      %v1826 = vadd.f32 %v1666, %v1733
      %v1827 = vadd.f32 %v1667, %v1735
      %v1828 = vadd.f32 %v1668, %v1737
      %v1829 = vadd.f32 %v1669, %v1739
      %v1830 = vadd.f32 %v1670, %v1741
      %v1831 = vadd.f32 %v1671, %v1743
      %v1832 = vadd.f32 %v1672, %v1745
      %v1833 = vadd.f32 %v1673, %v1747
      %v1834 = vadd.f32 %v1674, %v1749
      %v1835 = vadd.f32 %v1675, %v1751
      %v1836 = vadd.f32 %v1676, %v1753
      %v1837 = vadd.f32 %v1677, %v1755
      %v1838 = vadd.f32 %v1678, %v1757
      %v1839 = vadd.f32 %v1679, %v1759
      %v1840 = vadd.f32 %v1680, %v1761
      %v1841 = vadd.f32 %v1681, %v1763
      %v1842 = vadd.f32 %v1682, %v1765
      %v1843 = vadd.f32 %v1683, %v1767
      %v1844 = vadd.f32 %v1684, %v1769
      %v1845 = vadd.f32 %v1685, %v1771
      %v1846 = vadd.f32 %v1686, %v1773
      %v1847 = vadd.f32 %v1687, %v1775
      %v1848 = vadd.f32 %v1688, %v1777
      %v1849 = vadd.f32 %v1689, %v1779
      %v1850 = vadd.f32 %v1690, %v1781
      %v1851 = vadd.f32 %v1691, %v1783
      %v1852 = vadd.f32 %v1692, %v1785
      %v1853 = vadd.f32 %v1693, %v1787
      %v1854 = vadd.f32 %v1694, %v1789
      %v1855 = vadd.f32 %v1695, %v1791
      %v1856 = vld [vmem:[%s1 + $0x40] sm:$0x3]
      %v1857 = vld [vmem:[%s1 + $0x4f] sm:$0x1]
      %1859 = vset.pattern.permute.xlu0 2
      %1860 = vperm.xlu0 %1859, %v1824
      %v1861 = vpop.permute.xlu0 %1860
      %1864 = vset.pattern.permute.xlu0 2
      %1865 = vperm.xlu0 %1864, %v1825
      %v1866 = vpop.permute.xlu0 %1865
      %1869 = vset.pattern.permute.xlu0 2
      %1870 = vperm.xlu0 %1869, %v1826
      %v1871 = vpop.permute.xlu0 %1870
      %1874 = vset.pattern.permute.xlu0 2
      %1875 = vperm.xlu0 %1874, %v1827
      %v1876 = vpop.permute.xlu0 %1875
      %1879 = vset.pattern.permute.xlu0 2
      %1880 = vperm.xlu0 %1879, %v1828
      %v1881 = vpop.permute.xlu0 %1880
      %1884 = vset.pattern.permute.xlu0 2
      %1885 = vperm.xlu0 %1884, %v1829
      %v1886 = vpop.permute.xlu0 %1885
      %1889 = vset.pattern.permute.xlu0 2
      %1890 = vperm.xlu0 %1889, %v1830
      %v1891 = vpop.permute.xlu0 %1890
      %1894 = vset.pattern.permute.xlu0 2
      %1895 = vperm.xlu0 %1894, %v1831
      %v1896 = vpop.permute.xlu0 %1895
      %1899 = vset.pattern.permute.xlu0 2
      %1900 = vperm.xlu0 %1899, %v1832
      %v1901 = vpop.permute.xlu0 %1900
      %1904 = vset.pattern.permute.xlu0 2
      %1905 = vperm.xlu0 %1904, %v1833
      %v1906 = vpop.permute.xlu0 %1905
      %1909 = vset.pattern.permute.xlu0 2
      %1910 = vperm.xlu0 %1909, %v1834
      %v1911 = vpop.permute.xlu0 %1910
      %1914 = vset.pattern.permute.xlu0 2
      %1915 = vperm.xlu0 %1914, %v1835
      %v1916 = vpop.permute.xlu0 %1915
      %1919 = vset.pattern.permute.xlu0 2
      %1920 = vperm.xlu0 %1919, %v1836
      %v1921 = vpop.permute.xlu0 %1920
      %1924 = vset.pattern.permute.xlu0 2
      %1925 = vperm.xlu0 %1924, %v1837
      %v1926 = vpop.permute.xlu0 %1925
      %1929 = vset.pattern.permute.xlu0 2
      %1930 = vperm.xlu0 %1929, %v1838
      %v1931 = vpop.permute.xlu0 %1930
      %1934 = vset.pattern.permute.xlu0 2
      %1935 = vperm.xlu0 %1934, %v1839
      %v1936 = vpop.permute.xlu0 %1935
      %1939 = vset.pattern.permute.xlu0 2
      %1940 = vperm.xlu0 %1939, %v1840
      %v1941 = vpop.permute.xlu0 %1940
      %1944 = vset.pattern.permute.xlu0 2
      %1945 = vperm.xlu0 %1944, %v1841
      %v1946 = vpop.permute.xlu0 %1945
      %1949 = vset.pattern.permute.xlu0 2
      %1950 = vperm.xlu0 %1949, %v1842
      %v1951 = vpop.permute.xlu0 %1950
      %1954 = vset.pattern.permute.xlu0 2
      %1955 = vperm.xlu0 %1954, %v1843
      %v1956 = vpop.permute.xlu0 %1955
      %1959 = vset.pattern.permute.xlu0 2
      %1960 = vperm.xlu0 %1959, %v1844
      %v1961 = vpop.permute.xlu0 %1960
      %1964 = vset.pattern.permute.xlu0 2
      %1965 = vperm.xlu0 %1964, %v1845
      %v1966 = vpop.permute.xlu0 %1965
      %1969 = vset.pattern.permute.xlu0 2
      %1970 = vperm.xlu0 %1969, %v1846
      %v1971 = vpop.permute.xlu0 %1970
      %1974 = vset.pattern.permute.xlu0 2
      %1975 = vperm.xlu0 %1974, %v1847
      %v1976 = vpop.permute.xlu0 %1975
      %1979 = vset.pattern.permute.xlu0 2
      %1980 = vperm.xlu0 %1979, %v1848
      %v1981 = vpop.permute.xlu0 %1980
      %1984 = vset.pattern.permute.xlu0 2
      %1985 = vperm.xlu0 %1984, %v1849
      %v1986 = vpop.permute.xlu0 %1985
      %1989 = vset.pattern.permute.xlu0 2
      %1990 = vperm.xlu0 %1989, %v1850
      %v1991 = vpop.permute.xlu0 %1990
      %1994 = vset.pattern.permute.xlu0 2
      %1995 = vperm.xlu0 %1994, %v1851
      %v1996 = vpop.permute.xlu0 %1995
      %1999 = vset.pattern.permute.xlu0 2
      %2000 = vperm.xlu0 %1999, %v1852
      %v2001 = vpop.permute.xlu0 %2000
      %2004 = vset.pattern.permute.xlu0 2
      %2005 = vperm.xlu0 %2004, %v1853
      %v2006 = vpop.permute.xlu0 %2005
      %2009 = vset.pattern.permute.xlu0 2
      %2010 = vperm.xlu0 %2009, %v1854
      %v2011 = vpop.permute.xlu0 %2010
      %2014 = vset.pattern.permute.xlu0 2
      %2015 = vperm.xlu0 %2014, %v1855
      %v2016 = vpop.permute.xlu0 %2015
      %v2018 = vlaneseq
      %v2019 = vshrl.u32 %v2018, 7
      %v2020 = vsub.s32 0, %v2019
      %v2021 = vrot.slane %v1856, %v2020
      %v2022 = vmul.f32 %v1861, %v2021
      %v2023 = vmul.f32 %v1866, %v2021
      %v2024 = vmul.f32 %v1871, %v2021
      %v2025 = vmul.f32 %v1876, %v2021
      %v2026 = vmul.f32 %v1881, %v2021
      %v2027 = vmul.f32 %v1886, %v2021
      %v2028 = vmul.f32 %v1891, %v2021
      %v2029 = vmul.f32 %v1896, %v2021
      %v2030 = vmul.f32 %v1901, %v2021
      %v2031 = vmul.f32 %v1906, %v2021
      %v2032 = vmul.f32 %v1911, %v2021
      %v2033 = vmul.f32 %v1916, %v2021
      %v2034 = vmul.f32 %v1921, %v2021
      %v2035 = vmul.f32 %v1926, %v2021
      %v2036 = vmul.f32 %v1931, %v2021
      %v2037 = vmul.f32 %v1936, %v2021
      %v2038 = vmul.f32 %v1941, %v2021
      %v2039 = vmul.f32 %v1946, %v2021
      %v2040 = vmul.f32 %v1951, %v2021
      %v2041 = vmul.f32 %v1956, %v2021
      %v2042 = vmul.f32 %v1961, %v2021
      %v2043 = vmul.f32 %v1966, %v2021
      %v2044 = vmul.f32 %v1971, %v2021
      %v2045 = vmul.f32 %v1976, %v2021
      %v2046 = vmul.f32 %v1981, %v2021
      %v2047 = vmul.f32 %v1986, %v2021
      %v2048 = vmul.f32 %v1991, %v2021
      %v2049 = vmul.f32 %v1996, %v2021
      %v2050 = vmul.f32 %v2001, %v2021
      %v2051 = vmul.f32 %v2006, %v2021
      %v2052 = vmul.f32 %v2011, %v2021
      %v2053 = vmul.f32 %v2016, %v2021
      %v2054 = vlaneseq
      %v2055 = vshrl.u32 %v2054, 7
      %v2056 = vsub.s32 0, %v2055
      %v2057 = vrot.slane %v1857, %v2056
      %v2058 = vadd.f32 %v2057, %v2022
      %v2059 = vadd.f32 %v2057, %v2023
      %v2060 = vadd.f32 %v2057, %v2024
      %v2061 = vadd.f32 %v2057, %v2025
      %v2062 = vadd.f32 %v2057, %v2026
      %v2063 = vadd.f32 %v2057, %v2027
      %v2064 = vadd.f32 %v2057, %v2028
      %v2065 = vadd.f32 %v2057, %v2029
      %v2066 = vadd.f32 %v2057, %v2030
      %v2067 = vadd.f32 %v2057, %v2031
      %v2068 = vadd.f32 %v2057, %v2032
      %v2069 = vadd.f32 %v2057, %v2033
      %v2070 = vadd.f32 %v2057, %v2034
      %v2071 = vadd.f32 %v2057, %v2035
      %v2072 = vadd.f32 %v2057, %v2036
      %v2073 = vadd.f32 %v2057, %v2037
      %v2074 = vadd.f32 %v2057, %v2038
      %v2075 = vadd.f32 %v2057, %v2039
      %v2076 = vadd.f32 %v2057, %v2040
      %v2077 = vadd.f32 %v2057, %v2041
      %v2078 = vadd.f32 %v2057, %v2042
      %v2079 = vadd.f32 %v2057, %v2043
      %v2080 = vadd.f32 %v2057, %v2044
      %v2081 = vadd.f32 %v2057, %v2045
      %v2082 = vadd.f32 %v2057, %v2046
      %v2083 = vadd.f32 %v2057, %v2047
      %v2084 = vadd.f32 %v2057, %v2048
      %v2085 = vadd.f32 %v2057, %v2049
      %v2086 = vadd.f32 %v2057, %v2050
      %v2087 = vadd.f32 %v2057, %v2051
      %v2088 = vadd.f32 %v2057, %v2052
      %v2089 = vadd.f32 %v2057, %v2053
      %2090 = vset.pattern.permute.xlu0 3
      %2091 = vperm.xlu0 %2090, %v1824
      %v2092 = vpop.permute.xlu0 %2091
      %2094 = vset.pattern.permute.xlu0 3
      %2095 = vperm.xlu0 %2094, %v1825
      %v2096 = vpop.permute.xlu0 %2095
      %2098 = vset.pattern.permute.xlu0 3
      %2099 = vperm.xlu0 %2098, %v1826
      %v2100 = vpop.permute.xlu0 %2099
      %2102 = vset.pattern.permute.xlu0 3
      %2103 = vperm.xlu0 %2102, %v1827
      %v2104 = vpop.permute.xlu0 %2103
      %2106 = vset.pattern.permute.xlu0 3
      %2107 = vperm.xlu0 %2106, %v1828
      %v2108 = vpop.permute.xlu0 %2107
      %2110 = vset.pattern.permute.xlu0 3
      %2111 = vperm.xlu0 %2110, %v1829
      %v2112 = vpop.permute.xlu0 %2111
      %2114 = vset.pattern.permute.xlu0 3
      %2115 = vperm.xlu0 %2114, %v1830
      %v2116 = vpop.permute.xlu0 %2115
      %2118 = vset.pattern.permute.xlu0 3
      %2119 = vperm.xlu0 %2118, %v1831
      %v2120 = vpop.permute.xlu0 %2119
      %2122 = vset.pattern.permute.xlu0 3
      %2123 = vperm.xlu0 %2122, %v1832
      %v2124 = vpop.permute.xlu0 %2123
      %2126 = vset.pattern.permute.xlu0 3
      %2127 = vperm.xlu0 %2126, %v1833
      %v2128 = vpop.permute.xlu0 %2127
      %2130 = vset.pattern.permute.xlu0 3
      %2131 = vperm.xlu0 %2130, %v1834
      %v2132 = vpop.permute.xlu0 %2131
      %2134 = vset.pattern.permute.xlu0 3
      %2135 = vperm.xlu0 %2134, %v1835
      %v2136 = vpop.permute.xlu0 %2135
      %2138 = vset.pattern.permute.xlu0 3
      %2139 = vperm.xlu0 %2138, %v1836
      %v2140 = vpop.permute.xlu0 %2139
      %2142 = vset.pattern.permute.xlu0 3
      %2143 = vperm.xlu0 %2142, %v1837
      %v2144 = vpop.permute.xlu0 %2143
      %2146 = vset.pattern.permute.xlu0 3
      %2147 = vperm.xlu0 %2146, %v1838
      %v2148 = vpop.permute.xlu0 %2147
      %2150 = vset.pattern.permute.xlu0 3
      %2151 = vperm.xlu0 %2150, %v1839
      %v2152 = vpop.permute.xlu0 %2151
      %2154 = vset.pattern.permute.xlu0 3
      %2155 = vperm.xlu0 %2154, %v1840
      %v2156 = vpop.permute.xlu0 %2155
      %2158 = vset.pattern.permute.xlu0 3
      %2159 = vperm.xlu0 %2158, %v1841
      %v2160 = vpop.permute.xlu0 %2159
      %2162 = vset.pattern.permute.xlu0 3
      %2163 = vperm.xlu0 %2162, %v1842
      %v2164 = vpop.permute.xlu0 %2163
      %2166 = vset.pattern.permute.xlu0 3
      %2167 = vperm.xlu0 %2166, %v1843
      %v2168 = vpop.permute.xlu0 %2167
      %2170 = vset.pattern.permute.xlu0 3
      %2171 = vperm.xlu0 %2170, %v1844
      %v2172 = vpop.permute.xlu0 %2171
      %2174 = vset.pattern.permute.xlu0 3
      %2175 = vperm.xlu0 %2174, %v1845
      %v2176 = vpop.permute.xlu0 %2175
      %2178 = vset.pattern.permute.xlu0 3
      %2179 = vperm.xlu0 %2178, %v1846
      %v2180 = vpop.permute.xlu0 %2179
      %2182 = vset.pattern.permute.xlu0 3
      %2183 = vperm.xlu0 %2182, %v1847
      %v2184 = vpop.permute.xlu0 %2183
      %2186 = vset.pattern.permute.xlu0 3
      %2187 = vperm.xlu0 %2186, %v1848
      %v2188 = vpop.permute.xlu0 %2187
      %2190 = vset.pattern.permute.xlu0 3
      %2191 = vperm.xlu0 %2190, %v1849
      %v2192 = vpop.permute.xlu0 %2191
      %2194 = vset.pattern.permute.xlu0 3
      %2195 = vperm.xlu0 %2194, %v1850
      %v2196 = vpop.permute.xlu0 %2195
      %2198 = vset.pattern.permute.xlu0 3
      %2199 = vperm.xlu0 %2198, %v1851
      %v2200 = vpop.permute.xlu0 %2199
      %2202 = vset.pattern.permute.xlu0 3
      %2203 = vperm.xlu0 %2202, %v1852
      %v2204 = vpop.permute.xlu0 %2203
      %2206 = vset.pattern.permute.xlu0 3
      %2207 = vperm.xlu0 %2206, %v1853
      %v2208 = vpop.permute.xlu0 %2207
      %2210 = vset.pattern.permute.xlu0 3
      %2211 = vperm.xlu0 %2210, %v1854
      %v2212 = vpop.permute.xlu0 %2211
      %2214 = vset.pattern.permute.xlu0 3
      %2215 = vperm.xlu0 %2214, %v1855
      %v2216 = vpop.permute.xlu0 %2215
      %v2218 = vlaneseq
      %v2219 = vshrl.u32 %v2218, 7
      %v2220 = vsub.s32 1, %v2219
      %v2221 = vrot.slane %v1856, %v2220
      %v2222 = vmul.f32 %v2092, %v2221
      %v2223 = vmul.f32 %v2096, %v2221
      %v2224 = vmul.f32 %v2100, %v2221
      %v2225 = vmul.f32 %v2104, %v2221
      %v2226 = vmul.f32 %v2108, %v2221
      %v2227 = vmul.f32 %v2112, %v2221
      %v2228 = vmul.f32 %v2116, %v2221
      %v2229 = vmul.f32 %v2120, %v2221
      %v2230 = vmul.f32 %v2124, %v2221
      %v2231 = vmul.f32 %v2128, %v2221
      %v2232 = vmul.f32 %v2132, %v2221
      %v2233 = vmul.f32 %v2136, %v2221
      %v2234 = vmul.f32 %v2140, %v2221
      %v2235 = vmul.f32 %v2144, %v2221
      %v2236 = vmul.f32 %v2148, %v2221
      %v2237 = vmul.f32 %v2152, %v2221
      %v2238 = vmul.f32 %v2156, %v2221
      %v2239 = vmul.f32 %v2160, %v2221
      %v2240 = vmul.f32 %v2164, %v2221
      %v2241 = vmul.f32 %v2168, %v2221
      %v2242 = vmul.f32 %v2172, %v2221
      %v2243 = vmul.f32 %v2176, %v2221
      %v2244 = vmul.f32 %v2180, %v2221
      %v2245 = vmul.f32 %v2184, %v2221
      %v2246 = vmul.f32 %v2188, %v2221
      %v2247 = vmul.f32 %v2192, %v2221
      %v2248 = vmul.f32 %v2196, %v2221
      %v2249 = vmul.f32 %v2200, %v2221
      %v2250 = vmul.f32 %v2204, %v2221
      %v2251 = vmul.f32 %v2208, %v2221
      %v2252 = vmul.f32 %v2212, %v2221
      %v2253 = vmul.f32 %v2216, %v2221
      %v2254 = vadd.f32 %v2058, %v2222
      %v2255 = vadd.f32 %v2059, %v2223
      %v2256 = vadd.f32 %v2060, %v2224
      %v2257 = vadd.f32 %v2061, %v2225
      %v2258 = vadd.f32 %v2062, %v2226
      %v2259 = vadd.f32 %v2063, %v2227
      %v2260 = vadd.f32 %v2064, %v2228
      %v2261 = vadd.f32 %v2065, %v2229
      %v2262 = vadd.f32 %v2066, %v2230
      %v2263 = vadd.f32 %v2067, %v2231
      %v2264 = vadd.f32 %v2068, %v2232
      %v2265 = vadd.f32 %v2069, %v2233
      %v2266 = vadd.f32 %v2070, %v2234
      %v2267 = vadd.f32 %v2071, %v2235
      %v2268 = vadd.f32 %v2072, %v2236
      %v2269 = vadd.f32 %v2073, %v2237
      %v2270 = vadd.f32 %v2074, %v2238
      %v2271 = vadd.f32 %v2075, %v2239
      %v2272 = vadd.f32 %v2076, %v2240
      %v2273 = vadd.f32 %v2077, %v2241
      %v2274 = vadd.f32 %v2078, %v2242
      %v2275 = vadd.f32 %v2079, %v2243
      %v2276 = vadd.f32 %v2080, %v2244
      %v2277 = vadd.f32 %v2081, %v2245
      %v2278 = vadd.f32 %v2082, %v2246
      %v2279 = vadd.f32 %v2083, %v2247
      %v2280 = vadd.f32 %v2084, %v2248
      %v2281 = vadd.f32 %v2085, %v2249
      %v2282 = vadd.f32 %v2086, %v2250
      %v2283 = vadd.f32 %v2087, %v2251
      %v2284 = vadd.f32 %v2088, %v2252
      %v2285 = vadd.f32 %v2089, %v2253
      %v2286 = vmax.f32 %v2254, 0.0
      %v2287 = vmax.f32 %v2255, 0.0
      %v2288 = vmax.f32 %v2256, 0.0
      %v2289 = vmax.f32 %v2257, 0.0
      %v2290 = vmax.f32 %v2258, 0.0
      %v2291 = vmax.f32 %v2259, 0.0
      %v2292 = vmax.f32 %v2260, 0.0
      %v2293 = vmax.f32 %v2261, 0.0
      %v2294 = vmax.f32 %v2262, 0.0
      %v2295 = vmax.f32 %v2263, 0.0
      %v2296 = vmax.f32 %v2264, 0.0
      %v2297 = vmax.f32 %v2265, 0.0
      %v2298 = vmax.f32 %v2266, 0.0
      %v2299 = vmax.f32 %v2267, 0.0
      %v2300 = vmax.f32 %v2268, 0.0
      %v2301 = vmax.f32 %v2269, 0.0
      %v2302 = vmax.f32 %v2270, 0.0
      %v2303 = vmax.f32 %v2271, 0.0
      %v2304 = vmax.f32 %v2272, 0.0
      %v2305 = vmax.f32 %v2273, 0.0
      %v2306 = vmax.f32 %v2274, 0.0
      %v2307 = vmax.f32 %v2275, 0.0
      %v2308 = vmax.f32 %v2276, 0.0
      %v2309 = vmax.f32 %v2277, 0.0
      %v2310 = vmax.f32 %v2278, 0.0
      %v2311 = vmax.f32 %v2279, 0.0
      %v2312 = vmax.f32 %v2280, 0.0
      %v2313 = vmax.f32 %v2281, 0.0
      %v2314 = vmax.f32 %v2282, 0.0
      %v2315 = vmax.f32 %v2283, 0.0
      %v2316 = vmax.f32 %v2284, 0.0
      %v2317 = vmax.f32 %v2285, 0.0
      %v2318 = vld [vmem:[%s1 + $0x50] sm:$0xff]
      %v2319 = vld [vmem:[%s1 + $0x58] sm:$0xff]
      %v2321 = vsel %vm181, %v2286, 0
      %v2324 = vsel %vm181, %v2287, 0
      %v2327 = vsel %vm181, %v2288, 0
      %v2330 = vsel %vm181, %v2289, 0
      %v2333 = vsel %vm181, %v2290, 0
      %v2336 = vsel %vm181, %v2291, 0
      %v2339 = vsel %vm181, %v2292, 0
      %v2342 = vsel %vm181, %v2293, 0
      %v2345 = vsel %vm181, %v2294, 0
      %v2348 = vsel %vm181, %v2295, 0
      %v2351 = vsel %vm181, %v2296, 0
      %v2354 = vsel %vm181, %v2297, 0
      %v2357 = vsel %vm181, %v2298, 0
      %v2360 = vsel %vm181, %v2299, 0
      %v2363 = vsel %vm181, %v2300, 0
      %v2366 = vsel %vm181, %v2301, 0
      %v2369 = vsel %vm181, %v2302, 0
      %v2372 = vsel %vm181, %v2303, 0
      %v2375 = vsel %vm181, %v2304, 0
      %v2378 = vsel %vm181, %v2305, 0
      %v2381 = vsel %vm181, %v2306, 0
      %v2384 = vsel %vm181, %v2307, 0
      %v2387 = vsel %vm181, %v2308, 0
      %v2390 = vsel %vm181, %v2309, 0
      %v2393 = vsel %vm181, %v2310, 0
      %v2396 = vsel %vm181, %v2311, 0
      %v2399 = vsel %vm181, %v2312, 0
      %v2402 = vsel %vm181, %v2313, 0
      %v2405 = vsel %vm181, %v2314, 0
      %v2408 = vsel %vm181, %v2315, 0
      %v2411 = vsel %vm181, %v2316, 0
      %v2414 = vsel %vm181, %v2317, 0
      %2416 = vmatprep.subr.mxu0 0.0
      %2417 = vmatpush1.msra.mxu0 0.0
      %2418 = vmatprep.subr.mxu0 0.0
      %2419 = vmatpush1.msra.mxu0 0.0
      %2420 = vmatprep.subr.mxu0 0.0
      %2421 = vmatpush1.msra.mxu0 0.0
      %2422 = vmatprep.subr.mxu0 0.0
      %2423 = vmatpush1.msra.mxu0 0.0
      %2424 = vmatprep.subr.mxu0 0.0
      %2425 = vmatpush1.msra.mxu0 0.0
      %2426 = vmatprep.subr.mxu0 0.0
      %2427 = vmatpush1.msra.mxu0 0.0
      %2428 = vmatprep.subr.mxu0 0.0
      %2429 = vmatpush1.msra.mxu0 0.0
      %2430 = vmatprep.subr.mxu0 0.0
      %2431 = vmatpush1.msra.mxu0 0.0
      %2432 = vmatprep.subr.mxu0 0.0
      %2433 = vmatpush1.msra.mxu0 0.0
      %2434 = vmatprep.subr.mxu0 0.0
      %2435 = vmatpush1.msra.mxu0 0.0
      %2436 = vmatprep.subr.mxu0 0.0
      %2437 = vmatpush1.msra.mxu0 0.0
      %2438 = vmatprep.subr.mxu0 0.0
      %2439 = vmatpush1.msra.mxu0 0.0
      %2440 = vmatprep.subr.mxu0 0.0
      %2441 = vmatpush1.msra.mxu0 0.0
      %2442 = vmatprep.subr.mxu0 0.0
      %2443 = vmatpush1.msra.mxu0 0.0
      %2444 = vmatprep.subr.mxu0 0.0
      %2445 = vmatpush1.msra.mxu0 %v2319
      %2446 = vmatprep.subr.mxu0 0.0
      %2447 = vmatpush1.msra.mxu0 %v2318
      %2448 = vmatprep.subr.mxu0 0.0
      %2449 = vmatpush2.msra.mxu0 0.0
      %2450 = vmatprep.subr.mxu0 0.0
      %2451 = vmatpush2.msra.mxu0 0.0
      %2452 = vmatprep.subr.mxu0 0.0
      %2453 = vmatpush2.msra.mxu0 0.0
      %2454 = vmatprep.subr.mxu0 0.0
      %2455 = vmatpush2.msra.mxu0 0.0
      %2456 = vmatprep.subr.mxu0 0.0
      %2457 = vmatpush2.msra.mxu0 0.0
      %2458 = vmatprep.subr.mxu0 0.0
      %2459 = vmatpush2.msra.mxu0 0.0
      %2460 = vmatprep.subr.mxu0 0.0
      %2461 = vmatpush2.msra.mxu0 0.0
      %2462 = vmatprep.subr.mxu0 0.0
      %2463 = vmatpush2.msra.mxu0 0.0
      %2464 = vmatprep.subr.mxu0 0.0
      %2465 = vmatpush2.msra.mxu0 0.0
      %2466 = vmatprep.subr.mxu0 0.0
      %2467 = vmatpush2.msra.mxu0 0.0
      %2468 = vmatprep.subr.mxu0 0.0
      %2469 = vmatpush2.msra.mxu0 0.0
      %2470 = vmatprep.subr.mxu0 0.0
      %2471 = vmatpush2.msra.mxu0 0.0
      %2472 = vmatprep.subr.mxu0 0.0
      %2473 = vmatpush2.msra.mxu0 0.0
      %2474 = vmatprep.subr.mxu0 0.0
      %2475 = vmatpush2.msra.mxu0 0.0
      %2476 = vmatprep.subr.mxu0 0.0
      %2477 = vmatpush2.msra.mxu0 0.0
      %2478 = vmatprep.subr.mxu0 0.0
      %2479 = vmatpush2.msra.mxu0 0.0
      %2480 = vmatprep.mubr.f32.mxu0 0.0
      %2481 = vmatmul.mubr.f32.gmra.mxu0 %v2321
      %v2482 = vpop.f32.mrf.mxu0
      %v2483 = vadd.f32 0.0, %v2482
      %v2484 = vpop.f32.mrf.mxu0
      %2485 = vmatprep.mubr.f32.mxu0 0.0
      %2486 = vmatmul.mubr.f32.gmra.mxu0 %v2324
      %v2487 = vpop.f32.mrf.mxu0
      %v2488 = vadd.f32 0.0, %v2487
      %v2489 = vpop.f32.mrf.mxu0
      %2490 = vmatprep.mubr.f32.mxu0 0.0
      %2491 = vmatmul.mubr.f32.gmra.mxu0 %v2327
      %v2492 = vpop.f32.mrf.mxu0
      %v2493 = vadd.f32 0.0, %v2492
      %v2494 = vpop.f32.mrf.mxu0
      %2495 = vmatprep.mubr.f32.mxu0 0.0
      %2496 = vmatmul.mubr.f32.gmra.mxu0 %v2330
      %v2497 = vpop.f32.mrf.mxu0
      %v2498 = vadd.f32 0.0, %v2497
      %v2499 = vpop.f32.mrf.mxu0
      %2500 = vmatprep.mubr.f32.mxu0 0.0
      %2501 = vmatmul.mubr.f32.gmra.mxu0 %v2333
      %v2502 = vpop.f32.mrf.mxu0
      %v2503 = vadd.f32 0.0, %v2502
      %v2504 = vpop.f32.mrf.mxu0
      %2505 = vmatprep.mubr.f32.mxu0 0.0
      %2506 = vmatmul.mubr.f32.gmra.mxu0 %v2336
      %v2507 = vpop.f32.mrf.mxu0
      %v2508 = vadd.f32 0.0, %v2507
      %v2509 = vpop.f32.mrf.mxu0
      %2510 = vmatprep.mubr.f32.mxu0 0.0
      %2511 = vmatmul.mubr.f32.gmra.mxu0 %v2339
      %v2512 = vpop.f32.mrf.mxu0
      %v2513 = vadd.f32 0.0, %v2512
      %v2514 = vpop.f32.mrf.mxu0
      %2515 = vmatprep.mubr.f32.mxu0 0.0
      %2516 = vmatmul.mubr.f32.gmra.mxu0 %v2342
      %v2517 = vpop.f32.mrf.mxu0
      %v2518 = vadd.f32 0.0, %v2517
      %v2519 = vpop.f32.mrf.mxu0
      %2520 = vmatprep.mubr.f32.mxu0 0.0
      %2521 = vmatmul.mubr.f32.gmra.mxu0 %v2345
      %v2522 = vpop.f32.mrf.mxu0
      %v2523 = vadd.f32 0.0, %v2522
      %v2524 = vpop.f32.mrf.mxu0
      %2525 = vmatprep.mubr.f32.mxu0 0.0
      %2526 = vmatmul.mubr.f32.gmra.mxu0 %v2348
      %v2527 = vpop.f32.mrf.mxu0
      %v2528 = vadd.f32 0.0, %v2527
      %v2529 = vpop.f32.mrf.mxu0
      %2530 = vmatprep.mubr.f32.mxu0 0.0
      %2531 = vmatmul.mubr.f32.gmra.mxu0 %v2351
      %v2532 = vpop.f32.mrf.mxu0
      %v2533 = vadd.f32 0.0, %v2532
      %v2534 = vpop.f32.mrf.mxu0
      %2535 = vmatprep.mubr.f32.mxu0 0.0
      %2536 = vmatmul.mubr.f32.gmra.mxu0 %v2354
      %v2537 = vpop.f32.mrf.mxu0
      %v2538 = vadd.f32 0.0, %v2537
      %v2539 = vpop.f32.mrf.mxu0
      %2540 = vmatprep.mubr.f32.mxu0 0.0
      %2541 = vmatmul.mubr.f32.gmra.mxu0 %v2357
      %v2542 = vpop.f32.mrf.mxu0
      %v2543 = vadd.f32 0.0, %v2542
      %v2544 = vpop.f32.mrf.mxu0
      %2545 = vmatprep.mubr.f32.mxu0 0.0
      %2546 = vmatmul.mubr.f32.gmra.mxu0 %v2360
      %v2547 = vpop.f32.mrf.mxu0
      %v2548 = vadd.f32 0.0, %v2547
      %v2549 = vpop.f32.mrf.mxu0
      %2550 = vmatprep.mubr.f32.mxu0 0.0
      %2551 = vmatmul.mubr.f32.gmra.mxu0 %v2363
      %v2552 = vpop.f32.mrf.mxu0
      %v2553 = vadd.f32 0.0, %v2552
      %v2554 = vpop.f32.mrf.mxu0
      %2555 = vmatprep.mubr.f32.mxu0 0.0
      %2556 = vmatmul.mubr.f32.gmra.mxu0 %v2366
      %v2557 = vpop.f32.mrf.mxu0
      %v2558 = vadd.f32 0.0, %v2557
      %v2559 = vpop.f32.mrf.mxu0
      %2560 = vmatprep.mubr.f32.mxu0 0.0
      %2561 = vmatmul.mubr.f32.gmra.mxu0 %v2369
      %v2562 = vpop.f32.mrf.mxu0
      %v2563 = vadd.f32 0.0, %v2562
      %v2564 = vpop.f32.mrf.mxu0
      %2565 = vmatprep.mubr.f32.mxu0 0.0
      %2566 = vmatmul.mubr.f32.gmra.mxu0 %v2372
      %v2567 = vpop.f32.mrf.mxu0
      %v2568 = vadd.f32 0.0, %v2567
      %v2569 = vpop.f32.mrf.mxu0
      %2570 = vmatprep.mubr.f32.mxu0 0.0
      %2571 = vmatmul.mubr.f32.gmra.mxu0 %v2375
      %v2572 = vpop.f32.mrf.mxu0
      %v2573 = vadd.f32 0.0, %v2572
      %v2574 = vpop.f32.mrf.mxu0
      %2575 = vmatprep.mubr.f32.mxu0 0.0
      %2576 = vmatmul.mubr.f32.gmra.mxu0 %v2378
      %v2577 = vpop.f32.mrf.mxu0
      %v2578 = vadd.f32 0.0, %v2577
      %v2579 = vpop.f32.mrf.mxu0
      %2580 = vmatprep.mubr.f32.mxu0 0.0
      %2581 = vmatmul.mubr.f32.gmra.mxu0 %v2381
      %v2582 = vpop.f32.mrf.mxu0
      %v2583 = vadd.f32 0.0, %v2582
      %v2584 = vpop.f32.mrf.mxu0
      %2585 = vmatprep.mubr.f32.mxu0 0.0
      %2586 = vmatmul.mubr.f32.gmra.mxu0 %v2384
      %v2587 = vpop.f32.mrf.mxu0
      %v2588 = vadd.f32 0.0, %v2587
      %v2589 = vpop.f32.mrf.mxu0
      %2590 = vmatprep.mubr.f32.mxu0 0.0
      %2591 = vmatmul.mubr.f32.gmra.mxu0 %v2387
      %v2592 = vpop.f32.mrf.mxu0
      %v2593 = vadd.f32 0.0, %v2592
      %v2594 = vpop.f32.mrf.mxu0
      %2595 = vmatprep.mubr.f32.mxu0 0.0
      %2596 = vmatmul.mubr.f32.gmra.mxu0 %v2390
      %v2597 = vpop.f32.mrf.mxu0
      %v2598 = vadd.f32 0.0, %v2597
      %v2599 = vpop.f32.mrf.mxu0
      %2600 = vmatprep.mubr.f32.mxu0 0.0
      %2601 = vmatmul.mubr.f32.gmra.mxu0 %v2393
      %v2602 = vpop.f32.mrf.mxu0
      %v2603 = vadd.f32 0.0, %v2602
      %v2604 = vpop.f32.mrf.mxu0
      %2605 = vmatprep.mubr.f32.mxu0 0.0
      %2606 = vmatmul.mubr.f32.gmra.mxu0 %v2396
      %v2607 = vpop.f32.mrf.mxu0
      %v2608 = vadd.f32 0.0, %v2607
      %v2609 = vpop.f32.mrf.mxu0
      %2610 = vmatprep.mubr.f32.mxu0 0.0
      %2611 = vmatmul.mubr.f32.gmra.mxu0 %v2399
      %v2612 = vpop.f32.mrf.mxu0
      %v2613 = vadd.f32 0.0, %v2612
      %v2614 = vpop.f32.mrf.mxu0
      %2615 = vmatprep.mubr.f32.mxu0 0.0
      %2616 = vmatmul.mubr.f32.gmra.mxu0 %v2402
      %v2617 = vpop.f32.mrf.mxu0
      %v2618 = vadd.f32 0.0, %v2617
      %v2619 = vpop.f32.mrf.mxu0
      %2620 = vmatprep.mubr.f32.mxu0 0.0
      %2621 = vmatmul.mubr.f32.gmra.mxu0 %v2405
      %v2622 = vpop.f32.mrf.mxu0
      %v2623 = vadd.f32 0.0, %v2622
      %v2624 = vpop.f32.mrf.mxu0
      %2625 = vmatprep.mubr.f32.mxu0 0.0
      %2626 = vmatmul.mubr.f32.gmra.mxu0 %v2408
      %v2627 = vpop.f32.mrf.mxu0
      %v2628 = vadd.f32 0.0, %v2627
      %v2629 = vpop.f32.mrf.mxu0
      %2630 = vmatprep.mubr.f32.mxu0 0.0
      %2631 = vmatmul.mubr.f32.gmra.mxu0 %v2411
      %v2632 = vpop.f32.mrf.mxu0
      %v2633 = vadd.f32 0.0, %v2632
      %v2634 = vpop.f32.mrf.mxu0
      %2635 = vmatprep.mubr.f32.mxu0 0.0
      %2636 = vmatmul.mubr.f32.gmra.mxu0 %v2414
      %v2637 = vpop.f32.mrf.mxu0
      %v2638 = vadd.f32 0.0, %v2637
      %v2639 = vpop.f32.mrf.mxu0
      %2640 = vdwg.mxu0
      %v2641 = vmax.f32 %v2483, 0.0
      %v2642 = vmax.f32 %v2488, 0.0
      %v2643 = vmax.f32 %v2493, 0.0
      %v2644 = vmax.f32 %v2498, 0.0
      %v2645 = vmax.f32 %v2503, 0.0
      %v2646 = vmax.f32 %v2508, 0.0
      %v2647 = vmax.f32 %v2513, 0.0
      %v2648 = vmax.f32 %v2518, 0.0
      %v2649 = vmax.f32 %v2523, 0.0
      %v2650 = vmax.f32 %v2528, 0.0
      %v2651 = vmax.f32 %v2533, 0.0
      %v2652 = vmax.f32 %v2538, 0.0
      %v2653 = vmax.f32 %v2543, 0.0
      %v2654 = vmax.f32 %v2548, 0.0
      %v2655 = vmax.f32 %v2553, 0.0
      %v2656 = vmax.f32 %v2558, 0.0
      %v2657 = vmax.f32 %v2563, 0.0
      %v2658 = vmax.f32 %v2568, 0.0
      %v2659 = vmax.f32 %v2573, 0.0
      %v2660 = vmax.f32 %v2578, 0.0
      %v2661 = vmax.f32 %v2583, 0.0
      %v2662 = vmax.f32 %v2588, 0.0
      %v2663 = vmax.f32 %v2593, 0.0
      %v2664 = vmax.f32 %v2598, 0.0
      %v2665 = vmax.f32 %v2603, 0.0
      %v2666 = vmax.f32 %v2608, 0.0
      %v2667 = vmax.f32 %v2613, 0.0
      %v2668 = vmax.f32 %v2618, 0.0
      %v2669 = vmax.f32 %v2623, 0.0
      %v2670 = vmax.f32 %v2628, 0.0
      %v2671 = vmax.f32 %v2633, 0.0
      %v2672 = vmax.f32 %v2638, 0.0
      %v2673 = vld [vmem:[%s1 + $0x60] sm:$0xff]
      %v2674 = vld [vmem:[%s1 + $0x68] sm:$0xff]
      %v2676 = vsel %vm181, %v2641, 0
      %v2679 = vsel %vm181, %v2642, 0
      %v2682 = vsel %vm181, %v2643, 0
      %v2685 = vsel %vm181, %v2644, 0
      %v2688 = vsel %vm181, %v2645, 0
      %v2691 = vsel %vm181, %v2646, 0
      %v2694 = vsel %vm181, %v2647, 0
      %v2697 = vsel %vm181, %v2648, 0
      %v2700 = vsel %vm181, %v2649, 0
      %v2703 = vsel %vm181, %v2650, 0
      %v2706 = vsel %vm181, %v2651, 0
      %v2709 = vsel %vm181, %v2652, 0
      %v2712 = vsel %vm181, %v2653, 0
      %v2715 = vsel %vm181, %v2654, 0
      %v2718 = vsel %vm181, %v2655, 0
      %v2721 = vsel %vm181, %v2656, 0
      %v2724 = vsel %vm181, %v2657, 0
      %v2727 = vsel %vm181, %v2658, 0
      %v2730 = vsel %vm181, %v2659, 0
      %v2733 = vsel %vm181, %v2660, 0
      %v2736 = vsel %vm181, %v2661, 0
      %v2739 = vsel %vm181, %v2662, 0
      %v2742 = vsel %vm181, %v2663, 0
      %v2745 = vsel %vm181, %v2664, 0
      %v2748 = vsel %vm181, %v2665, 0
      %v2751 = vsel %vm181, %v2666, 0
      %v2754 = vsel %vm181, %v2667, 0
      %v2757 = vsel %vm181, %v2668, 0
      %v2760 = vsel %vm181, %v2669, 0
      %v2763 = vsel %vm181, %v2670, 0
      %v2766 = vsel %vm181, %v2671, 0
      %v2769 = vsel %vm181, %v2672, 0
      %2771 = vmatprep.subr.mxu0 0.0
      %2772 = vmatpush1.msra.mxu0 0.0
      %2773 = vmatprep.subr.mxu0 0.0
      %2774 = vmatpush1.msra.mxu0 0.0
      %2775 = vmatprep.subr.mxu0 0.0
      %2776 = vmatpush1.msra.mxu0 0.0
      %2777 = vmatprep.subr.mxu0 0.0
      %2778 = vmatpush1.msra.mxu0 0.0
      %2779 = vmatprep.subr.mxu0 0.0
      %2780 = vmatpush1.msra.mxu0 0.0
      %2781 = vmatprep.subr.mxu0 0.0
      %2782 = vmatpush1.msra.mxu0 0.0
      %2783 = vmatprep.subr.mxu0 0.0
      %2784 = vmatpush1.msra.mxu0 0.0
      %2785 = vmatprep.subr.mxu0 0.0
      %2786 = vmatpush1.msra.mxu0 0.0
      %2787 = vmatprep.subr.mxu0 0.0
      %2788 = vmatpush1.msra.mxu0 0.0
      %2789 = vmatprep.subr.mxu0 0.0
      %2790 = vmatpush1.msra.mxu0 0.0
      %2791 = vmatprep.subr.mxu0 0.0
      %2792 = vmatpush1.msra.mxu0 0.0
      %2793 = vmatprep.subr.mxu0 0.0
      %2794 = vmatpush1.msra.mxu0 0.0
      %2795 = vmatprep.subr.mxu0 0.0
      %2796 = vmatpush1.msra.mxu0 0.0
      %2797 = vmatprep.subr.mxu0 0.0
      %2798 = vmatpush1.msra.mxu0 0.0
      %2799 = vmatprep.subr.mxu0 0.0
      %2800 = vmatpush1.msra.mxu0 %v2674
      %2801 = vmatprep.subr.mxu0 0.0
      %2802 = vmatpush1.msra.mxu0 %v2673
      %2803 = vmatprep.subr.mxu0 0.0
      %2804 = vmatpush2.msra.mxu0 0.0
      %2805 = vmatprep.subr.mxu0 0.0
      %2806 = vmatpush2.msra.mxu0 0.0
      %2807 = vmatprep.subr.mxu0 0.0
      %2808 = vmatpush2.msra.mxu0 0.0
      %2809 = vmatprep.subr.mxu0 0.0
      %2810 = vmatpush2.msra.mxu0 0.0
      %2811 = vmatprep.subr.mxu0 0.0
      %2812 = vmatpush2.msra.mxu0 0.0
      %2813 = vmatprep.subr.mxu0 0.0
      %2814 = vmatpush2.msra.mxu0 0.0
      %2815 = vmatprep.subr.mxu0 0.0
      %2816 = vmatpush2.msra.mxu0 0.0
      %2817 = vmatprep.subr.mxu0 0.0
      %2818 = vmatpush2.msra.mxu0 0.0
      %2819 = vmatprep.subr.mxu0 0.0
      %2820 = vmatpush2.msra.mxu0 0.0
      %2821 = vmatprep.subr.mxu0 0.0
      %2822 = vmatpush2.msra.mxu0 0.0
      %2823 = vmatprep.subr.mxu0 0.0
      %2824 = vmatpush2.msra.mxu0 0.0
      %2825 = vmatprep.subr.mxu0 0.0
      %2826 = vmatpush2.msra.mxu0 0.0
      %2827 = vmatprep.subr.mxu0 0.0
      %2828 = vmatpush2.msra.mxu0 0.0
      %2829 = vmatprep.subr.mxu0 0.0
      %2830 = vmatpush2.msra.mxu0 0.0
      %2831 = vmatprep.subr.mxu0 0.0
      %2832 = vmatpush2.msra.mxu0 0.0
      %2833 = vmatprep.subr.mxu0 0.0
      %2834 = vmatpush2.msra.mxu0 0.0
      %2835 = vmatprep.mubr.f32.mxu0 0.0
      %2836 = vmatmul.mubr.f32.gmra.mxu0 %v2676
      %v2837 = vpop.f32.mrf.mxu0
      %v2838 = vadd.f32 0.0, %v2837
      %v2839 = vpop.f32.mrf.mxu0
      %2840 = vmatprep.mubr.f32.mxu0 0.0
      %2841 = vmatmul.mubr.f32.gmra.mxu0 %v2679
      %v2842 = vpop.f32.mrf.mxu0
      %v2843 = vadd.f32 0.0, %v2842
      %v2844 = vpop.f32.mrf.mxu0
      %2845 = vmatprep.mubr.f32.mxu0 0.0
      %2846 = vmatmul.mubr.f32.gmra.mxu0 %v2682
      %v2847 = vpop.f32.mrf.mxu0
      %v2848 = vadd.f32 0.0, %v2847
      %v2849 = vpop.f32.mrf.mxu0
      %2850 = vmatprep.mubr.f32.mxu0 0.0
      %2851 = vmatmul.mubr.f32.gmra.mxu0 %v2685
      %v2852 = vpop.f32.mrf.mxu0
      %v2853 = vadd.f32 0.0, %v2852
      %v2854 = vpop.f32.mrf.mxu0
      %2855 = vmatprep.mubr.f32.mxu0 0.0
      %2856 = vmatmul.mubr.f32.gmra.mxu0 %v2688
      %v2857 = vpop.f32.mrf.mxu0
      %v2858 = vadd.f32 0.0, %v2857
      %v2859 = vpop.f32.mrf.mxu0
      %2860 = vmatprep.mubr.f32.mxu0 0.0
      %2861 = vmatmul.mubr.f32.gmra.mxu0 %v2691
      %v2862 = vpop.f32.mrf.mxu0
      %v2863 = vadd.f32 0.0, %v2862
      %v2864 = vpop.f32.mrf.mxu0
      %2865 = vmatprep.mubr.f32.mxu0 0.0
      %2866 = vmatmul.mubr.f32.gmra.mxu0 %v2694
      %v2867 = vpop.f32.mrf.mxu0
      %v2868 = vadd.f32 0.0, %v2867
      %v2869 = vpop.f32.mrf.mxu0
      %2870 = vmatprep.mubr.f32.mxu0 0.0
      %2871 = vmatmul.mubr.f32.gmra.mxu0 %v2697
      %v2872 = vpop.f32.mrf.mxu0
      %v2873 = vadd.f32 0.0, %v2872
      %v2874 = vpop.f32.mrf.mxu0
      %2875 = vmatprep.mubr.f32.mxu0 0.0
      %2876 = vmatmul.mubr.f32.gmra.mxu0 %v2700
      %v2877 = vpop.f32.mrf.mxu0
      %v2878 = vadd.f32 0.0, %v2877
      %v2879 = vpop.f32.mrf.mxu0
      %2880 = vmatprep.mubr.f32.mxu0 0.0
      %2881 = vmatmul.mubr.f32.gmra.mxu0 %v2703
      %v2882 = vpop.f32.mrf.mxu0
      %v2883 = vadd.f32 0.0, %v2882
      %v2884 = vpop.f32.mrf.mxu0
      %2885 = vmatprep.mubr.f32.mxu0 0.0
      %2886 = vmatmul.mubr.f32.gmra.mxu0 %v2706
      %v2887 = vpop.f32.mrf.mxu0
      %v2888 = vadd.f32 0.0, %v2887
      %v2889 = vpop.f32.mrf.mxu0
      %2890 = vmatprep.mubr.f32.mxu0 0.0
      %2891 = vmatmul.mubr.f32.gmra.mxu0 %v2709
      %v2892 = vpop.f32.mrf.mxu0
      %v2893 = vadd.f32 0.0, %v2892
      %v2894 = vpop.f32.mrf.mxu0
      %2895 = vmatprep.mubr.f32.mxu0 0.0
      %2896 = vmatmul.mubr.f32.gmra.mxu0 %v2712
      %v2897 = vpop.f32.mrf.mxu0
      %v2898 = vadd.f32 0.0, %v2897
      %v2899 = vpop.f32.mrf.mxu0
      %2900 = vmatprep.mubr.f32.mxu0 0.0
      %2901 = vmatmul.mubr.f32.gmra.mxu0 %v2715
      %v2902 = vpop.f32.mrf.mxu0
      %v2903 = vadd.f32 0.0, %v2902
      %v2904 = vpop.f32.mrf.mxu0
      %2905 = vmatprep.mubr.f32.mxu0 0.0
      %2906 = vmatmul.mubr.f32.gmra.mxu0 %v2718
      %v2907 = vpop.f32.mrf.mxu0
      %v2908 = vadd.f32 0.0, %v2907
      %v2909 = vpop.f32.mrf.mxu0
      %2910 = vmatprep.mubr.f32.mxu0 0.0
      %2911 = vmatmul.mubr.f32.gmra.mxu0 %v2721
      %v2912 = vpop.f32.mrf.mxu0
      %v2913 = vadd.f32 0.0, %v2912
      %v2914 = vpop.f32.mrf.mxu0
      %2915 = vmatprep.mubr.f32.mxu0 0.0
      %2916 = vmatmul.mubr.f32.gmra.mxu0 %v2724
      %v2917 = vpop.f32.mrf.mxu0
      %v2918 = vadd.f32 0.0, %v2917
      %v2919 = vpop.f32.mrf.mxu0
      %2920 = vmatprep.mubr.f32.mxu0 0.0
      %2921 = vmatmul.mubr.f32.gmra.mxu0 %v2727
      %v2922 = vpop.f32.mrf.mxu0
      %v2923 = vadd.f32 0.0, %v2922
      %v2924 = vpop.f32.mrf.mxu0
      %2925 = vmatprep.mubr.f32.mxu0 0.0
      %2926 = vmatmul.mubr.f32.gmra.mxu0 %v2730
      %v2927 = vpop.f32.mrf.mxu0
      %v2928 = vadd.f32 0.0, %v2927
      %v2929 = vpop.f32.mrf.mxu0
      %2930 = vmatprep.mubr.f32.mxu0 0.0
      %2931 = vmatmul.mubr.f32.gmra.mxu0 %v2733
      %v2932 = vpop.f32.mrf.mxu0
      %v2933 = vadd.f32 0.0, %v2932
      %v2934 = vpop.f32.mrf.mxu0
      %2935 = vmatprep.mubr.f32.mxu0 0.0
      %2936 = vmatmul.mubr.f32.gmra.mxu0 %v2736
      %v2937 = vpop.f32.mrf.mxu0
      %v2938 = vadd.f32 0.0, %v2937
      %v2939 = vpop.f32.mrf.mxu0
      %2940 = vmatprep.mubr.f32.mxu0 0.0
      %2941 = vmatmul.mubr.f32.gmra.mxu0 %v2739
      %v2942 = vpop.f32.mrf.mxu0
      %v2943 = vadd.f32 0.0, %v2942
      %v2944 = vpop.f32.mrf.mxu0
      %2945 = vmatprep.mubr.f32.mxu0 0.0
      %2946 = vmatmul.mubr.f32.gmra.mxu0 %v2742
      %v2947 = vpop.f32.mrf.mxu0
      %v2948 = vadd.f32 0.0, %v2947
      %v2949 = vpop.f32.mrf.mxu0
      %2950 = vmatprep.mubr.f32.mxu0 0.0
      %2951 = vmatmul.mubr.f32.gmra.mxu0 %v2745
      %v2952 = vpop.f32.mrf.mxu0
      %v2953 = vadd.f32 0.0, %v2952
      %v2954 = vpop.f32.mrf.mxu0
      %2955 = vmatprep.mubr.f32.mxu0 0.0
      %2956 = vmatmul.mubr.f32.gmra.mxu0 %v2748
      %v2957 = vpop.f32.mrf.mxu0
      %v2958 = vadd.f32 0.0, %v2957
      %v2959 = vpop.f32.mrf.mxu0
      %2960 = vmatprep.mubr.f32.mxu0 0.0
      %2961 = vmatmul.mubr.f32.gmra.mxu0 %v2751
      %v2962 = vpop.f32.mrf.mxu0
      %v2963 = vadd.f32 0.0, %v2962
      %v2964 = vpop.f32.mrf.mxu0
      %2965 = vmatprep.mubr.f32.mxu0 0.0
      %2966 = vmatmul.mubr.f32.gmra.mxu0 %v2754
      %v2967 = vpop.f32.mrf.mxu0
      %v2968 = vadd.f32 0.0, %v2967
      %v2969 = vpop.f32.mrf.mxu0
      %2970 = vmatprep.mubr.f32.mxu0 0.0
      %2971 = vmatmul.mubr.f32.gmra.mxu0 %v2757
      %v2972 = vpop.f32.mrf.mxu0
      %v2973 = vadd.f32 0.0, %v2972
      %v2974 = vpop.f32.mrf.mxu0
      %2975 = vmatprep.mubr.f32.mxu0 0.0
      %2976 = vmatmul.mubr.f32.gmra.mxu0 %v2760
      %v2977 = vpop.f32.mrf.mxu0
      %v2978 = vadd.f32 0.0, %v2977
      %v2979 = vpop.f32.mrf.mxu0
      %2980 = vmatprep.mubr.f32.mxu0 0.0
      %2981 = vmatmul.mubr.f32.gmra.mxu0 %v2763
      %v2982 = vpop.f32.mrf.mxu0
      %v2983 = vadd.f32 0.0, %v2982
      %v2984 = vpop.f32.mrf.mxu0
      %2985 = vmatprep.mubr.f32.mxu0 0.0
      %2986 = vmatmul.mubr.f32.gmra.mxu0 %v2766
      %v2987 = vpop.f32.mrf.mxu0
      %v2988 = vadd.f32 0.0, %v2987
      %v2989 = vpop.f32.mrf.mxu0
      %2990 = vmatprep.mubr.f32.mxu0 0.0
      %2991 = vmatmul.mubr.f32.gmra.mxu0 %v2769
      %v2992 = vpop.f32.mrf.mxu0
      %v2993 = vadd.f32 0.0, %v2992
      %v2994 = vpop.f32.mrf.mxu0
      %2995 = vdwg.mxu0
      %v2996 = vmax.f32 %v2838, 0.0
      %v2997 = vmax.f32 %v2843, 0.0
      %v2998 = vmax.f32 %v2848, 0.0
      %v2999 = vmax.f32 %v2853, 0.0
      %v3000 = vmax.f32 %v2858, 0.0
      %v3001 = vmax.f32 %v2863, 0.0
      %v3002 = vmax.f32 %v2868, 0.0
      %v3003 = vmax.f32 %v2873, 0.0
      %v3004 = vmax.f32 %v2878, 0.0
      %v3005 = vmax.f32 %v2883, 0.0
      %v3006 = vmax.f32 %v2888, 0.0
      %v3007 = vmax.f32 %v2893, 0.0
      %v3008 = vmax.f32 %v2898, 0.0
      %v3009 = vmax.f32 %v2903, 0.0
      %v3010 = vmax.f32 %v2908, 0.0
      %v3011 = vmax.f32 %v2913, 0.0
      %v3012 = vmax.f32 %v2918, 0.0
      %v3013 = vmax.f32 %v2923, 0.0
      %v3014 = vmax.f32 %v2928, 0.0
      %v3015 = vmax.f32 %v2933, 0.0
      %v3016 = vmax.f32 %v2938, 0.0
      %v3017 = vmax.f32 %v2943, 0.0
      %v3018 = vmax.f32 %v2948, 0.0
      %v3019 = vmax.f32 %v2953, 0.0
      %v3020 = vmax.f32 %v2958, 0.0
      %v3021 = vmax.f32 %v2963, 0.0
      %v3022 = vmax.f32 %v2968, 0.0
      %v3023 = vmax.f32 %v2973, 0.0
      %v3024 = vmax.f32 %v2978, 0.0
      %v3025 = vmax.f32 %v2983, 0.0
      %v3026 = vmax.f32 %v2988, 0.0
      %v3027 = vmax.f32 %v2993, 0.0
      %v3028 = vld [vmem:[%s1 + $0x70] sm:$0xff]
      %v3029 = vld [vmem:[%s1 + $0x78] sm:$0xff]
      %v3031 = vsel %vm181, %v2996, 0
      %v3034 = vsel %vm181, %v2997, 0
      %v3037 = vsel %vm181, %v2998, 0
      %v3040 = vsel %vm181, %v2999, 0
      %v3043 = vsel %vm181, %v3000, 0
      %v3046 = vsel %vm181, %v3001, 0
      %v3049 = vsel %vm181, %v3002, 0
      %v3052 = vsel %vm181, %v3003, 0
      %v3055 = vsel %vm181, %v3004, 0
      %v3058 = vsel %vm181, %v3005, 0
      %v3061 = vsel %vm181, %v3006, 0
      %v3064 = vsel %vm181, %v3007, 0
      %v3067 = vsel %vm181, %v3008, 0
      %v3070 = vsel %vm181, %v3009, 0
      %v3073 = vsel %vm181, %v3010, 0
      %v3076 = vsel %vm181, %v3011, 0
      %v3079 = vsel %vm181, %v3012, 0
      %v3082 = vsel %vm181, %v3013, 0
      %v3085 = vsel %vm181, %v3014, 0
      %v3088 = vsel %vm181, %v3015, 0
      %v3091 = vsel %vm181, %v3016, 0
      %v3094 = vsel %vm181, %v3017, 0
      %v3097 = vsel %vm181, %v3018, 0
      %v3100 = vsel %vm181, %v3019, 0
      %v3103 = vsel %vm181, %v3020, 0
      %v3106 = vsel %vm181, %v3021, 0
      %v3109 = vsel %vm181, %v3022, 0
      %v3112 = vsel %vm181, %v3023, 0
      %v3115 = vsel %vm181, %v3024, 0
      %v3118 = vsel %vm181, %v3025, 0
      %v3121 = vsel %vm181, %v3026, 0
      %v3124 = vsel %vm181, %v3027, 0
      %3126 = vmatprep.subr.mxu0 0.0
      %3127 = vmatpush1.msra.mxu0 0.0
      %3128 = vmatprep.subr.mxu0 0.0
      %3129 = vmatpush1.msra.mxu0 0.0
      %3130 = vmatprep.subr.mxu0 0.0
      %3131 = vmatpush1.msra.mxu0 0.0
      %3132 = vmatprep.subr.mxu0 0.0
      %3133 = vmatpush1.msra.mxu0 0.0
      %3134 = vmatprep.subr.mxu0 0.0
      %3135 = vmatpush1.msra.mxu0 0.0
      %3136 = vmatprep.subr.mxu0 0.0
      %3137 = vmatpush1.msra.mxu0 0.0
      %3138 = vmatprep.subr.mxu0 0.0
      %3139 = vmatpush1.msra.mxu0 0.0
      %3140 = vmatprep.subr.mxu0 0.0
      %3141 = vmatpush1.msra.mxu0 0.0
      %3142 = vmatprep.subr.mxu0 0.0
      %3143 = vmatpush1.msra.mxu0 0.0
      %3144 = vmatprep.subr.mxu0 0.0
      %3145 = vmatpush1.msra.mxu0 0.0
      %3146 = vmatprep.subr.mxu0 0.0
      %3147 = vmatpush1.msra.mxu0 0.0
      %3148 = vmatprep.subr.mxu0 0.0
      %3149 = vmatpush1.msra.mxu0 0.0
      %3150 = vmatprep.subr.mxu0 0.0
      %3151 = vmatpush1.msra.mxu0 0.0
      %3152 = vmatprep.subr.mxu0 0.0
      %3153 = vmatpush1.msra.mxu0 0.0
      %3154 = vmatprep.subr.mxu0 0.0
      %3155 = vmatpush1.msra.mxu0 %v3029
      %3156 = vmatprep.subr.mxu0 0.0
      %3157 = vmatpush1.msra.mxu0 %v3028
      %3158 = vmatprep.subr.mxu0 0.0
      %3159 = vmatpush2.msra.mxu0 0.0
      %3160 = vmatprep.subr.mxu0 0.0
      %3161 = vmatpush2.msra.mxu0 0.0
      %3162 = vmatprep.subr.mxu0 0.0
      %3163 = vmatpush2.msra.mxu0 0.0
      %3164 = vmatprep.subr.mxu0 0.0
      %3165 = vmatpush2.msra.mxu0 0.0
      %3166 = vmatprep.subr.mxu0 0.0
      %3167 = vmatpush2.msra.mxu0 0.0
      %3168 = vmatprep.subr.mxu0 0.0
      %3169 = vmatpush2.msra.mxu0 0.0
      %3170 = vmatprep.subr.mxu0 0.0
      %3171 = vmatpush2.msra.mxu0 0.0
      %3172 = vmatprep.subr.mxu0 0.0
      %3173 = vmatpush2.msra.mxu0 0.0
      %3174 = vmatprep.subr.mxu0 0.0
      %3175 = vmatpush2.msra.mxu0 0.0
      %3176 = vmatprep.subr.mxu0 0.0
      %3177 = vmatpush2.msra.mxu0 0.0
      %3178 = vmatprep.subr.mxu0 0.0
      %3179 = vmatpush2.msra.mxu0 0.0
      %3180 = vmatprep.subr.mxu0 0.0
      %3181 = vmatpush2.msra.mxu0 0.0
      %3182 = vmatprep.subr.mxu0 0.0
      %3183 = vmatpush2.msra.mxu0 0.0
      %3184 = vmatprep.subr.mxu0 0.0
      %3185 = vmatpush2.msra.mxu0 0.0
      %3186 = vmatprep.subr.mxu0 0.0
      %3187 = vmatpush2.msra.mxu0 0.0
      %3188 = vmatprep.subr.mxu0 0.0
      %3189 = vmatpush2.msra.mxu0 0.0
      %3190 = vmatprep.mubr.f32.mxu0 0.0
      %3191 = vmatmul.mubr.f32.gmra.mxu0 %v3031
      %v3192 = vpop.f32.mrf.mxu0
      %v3193 = vadd.f32 0.0, %v3192
      %v3194 = vpop.f32.mrf.mxu0
      %3195 = vmatprep.mubr.f32.mxu0 0.0
      %3196 = vmatmul.mubr.f32.gmra.mxu0 %v3034
      %v3197 = vpop.f32.mrf.mxu0
      %v3198 = vadd.f32 0.0, %v3197
      %v3199 = vpop.f32.mrf.mxu0
      %3200 = vmatprep.mubr.f32.mxu0 0.0
      %3201 = vmatmul.mubr.f32.gmra.mxu0 %v3037
      %v3202 = vpop.f32.mrf.mxu0
      %v3203 = vadd.f32 0.0, %v3202
      %v3204 = vpop.f32.mrf.mxu0
      %3205 = vmatprep.mubr.f32.mxu0 0.0
      %3206 = vmatmul.mubr.f32.gmra.mxu0 %v3040
      %v3207 = vpop.f32.mrf.mxu0
      %v3208 = vadd.f32 0.0, %v3207
      %v3209 = vpop.f32.mrf.mxu0
      %3210 = vmatprep.mubr.f32.mxu0 0.0
      %3211 = vmatmul.mubr.f32.gmra.mxu0 %v3043
      %v3212 = vpop.f32.mrf.mxu0
      %v3213 = vadd.f32 0.0, %v3212
      %v3214 = vpop.f32.mrf.mxu0
      %3215 = vmatprep.mubr.f32.mxu0 0.0
      %3216 = vmatmul.mubr.f32.gmra.mxu0 %v3046
      %v3217 = vpop.f32.mrf.mxu0
      %v3218 = vadd.f32 0.0, %v3217
      %v3219 = vpop.f32.mrf.mxu0
      %3220 = vmatprep.mubr.f32.mxu0 0.0
      %3221 = vmatmul.mubr.f32.gmra.mxu0 %v3049
      %v3222 = vpop.f32.mrf.mxu0
      %v3223 = vadd.f32 0.0, %v3222
      %v3224 = vpop.f32.mrf.mxu0
      %3225 = vmatprep.mubr.f32.mxu0 0.0
      %3226 = vmatmul.mubr.f32.gmra.mxu0 %v3052
      %v3227 = vpop.f32.mrf.mxu0
      %v3228 = vadd.f32 0.0, %v3227
      %v3229 = vpop.f32.mrf.mxu0
      %3230 = vmatprep.mubr.f32.mxu0 0.0
      %3231 = vmatmul.mubr.f32.gmra.mxu0 %v3055
      %v3232 = vpop.f32.mrf.mxu0
      %v3233 = vadd.f32 0.0, %v3232
      %v3234 = vpop.f32.mrf.mxu0
      %3235 = vmatprep.mubr.f32.mxu0 0.0
      %3236 = vmatmul.mubr.f32.gmra.mxu0 %v3058
      %v3237 = vpop.f32.mrf.mxu0
      %v3238 = vadd.f32 0.0, %v3237
      %v3239 = vpop.f32.mrf.mxu0
      %3240 = vmatprep.mubr.f32.mxu0 0.0
      %3241 = vmatmul.mubr.f32.gmra.mxu0 %v3061
      %v3242 = vpop.f32.mrf.mxu0
      %v3243 = vadd.f32 0.0, %v3242
      %v3244 = vpop.f32.mrf.mxu0
      %3245 = vmatprep.mubr.f32.mxu0 0.0
      %3246 = vmatmul.mubr.f32.gmra.mxu0 %v3064
      %v3247 = vpop.f32.mrf.mxu0
      %v3248 = vadd.f32 0.0, %v3247
      %v3249 = vpop.f32.mrf.mxu0
      %3250 = vmatprep.mubr.f32.mxu0 0.0
      %3251 = vmatmul.mubr.f32.gmra.mxu0 %v3067
      %v3252 = vpop.f32.mrf.mxu0
      %v3253 = vadd.f32 0.0, %v3252
      %v3254 = vpop.f32.mrf.mxu0
      %3255 = vmatprep.mubr.f32.mxu0 0.0
      %3256 = vmatmul.mubr.f32.gmra.mxu0 %v3070
      %v3257 = vpop.f32.mrf.mxu0
      %v3258 = vadd.f32 0.0, %v3257
      %v3259 = vpop.f32.mrf.mxu0
      %3260 = vmatprep.mubr.f32.mxu0 0.0
      %3261 = vmatmul.mubr.f32.gmra.mxu0 %v3073
      %v3262 = vpop.f32.mrf.mxu0
      %v3263 = vadd.f32 0.0, %v3262
      %v3264 = vpop.f32.mrf.mxu0
      %3265 = vmatprep.mubr.f32.mxu0 0.0
      %3266 = vmatmul.mubr.f32.gmra.mxu0 %v3076
      %v3267 = vpop.f32.mrf.mxu0
      %v3268 = vadd.f32 0.0, %v3267
      %v3269 = vpop.f32.mrf.mxu0
      %3270 = vmatprep.mubr.f32.mxu0 0.0
      %3271 = vmatmul.mubr.f32.gmra.mxu0 %v3079
      %v3272 = vpop.f32.mrf.mxu0
      %v3273 = vadd.f32 0.0, %v3272
      %v3274 = vpop.f32.mrf.mxu0
      %3275 = vmatprep.mubr.f32.mxu0 0.0
      %3276 = vmatmul.mubr.f32.gmra.mxu0 %v3082
      %v3277 = vpop.f32.mrf.mxu0
      %v3278 = vadd.f32 0.0, %v3277
      %v3279 = vpop.f32.mrf.mxu0
      %3280 = vmatprep.mubr.f32.mxu0 0.0
      %3281 = vmatmul.mubr.f32.gmra.mxu0 %v3085
      %v3282 = vpop.f32.mrf.mxu0
      %v3283 = vadd.f32 0.0, %v3282
      %v3284 = vpop.f32.mrf.mxu0
      %3285 = vmatprep.mubr.f32.mxu0 0.0
      %3286 = vmatmul.mubr.f32.gmra.mxu0 %v3088
      %v3287 = vpop.f32.mrf.mxu0
      %v3288 = vadd.f32 0.0, %v3287
      %v3289 = vpop.f32.mrf.mxu0
      %3290 = vmatprep.mubr.f32.mxu0 0.0
      %3291 = vmatmul.mubr.f32.gmra.mxu0 %v3091
      %v3292 = vpop.f32.mrf.mxu0
      %v3293 = vadd.f32 0.0, %v3292
      %v3294 = vpop.f32.mrf.mxu0
      %3295 = vmatprep.mubr.f32.mxu0 0.0
      %3296 = vmatmul.mubr.f32.gmra.mxu0 %v3094
      %v3297 = vpop.f32.mrf.mxu0
      %v3298 = vadd.f32 0.0, %v3297
      %v3299 = vpop.f32.mrf.mxu0
      %3300 = vmatprep.mubr.f32.mxu0 0.0
      %3301 = vmatmul.mubr.f32.gmra.mxu0 %v3097
      %v3302 = vpop.f32.mrf.mxu0
      %v3303 = vadd.f32 0.0, %v3302
      %v3304 = vpop.f32.mrf.mxu0
      %3305 = vmatprep.mubr.f32.mxu0 0.0
      %3306 = vmatmul.mubr.f32.gmra.mxu0 %v3100
      %v3307 = vpop.f32.mrf.mxu0
      %v3308 = vadd.f32 0.0, %v3307
      %v3309 = vpop.f32.mrf.mxu0
      %3310 = vmatprep.mubr.f32.mxu0 0.0
      %3311 = vmatmul.mubr.f32.gmra.mxu0 %v3103
      %v3312 = vpop.f32.mrf.mxu0
      %v3313 = vadd.f32 0.0, %v3312
      %v3314 = vpop.f32.mrf.mxu0
      %3315 = vmatprep.mubr.f32.mxu0 0.0
      %3316 = vmatmul.mubr.f32.gmra.mxu0 %v3106
      %v3317 = vpop.f32.mrf.mxu0
      %v3318 = vadd.f32 0.0, %v3317
      %v3319 = vpop.f32.mrf.mxu0
      %3320 = vmatprep.mubr.f32.mxu0 0.0
      %3321 = vmatmul.mubr.f32.gmra.mxu0 %v3109
      %v3322 = vpop.f32.mrf.mxu0
      %v3323 = vadd.f32 0.0, %v3322
      %v3324 = vpop.f32.mrf.mxu0
      %3325 = vmatprep.mubr.f32.mxu0 0.0
      %3326 = vmatmul.mubr.f32.gmra.mxu0 %v3112
      %v3327 = vpop.f32.mrf.mxu0
      %v3328 = vadd.f32 0.0, %v3327
      %v3329 = vpop.f32.mrf.mxu0
      %3330 = vmatprep.mubr.f32.mxu0 0.0
      %3331 = vmatmul.mubr.f32.gmra.mxu0 %v3115
      %v3332 = vpop.f32.mrf.mxu0
      %v3333 = vadd.f32 0.0, %v3332
      %v3334 = vpop.f32.mrf.mxu0
      %3335 = vmatprep.mubr.f32.mxu0 0.0
      %3336 = vmatmul.mubr.f32.gmra.mxu0 %v3118
      %v3337 = vpop.f32.mrf.mxu0
      %v3338 = vadd.f32 0.0, %v3337
      %v3339 = vpop.f32.mrf.mxu0
      %3340 = vmatprep.mubr.f32.mxu0 0.0
      %3341 = vmatmul.mubr.f32.gmra.mxu0 %v3121
      %v3342 = vpop.f32.mrf.mxu0
      %v3343 = vadd.f32 0.0, %v3342
      %v3344 = vpop.f32.mrf.mxu0
      %3345 = vmatprep.mubr.f32.mxu0 0.0
      %3346 = vmatmul.mubr.f32.gmra.mxu0 %v3124
      %v3347 = vpop.f32.mrf.mxu0
      %v3348 = vadd.f32 0.0, %v3347
      %v3349 = vpop.f32.mrf.mxu0
      %3350 = vdwg.mxu0
      %vm3351 = vcmask 31744
      %3352 = vst.msk [vmem:[%s145] sm:$0xff] %vm3351, %v1410
      %3353 = vst.msk [vmem:[%s145 + $0x8] sm:$0xff] %vm3351, %v1415
      %3354 = vst.msk [vmem:[%s145 + $0x10] sm:$0xff] %vm3351, %v1420
      %3355 = vst.msk [vmem:[%s145 + $0x18] sm:$0xff] %vm3351, %v1425
      %3356 = vst.msk [vmem:[%s145 + $0x20] sm:$0xff] %vm3351, %v1430
      %3357 = vst.msk [vmem:[%s145 + $0x28] sm:$0xff] %vm3351, %v1435
      %3358 = vst.msk [vmem:[%s145 + $0x30] sm:$0xff] %vm3351, %v1440
      %3359 = vst.msk [vmem:[%s145 + $0x38] sm:$0xff] %vm3351, %v1445
      %3360 = vst.msk [vmem:[%s145 + $0x40] sm:$0xff] %vm3351, %v1450
      %3361 = vst.msk [vmem:[%s145 + $0x48] sm:$0xff] %vm3351, %v1455
      %3362 = vst.msk [vmem:[%s145 + $0x50] sm:$0xff] %vm3351, %v1460
      %3363 = vst.msk [vmem:[%s145 + $0x58] sm:$0xff] %vm3351, %v1465
      %3364 = vst.msk [vmem:[%s145 + $0x60] sm:$0xff] %vm3351, %v1470
      %3365 = vst.msk [vmem:[%s145 + $0x68] sm:$0xff] %vm3351, %v1475
      %3366 = vst.msk [vmem:[%s145 + $0x70] sm:$0xff] %vm3351, %v1480
      %3367 = vst.msk [vmem:[%s145 + $0x78] sm:$0xff] %vm3351, %v1485
      %3368 = vst.msk [vmem:[%s145 + $0x80] sm:$0xff] %vm3351, %v1490
      %3369 = vst.msk [vmem:[%s145 + $0x88] sm:$0xff] %vm3351, %v1495
      %3370 = vst.msk [vmem:[%s145 + $0x90] sm:$0xff] %vm3351, %v1500
      %3371 = vst.msk [vmem:[%s145 + $0x98] sm:$0xff] %vm3351, %v1505
      %3372 = vst.msk [vmem:[%s145 + $0xa0] sm:$0xff] %vm3351, %v1510
      %3373 = vst.msk [vmem:[%s145 + $0xa8] sm:$0xff] %vm3351, %v1515
      %3374 = vst.msk [vmem:[%s145 + $0xb0] sm:$0xff] %vm3351, %v1520
      %3375 = vst.msk [vmem:[%s145 + $0xb8] sm:$0xff] %vm3351, %v1525
      %3376 = vst.msk [vmem:[%s145 + $0xc0] sm:$0xff] %vm3351, %v1530
      %3377 = vst.msk [vmem:[%s145 + $0xc8] sm:$0xff] %vm3351, %v1535
      %3378 = vst.msk [vmem:[%s145 + $0xd0] sm:$0xff] %vm3351, %v1540
      %3379 = vst.msk [vmem:[%s145 + $0xd8] sm:$0xff] %vm3351, %v1545
      %3380 = vst.msk [vmem:[%s145 + $0xe0] sm:$0xff] %vm3351, %v1550
      %3381 = vst.msk [vmem:[%s145 + $0xe8] sm:$0xff] %vm3351, %v1555
      %3382 = vst.msk [vmem:[%s145 + $0xf0] sm:$0xff] %vm3351, %v1560
      %3383 = vst.msk [vmem:[%s145 + $0xf8] sm:$0xff] %vm3351, %v1565
      %3384 = vrot.lane.b32.xlu0 %v1824, 2
      %v3385 = vpop.permute.xlu0 %3384
      %3386 = vrot.lane.b32.xlu0 %v1825, 2
      %v3387 = vpop.permute.xlu0 %3386
      %3388 = vrot.lane.b32.xlu0 %v1826, 2
      %v3389 = vpop.permute.xlu0 %3388
      %3390 = vrot.lane.b32.xlu0 %v1827, 2
      %v3391 = vpop.permute.xlu0 %3390
      %3392 = vrot.lane.b32.xlu0 %v1828, 2
      %v3393 = vpop.permute.xlu0 %3392
      %3394 = vrot.lane.b32.xlu0 %v1829, 2
      %v3395 = vpop.permute.xlu0 %3394
      %3396 = vrot.lane.b32.xlu0 %v1830, 2
      %v3397 = vpop.permute.xlu0 %3396
      %3398 = vrot.lane.b32.xlu0 %v1831, 2
      %v3399 = vpop.permute.xlu0 %3398
      %3400 = vrot.lane.b32.xlu0 %v1832, 2
      %v3401 = vpop.permute.xlu0 %3400
      %3402 = vrot.lane.b32.xlu0 %v1833, 2
      %v3403 = vpop.permute.xlu0 %3402
      %3404 = vrot.lane.b32.xlu0 %v1834, 2
      %v3405 = vpop.permute.xlu0 %3404
      %3406 = vrot.lane.b32.xlu0 %v1835, 2
      %v3407 = vpop.permute.xlu0 %3406
      %3408 = vrot.lane.b32.xlu0 %v1836, 2
      %v3409 = vpop.permute.xlu0 %3408
      %3410 = vrot.lane.b32.xlu0 %v1837, 2
      %v3411 = vpop.permute.xlu0 %3410
      %3412 = vrot.lane.b32.xlu0 %v1838, 2
      %v3413 = vpop.permute.xlu0 %3412
      %3414 = vrot.lane.b32.xlu0 %v1839, 2
      %v3415 = vpop.permute.xlu0 %3414
      %3416 = vrot.lane.b32.xlu0 %v1840, 2
      %v3417 = vpop.permute.xlu0 %3416
      %3418 = vrot.lane.b32.xlu0 %v1841, 2
      %v3419 = vpop.permute.xlu0 %3418
      %3420 = vrot.lane.b32.xlu0 %v1842, 2
      %v3421 = vpop.permute.xlu0 %3420
      %3422 = vrot.lane.b32.xlu0 %v1843, 2
      %v3423 = vpop.permute.xlu0 %3422
      %3424 = vrot.lane.b32.xlu0 %v1844, 2
      %v3425 = vpop.permute.xlu0 %3424
      %3426 = vrot.lane.b32.xlu0 %v1845, 2
      %v3427 = vpop.permute.xlu0 %3426
      %3428 = vrot.lane.b32.xlu0 %v1846, 2
      %v3429 = vpop.permute.xlu0 %3428
      %3430 = vrot.lane.b32.xlu0 %v1847, 2
      %v3431 = vpop.permute.xlu0 %3430
      %3432 = vrot.lane.b32.xlu0 %v1848, 2
      %v3433 = vpop.permute.xlu0 %3432
      %3434 = vrot.lane.b32.xlu0 %v1849, 2
      %v3435 = vpop.permute.xlu0 %3434
      %3436 = vrot.lane.b32.xlu0 %v1850, 2
      %v3437 = vpop.permute.xlu0 %3436
      %3438 = vrot.lane.b32.xlu0 %v1851, 2
      %v3439 = vpop.permute.xlu0 %3438
      %3440 = vrot.lane.b32.xlu0 %v1852, 2
      %v3441 = vpop.permute.xlu0 %3440
      %3442 = vrot.lane.b32.xlu0 %v1853, 2
      %v3443 = vpop.permute.xlu0 %3442
      %3444 = vrot.lane.b32.xlu0 %v1854, 2
      %v3445 = vpop.permute.xlu0 %3444
      %3446 = vrot.lane.b32.xlu0 %v1855, 2
      %v3447 = vpop.permute.xlu0 %3446
      %vm3480 = vcmask 48160
      %3481 = vst.msk [vmem:[%s145] sm:$0xff] %vm3480, %v3385
      %3482 = vst.msk [vmem:[%s145 + $0x8] sm:$0xff] %vm3480, %v3387
      %3483 = vst.msk [vmem:[%s145 + $0x10] sm:$0xff] %vm3480, %v3389
      %3484 = vst.msk [vmem:[%s145 + $0x18] sm:$0xff] %vm3480, %v3391
      %3485 = vst.msk [vmem:[%s145 + $0x20] sm:$0xff] %vm3480, %v3393
      %3486 = vst.msk [vmem:[%s145 + $0x28] sm:$0xff] %vm3480, %v3395
      %3487 = vst.msk [vmem:[%s145 + $0x30] sm:$0xff] %vm3480, %v3397
      %3488 = vst.msk [vmem:[%s145 + $0x38] sm:$0xff] %vm3480, %v3399
      %3489 = vst.msk [vmem:[%s145 + $0x40] sm:$0xff] %vm3480, %v3401
      %3490 = vst.msk [vmem:[%s145 + $0x48] sm:$0xff] %vm3480, %v3403
      %3491 = vst.msk [vmem:[%s145 + $0x50] sm:$0xff] %vm3480, %v3405
      %3492 = vst.msk [vmem:[%s145 + $0x58] sm:$0xff] %vm3480, %v3407
      %3493 = vst.msk [vmem:[%s145 + $0x60] sm:$0xff] %vm3480, %v3409
      %3494 = vst.msk [vmem:[%s145 + $0x68] sm:$0xff] %vm3480, %v3411
      %3495 = vst.msk [vmem:[%s145 + $0x70] sm:$0xff] %vm3480, %v3413
      %3496 = vst.msk [vmem:[%s145 + $0x78] sm:$0xff] %vm3480, %v3415
      %3497 = vst.msk [vmem:[%s145 + $0x80] sm:$0xff] %vm3480, %v3417
      %3498 = vst.msk [vmem:[%s145 + $0x88] sm:$0xff] %vm3480, %v3419
      %3499 = vst.msk [vmem:[%s145 + $0x90] sm:$0xff] %vm3480, %v3421
      %3500 = vst.msk [vmem:[%s145 + $0x98] sm:$0xff] %vm3480, %v3423
      %3501 = vst.msk [vmem:[%s145 + $0xa0] sm:$0xff] %vm3480, %v3425
      %3502 = vst.msk [vmem:[%s145 + $0xa8] sm:$0xff] %vm3480, %v3427
      %3503 = vst.msk [vmem:[%s145 + $0xb0] sm:$0xff] %vm3480, %v3429
      %3504 = vst.msk [vmem:[%s145 + $0xb8] sm:$0xff] %vm3480, %v3431
      %3505 = vst.msk [vmem:[%s145 + $0xc0] sm:$0xff] %vm3480, %v3433
      %3506 = vst.msk [vmem:[%s145 + $0xc8] sm:$0xff] %vm3480, %v3435
      %3507 = vst.msk [vmem:[%s145 + $0xd0] sm:$0xff] %vm3480, %v3437
      %3508 = vst.msk [vmem:[%s145 + $0xd8] sm:$0xff] %vm3480, %v3439
      %3509 = vst.msk [vmem:[%s145 + $0xe0] sm:$0xff] %vm3480, %v3441
      %3510 = vst.msk [vmem:[%s145 + $0xe8] sm:$0xff] %vm3480, %v3443
      %3511 = vst.msk [vmem:[%s145 + $0xf0] sm:$0xff] %vm3480, %v3445
      %3512 = vst.msk [vmem:[%s145 + $0xf8] sm:$0xff] %vm3480, %v3447
      %3545 = vrot.lane.b32.xlu0 %v3193, 6
      %v3546 = vpop.permute.xlu0 %3545
      %3547 = vrot.lane.b32.xlu0 %v3198, 6
      %v3548 = vpop.permute.xlu0 %3547
      %3549 = vrot.lane.b32.xlu0 %v3203, 6
      %v3550 = vpop.permute.xlu0 %3549
      %3551 = vrot.lane.b32.xlu0 %v3208, 6
      %v3552 = vpop.permute.xlu0 %3551
      %3553 = vrot.lane.b32.xlu0 %v3213, 6
      %v3554 = vpop.permute.xlu0 %3553
      %3555 = vrot.lane.b32.xlu0 %v3218, 6
      %v3556 = vpop.permute.xlu0 %3555
      %3557 = vrot.lane.b32.xlu0 %v3223, 6
      %v3558 = vpop.permute.xlu0 %3557
      %3559 = vrot.lane.b32.xlu0 %v3228, 6
      %v3560 = vpop.permute.xlu0 %3559
      %3561 = vrot.lane.b32.xlu0 %v3233, 6
      %v3562 = vpop.permute.xlu0 %3561
      %3563 = vrot.lane.b32.xlu0 %v3238, 6
      %v3564 = vpop.permute.xlu0 %3563
      %3565 = vrot.lane.b32.xlu0 %v3243, 6
      %v3566 = vpop.permute.xlu0 %3565
      %3567 = vrot.lane.b32.xlu0 %v3248, 6
      %v3568 = vpop.permute.xlu0 %3567
      %3569 = vrot.lane.b32.xlu0 %v3253, 6
      %v3570 = vpop.permute.xlu0 %3569
      %3571 = vrot.lane.b32.xlu0 %v3258, 6
      %v3572 = vpop.permute.xlu0 %3571
      %3573 = vrot.lane.b32.xlu0 %v3263, 6
      %v3574 = vpop.permute.xlu0 %3573
      %3575 = vrot.lane.b32.xlu0 %v3268, 6
      %v3576 = vpop.permute.xlu0 %3575
      %3577 = vrot.lane.b32.xlu0 %v3273, 6
      %v3578 = vpop.permute.xlu0 %3577
      %3579 = vrot.lane.b32.xlu0 %v3278, 6
      %v3580 = vpop.permute.xlu0 %3579
      %3581 = vrot.lane.b32.xlu0 %v3283, 6
      %v3582 = vpop.permute.xlu0 %3581
      %3583 = vrot.lane.b32.xlu0 %v3288, 6
      %v3584 = vpop.permute.xlu0 %3583
      %3585 = vrot.lane.b32.xlu0 %v3293, 6
      %v3586 = vpop.permute.xlu0 %3585
      %3587 = vrot.lane.b32.xlu0 %v3298, 6
      %v3588 = vpop.permute.xlu0 %3587
      %3589 = vrot.lane.b32.xlu0 %v3303, 6
      %v3590 = vpop.permute.xlu0 %3589
      %3591 = vrot.lane.b32.xlu0 %v3308, 6
      %v3592 = vpop.permute.xlu0 %3591
      %3593 = vrot.lane.b32.xlu0 %v3313, 6
      %v3594 = vpop.permute.xlu0 %3593
      %3595 = vrot.lane.b32.xlu0 %v3318, 6
      %v3596 = vpop.permute.xlu0 %3595
      %3597 = vrot.lane.b32.xlu0 %v3323, 6
      %v3598 = vpop.permute.xlu0 %3597
      %3599 = vrot.lane.b32.xlu0 %v3328, 6
      %v3600 = vpop.permute.xlu0 %3599
      %3601 = vrot.lane.b32.xlu0 %v3333, 6
      %v3602 = vpop.permute.xlu0 %3601
      %3603 = vrot.lane.b32.xlu0 %v3338, 6
      %v3604 = vpop.permute.xlu0 %3603
      %3605 = vrot.lane.b32.xlu0 %v3343, 6
      %v3606 = vpop.permute.xlu0 %3605
      %3607 = vrot.lane.b32.xlu0 %v3348, 6
      %v3608 = vpop.permute.xlu0 %3607
      %vm3641 = vcmask 64560
      %3642 = vst.msk [vmem:[%s145] sm:$0xff] %vm3641, %v3546
      %3643 = vst.msk [vmem:[%s145 + $0x8] sm:$0xff] %vm3641, %v3548
      %3644 = vst.msk [vmem:[%s145 + $0x10] sm:$0xff] %vm3641, %v3550
      %3645 = vst.msk [vmem:[%s145 + $0x18] sm:$0xff] %vm3641, %v3552
      %3646 = vst.msk [vmem:[%s145 + $0x20] sm:$0xff] %vm3641, %v3554
      %3647 = vst.msk [vmem:[%s145 + $0x28] sm:$0xff] %vm3641, %v3556
      %3648 = vst.msk [vmem:[%s145 + $0x30] sm:$0xff] %vm3641, %v3558
      %3649 = vst.msk [vmem:[%s145 + $0x38] sm:$0xff] %vm3641, %v3560
      %3650 = vst.msk [vmem:[%s145 + $0x40] sm:$0xff] %vm3641, %v3562
      %3651 = vst.msk [vmem:[%s145 + $0x48] sm:$0xff] %vm3641, %v3564
      %3652 = vst.msk [vmem:[%s145 + $0x50] sm:$0xff] %vm3641, %v3566
      %3653 = vst.msk [vmem:[%s145 + $0x58] sm:$0xff] %vm3641, %v3568
      %3654 = vst.msk [vmem:[%s145 + $0x60] sm:$0xff] %vm3641, %v3570
      %3655 = vst.msk [vmem:[%s145 + $0x68] sm:$0xff] %vm3641, %v3572
      %3656 = vst.msk [vmem:[%s145 + $0x70] sm:$0xff] %vm3641, %v3574
      %3657 = vst.msk [vmem:[%s145 + $0x78] sm:$0xff] %vm3641, %v3576
      %3658 = vst.msk [vmem:[%s145 + $0x80] sm:$0xff] %vm3641, %v3578
      %3659 = vst.msk [vmem:[%s145 + $0x88] sm:$0xff] %vm3641, %v3580
      %3660 = vst.msk [vmem:[%s145 + $0x90] sm:$0xff] %vm3641, %v3582
      %3661 = vst.msk [vmem:[%s145 + $0x98] sm:$0xff] %vm3641, %v3584
      %3662 = vst.msk [vmem:[%s145 + $0xa0] sm:$0xff] %vm3641, %v3586
      %3663 = vst.msk [vmem:[%s145 + $0xa8] sm:$0xff] %vm3641, %v3588
      %3664 = vst.msk [vmem:[%s145 + $0xb0] sm:$0xff] %vm3641, %v3590
      %3665 = vst.msk [vmem:[%s145 + $0xb8] sm:$0xff] %vm3641, %v3592
      %3666 = vst.msk [vmem:[%s145 + $0xc0] sm:$0xff] %vm3641, %v3594
      %3667 = vst.msk [vmem:[%s145 + $0xc8] sm:$0xff] %vm3641, %v3596
      %3668 = vst.msk [vmem:[%s145 + $0xd0] sm:$0xff] %vm3641, %v3598
      %3669 = vst.msk [vmem:[%s145 + $0xd8] sm:$0xff] %vm3641, %v3600
      %3670 = vst.msk [vmem:[%s145 + $0xe0] sm:$0xff] %vm3641, %v3602
      %3671 = vst.msk [vmem:[%s145 + $0xe8] sm:$0xff] %vm3641, %v3604
      %3672 = vst.msk [vmem:[%s145 + $0xf0] sm:$0xff] %vm3641, %v3606
      %3673 = vst.msk [vmem:[%s145 + $0xf8] sm:$0xff] %vm3641, %v3608
      %s3674 = smul.u32 32, %s13
      %p3675 = scmp.lt.s32.totalorder %s3674, 63
      %s3676 = scalar_select %p3675, %s3674, 63
      %s3677 = smul.addr %s3676, 8
      %s3678 = scalar_lea.vmem %s2, %s3677
      // Predicated region
      $region29: #{tpu_custom_call.1} parent=27 // pred_check
        %p3679 = pneg %p78
      $region30: #{tpu_custom_call.1} parent=27 // pred_check_branch
        %3681 = sbr.rel (%p3679) target = $region32
      $region31: #{tpu_custom_call.1} parent=27 // pred_region
        %s3682 = smul.u32 32, %s13
      $region32: #{tpu_custom_call.1} parent=27 // pred_fallthru
        _
    $region28: #{tpu_custom_call.1} parent=5 // pred_fallthru
      _
    %p3683 = scmp.le.s32.totalorder 2, %s8
    // Predicated region
    $region33: #{tpu_custom_call.1} parent=5 // pred_check
      %p3684 = pneg %p3683
    $region34: #{tpu_custom_call.1} parent=5 // pred_check_branch
      %3686 = sbr.rel (%p3684) target = $region36
    $region35: #{tpu_custom_call.1} parent=5 // pred_region
      %s3687 = ssub.s32 %s8, 2
      // Predicated region
      $region37: #{tpu_custom_call.1} parent=35 // pred_check
        %p3688 = pneg %p84
      $region38: #{tpu_custom_call.1} parent=35 // pred_check_branch
        %3690 = sbr.rel (%p3688) target = $region40
      $region39: #{tpu_custom_call.1} parent=35 // pred_region
        %s3691 = smul.u32 32, %s14
        %p3692 = scmp.lt.s32.totalorder %s3691, 63
        %s3693 = scalar_select %p3692, %s3691, 63
        %s3694 = smul.addr %s3693, 8
        %s3695 = scalar_lea.vmem %s2, %s3694
      $region40: #{tpu_custom_call.1} parent=35 // pred_fallthru
        _
    $region36: #{tpu_custom_call.1} parent=5 // pred_fallthru
      _
  $region6: #{tpu_custom_call.1} parent=0 // loop_footer
    %s12 = sadd.s32 1, %s8
  $region7: #{tpu_custom_call.1} parent=0 // loop_footer_branch
    %7 = sbr.rel target = $region3
  $region8: #{tpu_custom_call.1} parent=0 // loop_exit
    _

</llo_original>
